<compile_context>
chip_gen: v5e
topology: v5e:2x2
jax: 0.10.0
libtpu: 0.0.40
codegen_flags: <defaults>
</compile_context>

<pallas_src>
import functools

import jax
import jax.numpy as jnp
from jax import lax
from jax.experimental import pallas as pl
from jax.experimental.pallas import tpu as pltpu


def _round_up(x, m):
    return (x + m - 1) // m * m


def _choose_time_chunk(T, bt, E, Hp, budget_bytes=24 << 20):
    """Largest time-chunk TS (<= 64) whose working set fits a conservative VMEM
    budget (sized for v7x's 64 MiB physical VMEM with headroom)."""
    fixed = (E * 4 * Hp + Hp * 4 * Hp) * 2          # resident bf16 W_ih + W_hh
    fixed += 4 * Hp * 4                             # bias
    fixed += 3 * bt * Hp * 4                        # c scratch + h output buffers
    per_step = 2 * bt * E * 2 + bt * 4 * Hp * 4     # 2x-buffered x chunk + xw scratch
    ts = max(1, min(T, 64))
    while ts > 1 and fixed + ts * per_step > budget_bytes:
        ts = (ts + 1) // 2
    return ts


def lstm_chunk_kernel(x_ref, w_ih_ref, w_hh_ref, b_ref, h_ref, c_sc, xw_sc,
                      *, t_total):
    """One grid step = one TS-step time chunk of the LSTM for one batch tile.

    x_ref   : (TS, BT, E)   bf16  embedded tokens for this chunk/tile
    w_ih_ref: (E, 4Hp)      bf16  input-to-hidden weights (whole array in VMEM)
    w_hh_ref: (Hp, 4Hp)     bf16  hidden-to-hidden weights (whole array in VMEM)
    b_ref   : (1, 4Hp)      f32   fused gate bias (b_ih + b_hh), order [i,f,o,g]
    h_ref   : (BT, Hp)      f32   output block; t-invariant => resident h state
    c_sc    : (BT, Hp)      f32   VMEM-resident cell state
    xw_sc   : (TS, BT, 4Hp) f32   chunk-local precomputed gate contribution
    """
    tc = pl.program_id(1)

    @pl.when(tc == 0)
    def _():
        h_ref[...] = jnp.zeros_like(h_ref)
        c_sc[...] = jnp.zeros_like(c_sc)

    ts, bt, e = x_ref.shape
    hp = c_sc.shape[-1]

    # Time-parallel input projection for the whole chunk: one large MXU matmul
    # (bf16 operands, f32 accumulation), bias folded in.
    x2d = x_ref[...].reshape(ts * bt, e)
    xw = jnp.dot(x2d, w_ih_ref[...],
                 preferred_element_type=jnp.float32) + b_ref[...]
    xw_sc[...] = xw.reshape(ts, bt, 4 * hp)

    t0 = tc * ts
    needs_mask = (t_total % ts) != 0   # static: only the ragged last chunk masks

    def step(s, carry):
        # Serial critical path: one (BT,Hp)x(Hp,4Hp) MXU matmul + gate math.
        gates = xw_sc[s] + jnp.dot(h_ref[...].astype(jnp.bfloat16),
                                   w_hh_ref[...],
                                   preferred_element_type=jnp.float32)
        # Gate order [i, f, o, g]: one sigmoid slab, one tanh slab (2 EUP
        # launches per step).
        sig = jax.nn.sigmoid(gates[:, : 3 * hp])
        g_g = jnp.tanh(gates[:, 3 * hp:])
        i_g = sig[:, 0 * hp:1 * hp]
        f_g = sig[:, 1 * hp:2 * hp]
        o_g = sig[:, 2 * hp:3 * hp]

        c_new = f_g * c_sc[...] + i_g * g_g
        h_new = o_g * jnp.tanh(c_new)

        if needs_mask:
            @pl.when(t0 + s < t_total)
            def _():
                c_sc[...] = c_new
                h_ref[...] = h_new
        else:
            c_sc[...] = c_new
            h_ref[...] = h_new
        return carry

    lax.fori_loop(0, ts, step, 0, unroll=True)


def lstm_model_forward(token_ids, packed):
    """token_ids: (B, T) int32. Returns (B, output_dim) f32 logits."""
    emb = packed["embedding_bf16"]     # (V, E)  bf16, row 0 zeroed (padding_idx)
    w_ih = packed["w_ih_p"]            # (E, 4Hp) bf16, gate order [i,f,o,g]
    w_hh = packed["w_hh_p"]            # (Hp, 4Hp) bf16
    b_g = packed["b_gate_p"]           # (1, 4Hp) f32
    w_fc = packed["w_fc_t"]            # (H, O)  f32
    b_fc = packed["b_fc"]              # (1, O)  f32
    H = packed["hidden_dim"]           # true hidden dim (<= Hp)

    B, T = token_ids.shape
    E = w_ih.shape[0]
    Hp = w_hh.shape[0]

    # --- batch tiling: sublane-dense, and >=2 tiles whenever possible so the
    # "parallel" axis can be sharded across v7x's two TensorCores.
    b_pad = max(8, _round_up(B, 8))
    if b_pad <= 8:
        bt = b_pad
    elif b_pad >= 512:
        bt = 256                        # fill v6e/v7x 256-wide MXU, still >=2 tiles
    else:
        bt = _round_up(-(-b_pad // 2), 8)
    b_pad = _round_up(b_pad, bt)
    nb = b_pad // bt

    # --- time chunking against a VMEM budget (conservative for v7x 64 MiB).
    ts = _choose_time_chunk(T, bt, E, Hp)
    t_pad = _round_up(T, ts)
    n_tc = t_pad // ts

    ids = jnp.pad(token_ids, ((0, b_pad - B), (0, 0)))          # pad with id 0

    # Embedding gather directly into time-major bf16 layout (only the tiny
    # int32 id matrix is transposed, never the big activation tensor).
    x_tbe = jnp.take(emb, ids.T, axis=0)                        # (T, Bp, E) bf16
    if t_pad > T:
        x_tbe = jnp.pad(x_tbe, ((0, t_pad - T), (0, 0), (0, 0)))

    kernel = functools.partial(lstm_chunk_kernel, t_total=T)

    h_pad = pl.pallas_call(
        kernel,
        out_shape=jax.ShapeDtypeStruct((b_pad, Hp), jnp.float32),
        grid_spec=pltpu.PrefetchScalarGridSpec(
            num_scalar_prefetch=0,
            grid=(nb, n_tc),
            in_specs=[
                # streamed bf16 embedded tokens, one time-chunk per grid step
                pl.BlockSpec((ts, bt, E), lambda b, t: (t, b, 0)),
                # invariant weights / bias: whole array, single VMEM copy
                pl.BlockSpec(memory_space=pltpu.MemorySpace.VMEM),
                pl.BlockSpec(memory_space=pltpu.MemorySpace.VMEM),
                pl.BlockSpec(memory_space=pltpu.MemorySpace.VMEM),
            ],
            # t-invariant block index => h stays VMEM-resident across the
            # whole time loop; doubles as the recurrent h state.
            out_specs=pl.BlockSpec((bt, Hp), lambda b, t: (b, 0)),
            scratch_shapes=[
                pltpu.VMEM((bt, Hp), jnp.float32),          # c state
                pltpu.VMEM((ts, bt, 4 * Hp), jnp.float32),  # chunk gate contrib
            ],
        ),
        compiler_params=pltpu.CompilerParams(
            dimension_semantics=("parallel", "arbitrary"),
            vmem_limit_bytes=32 * 1024 * 1024,
        ),
    )(x_tbe, w_ih, w_hh, b_g)

    # Dropout is identity (eval mode). Final Linear on the true (B, H) slice,
    # done once in XLA (no reason to keep W_fc resident in VMEM across chunks).
    h_last = h_pad[:B, :H]
    return jnp.dot(h_last, w_fc, preferred_element_type=jnp.float32) + b_fc


# ----------------------------- parameters ----------------------------------

def init_params(key, vocab_size, embed_dim, hidden_dim, output_dim):
    """Raw parameters in PyTorch-style layouts / gate order [i, f, g, o]."""
    ks = jax.random.split(key, 6)
    emb = jax.random.normal(ks[0], (vocab_size, embed_dim), jnp.float32) * 0.1
    emb = emb.at[0].set(0.0)                                    # padding_idx=0
    w_ih = jax.random.normal(ks[1], (4 * hidden_dim, embed_dim), jnp.float32) * 0.1
    w_hh = jax.random.normal(ks[2], (4 * hidden_dim, hidden_dim), jnp.float32) * 0.1
    b_ih = jax.random.normal(ks[3], (4 * hidden_dim,), jnp.float32) * 0.1
    b_hh = jax.random.normal(ks[4], (4 * hidden_dim,), jnp.float32) * 0.1
    w_fc = jax.random.normal(ks[5], (output_dim, hidden_dim), jnp.float32) * 0.1
    b_fc = jnp.zeros((output_dim,), jnp.float32)
    return {"embedding": emb, "w_ih": w_ih, "w_hh": w_hh,
            "b_ih": b_ih, "b_hh": b_hh, "w_fc": w_fc, "b_fc": b_fc}


def pack_params(raw):
    """Reorder gates to [i, f, o, g], zero-pad H -> multiple of 128, pre-
    transpose, and cast matmul operands to bf16 (f32 accumulation kept)."""
    H = raw["w_hh"].shape[1]
    Hp = _round_up(H, 128)

    def reorder_pad(w):  # (4H, ...) -> (4Hp, ...), gate blocks [i, f, o, g]
        i, f, g, o = jnp.split(w, 4, axis=0)
        pad = [(0, Hp - H)] + [(0, 0)] * (w.ndim - 1)
        return jnp.concatenate([jnp.pad(blk, pad) for blk in (i, f, o, g)], axis=0)

    w_ih_p = reorder_pad(raw["w_ih"])                            # (4Hp, E)
    w_hh_p = reorder_pad(raw["w_hh"])                            # (4Hp, H)
    w_hh_p = jnp.pad(w_hh_p, ((0, 0), (0, Hp - H)))              # (4Hp, Hp)
    b_p = reorder_pad((raw["b_ih"] + raw["b_hh"])[:, None])[:, 0]  # (4Hp,)

    return {
        "embedding_bf16": raw["embedding"].astype(jnp.bfloat16),  # (V, E)
        "w_ih_p": jnp.asarray(w_ih_p.T, jnp.bfloat16),           # (E, 4Hp)
        "w_hh_p": jnp.asarray(w_hh_p.T, jnp.bfloat16),           # (Hp, 4Hp)
        "b_gate_p": b_p.reshape(1, -1).astype(jnp.float32),      # (1, 4Hp)
        "w_fc_t": raw["w_fc"].T,                                 # (H, O)
        "b_fc": raw["b_fc"].reshape(1, -1),                      # (1, O)
        "hidden_dim": H,
    }


# ----------------------------- reference ------------------------------------

def reference_forward(token_ids, raw):
    """Pure-JAX reference in PyTorch layout/gate order, using the same
    precision policy as the kernel (bf16 matmul operands, f32 accumulation)."""
    x = jnp.take(raw["embedding"], token_ids, axis=0)            # (B, T, E)
    B, T, _ = x.shape
    H = raw["w_hh"].shape[1]
    w_ih_t = raw["w_ih"].T.astype(jnp.bfloat16)                  # (E, 4H)
    w_hh_t = raw["w_hh"].T.astype(jnp.bfloat16)                  # (H, 4H)
    bias = (raw["b_ih"] + raw["b_hh"]).reshape(1, -1)
    h = jnp.zeros((B, H), jnp.float32)
    c = jnp.zeros((B, H), jnp.float32)
    for t in range(T):
        gates = (jnp.dot(x[:, t].astype(jnp.bfloat16), w_ih_t,
                         preferred_element_type=jnp.float32)
                 + jnp.dot(h.astype(jnp.bfloat16), w_hh_t,
                           preferred_element_type=jnp.float32)
                 + bias)
        i, f, g, o = jnp.split(gates, 4, axis=-1)                # PyTorch order
        i, f, g, o = (jax.nn.sigmoid(i), jax.nn.sigmoid(f),
                      jnp.tanh(g), jax.nn.sigmoid(o))
        c = f * c + i * g
        h = o * jnp.tanh(c)
    return (jnp.dot(h, raw["w_fc"].T, preferred_element_type=jnp.float32)
            + raw["b_fc"].reshape(1, -1))


if __name__ == "__main__":
    vocab_size, embed_dim, hidden_dim, output_dim = 50, 32, 32, 8
    batch, seq = 2, 8

    key = jax.random.PRNGKey(0)
    pkey, dkey = jax.random.split(key)
    raw = init_params(pkey, vocab_size, embed_dim, hidden_dim, output_dim)
    packed = pack_params(raw)
    token_ids = jax.random.randint(dkey, (batch, seq), 0, vocab_size, dtype=jnp.int32)

    out = lstm_model_forward(token_ids, packed)
    out = jax.block_until_ready(out)

    ref = jax.block_until_ready(reference_forward(token_ids, raw))
    assert out.shape == (batch, output_dim)
    # bf16 matmul operands => looser tolerance than a pure-f32 comparison.
    assert jnp.allclose(out, ref, atol=2e-3, rtol=2e-2), "mismatch vs JAX reference"

    print("KERNEL_OK")
</pallas_src>

<mosaic_0001>
module attributes {stable_mosaic.version = 11 : i64} {
  func.func @lstm_chunk_kernel(%arg0: i32, %arg1: i32, %arg2: memref<8x8x32xbf16, #tpu.memory_space<vmem>>, %arg3: memref<32x512xbf16, #tpu.memory_space<vmem>>, %arg4: memref<128x512xbf16, #tpu.memory_space<vmem>>, %arg5: memref<1x512xf32, #tpu.memory_space<vmem>>, %arg6: memref<8x128xf32, #tpu.memory_space<vmem>>, %arg7: memref<8x128xf32, #tpu.memory_space<vmem>>, %arg8: memref<8x8x512xf32, #tpu.memory_space<vmem>>) attributes {dimension_semantics = [#tpu.dimension_semantics<parallel>, #tpu.dimension_semantics<arbitrary>], iteration_bounds = array<i64: 1, 1>, scalar_prefetch = 0 : i64, scratch_operands = 2 : i64, tpu.core_type = #tpu.core_type<tc>, window_params = [{transform_indices = @transform_0, window_bounds = array<i64: 8, 8, 32>}, {pipeline_mode = #tpu.pipeline_mode<synchronous>, transform_indices = @transform_1, window_bounds = array<i64: 32, 512>}, {pipeline_mode = #tpu.pipeline_mode<synchronous>, transform_indices = @transform_2, window_bounds = array<i64: 128, 512>}, {pipeline_mode = #tpu.pipeline_mode<synchronous>, transform_indices = @transform_3, window_bounds = array<i64: 1, 512>}, {transform_indices = @transform_4, window_bounds = array<i64: 8, 128>}]} {
    %c0_i32 = arith.constant 0 : i32
    %0 = arith.cmpi eq, %arg1, %c0_i32 : i32
    %1 = arith.extui %0 : i1 to i32
    %c0_i32_0 = arith.constant 0 : i32
    %2 = arith.cmpi ne, %1, %c0_i32_0 : i32
    scf.if %2 {
      %cst_123 = arith.constant 0.000000e+00 : f32
      %228 = vector.broadcast %cst_123 : f32 to vector<8x128xf32>
      %c0_124 = arith.constant 0 : index
      %c0_125 = arith.constant 0 : index
      %229 = vector.load %arg6[%c0_124, %c0_125] : memref<8x128xf32, #tpu.memory_space<vmem>>, vector<8x128xf32>
      tpu.vector_store %arg6[%c0_124, %c0_125], %228 {strides = array<i32>} : memref<8x128xf32, #tpu.memory_space<vmem>>, vector<8x128xf32>,
      %cst_126 = arith.constant 0.000000e+00 : f32
      %230 = vector.broadcast %cst_126 : f32 to vector<8x128xf32>
      %c0_127 = arith.constant 0 : index
      %c0_128 = arith.constant 0 : index
      %231 = vector.load %arg7[%c0_127, %c0_128] : memref<8x128xf32, #tpu.memory_space<vmem>>, vector<8x128xf32>
      tpu.vector_store %arg7[%c0_127, %c0_128], %230 {strides = array<i32>} : memref<8x128xf32, #tpu.memory_space<vmem>>, vector<8x128xf32>,
    } else {
    }
    %c0 = arith.constant 0 : index
    %c0_1 = arith.constant 0 : index
    %c0_2 = arith.constant 0 : index
    %3 = vector.load %arg2[%c0, %c0_1, %c0_2] : memref<8x8x32xbf16, #tpu.memory_space<vmem>>, vector<8x8x32xbf16>
    %4 = vector.shape_cast %3 : vector<8x8x32xbf16> to vector<64x32xbf16>
    %c0_3 = arith.constant 0 : index
    %c0_4 = arith.constant 0 : index
    %5 = vector.load %arg3[%c0_3, %c0_4] : memref<32x512xbf16, #tpu.memory_space<vmem>>, vector<32x512xbf16>
    %cst = arith.constant dense<0.000000e+00> : vector<64x512xf32>
    %6 = tpu.matmul %4, %5, %cst {dimension_numbers = #tpu.dot_dimension_numbers<[1], [0], [0], [1], [0, 0, 1, 1], [], []>} : vector<64x32xbf16>, vector<32x512xbf16>, vector<64x512xf32> -> vector<64x512xf32>
    %c0_5 = arith.constant 0 : index
    %c0_6 = arith.constant 0 : index
    %7 = vector.load %arg5[%c0_5, %c0_6] : memref<1x512xf32, #tpu.memory_space<vmem>>, vector<1x512xf32>
    %8 = vector.broadcast %7 : vector<1x512xf32> to vector<64x512xf32>
    %9 = arith.addf %6, %8 : vector<64x512xf32>
    %10 = vector.shape_cast %9 : vector<64x512xf32> to vector<8x8x512xf32>
    %c0_7 = arith.constant 0 : index
    %c0_8 = arith.constant 0 : index
    %c0_9 = arith.constant 0 : index
    %11 = vector.load %arg8[%c0_7, %c0_8, %c0_9] : memref<8x8x512xf32, #tpu.memory_space<vmem>>, vector<8x8x512xf32>
    tpu.vector_store %arg8[%c0_7, %c0_8, %c0_9], %10 {strides = array<i32>} : memref<8x8x512xf32, #tpu.memory_space<vmem>>, vector<8x8x512xf32>,
    %c0_i32_10 = arith.constant 0 : i32
    %12 = arith.index_cast %c0_i32_10 : i32 to index
    %c0_11 = arith.constant 0 : index
    %c0_12 = arith.constant 0 : index
    %13 = vector.load %arg8[%12, %c0_11, %c0_12] : memref<8x8x512xf32, #tpu.memory_space<vmem>>, vector<1x8x512xf32>
    %14 = vector.shape_cast %13 : vector<1x8x512xf32> to vector<8x512xf32>
    %c0_13 = arith.constant 0 : index
    %c0_14 = arith.constant 0 : index
    %15 = vector.load %arg6[%c0_13, %c0_14] : memref<8x128xf32, #tpu.memory_space<vmem>>, vector<8x128xf32>
    %16 = arith.truncf %15 : vector<8x128xf32> to vector<8x128xbf16>
    %c0_15 = arith.constant 0 : index
    %c0_16 = arith.constant 0 : index
    %17 = vector.load %arg4[%c0_15, %c0_16] : memref<128x512xbf16, #tpu.memory_space<vmem>>, vector<128x512xbf16>
    %cst_17 = arith.constant dense<0.000000e+00> : vector<8x512xf32>
    %18 = tpu.matmul %16, %17, %cst_17 {dimension_numbers = #tpu.dot_dimension_numbers<[1], [0], [0], [1], [0, 0, 1, 1], [], []>} : vector<8x128xbf16>, vector<128x512xbf16>, vector<8x512xf32> -> vector<8x512xf32>
    %19 = arith.addf %14, %18 : vector<8x512xf32>
    %20 = vector.extract_strided_slice %19 {offsets = [0, 0], sizes = [8, 384], strides = [1, 1]} : vector<8x512xf32> to vector<8x384xf32>
    %21 = arith.negf %20 : vector<8x384xf32>
    %22 = math.exp %21 : vector<8x384xf32>
    %cst_18 = arith.constant 1.000000e+00 : f32
    %23 = vector.broadcast %cst_18 : f32 to vector<8x384xf32>
    %24 = arith.addf %23, %22 : vector<8x384xf32>
    %25 = arith.divf %23, %24 : vector<8x384xf32>
    %26 = vector.extract_strided_slice %19 {offsets = [0, 384], sizes = [8, 128], strides = [1, 1]} : vector<8x512xf32> to vector<8x128xf32>
    %27 = math.tanh %26 : vector<8x128xf32>
    %28 = vector.extract_strided_slice %25 {offsets = [0, 0], sizes = [8, 128], strides = [1, 1]} : vector<8x384xf32> to vector<8x128xf32>
    %29 = vector.extract_strided_slice %25 {offsets = [0, 128], sizes = [8, 128], strides = [1, 1]} : vector<8x384xf32> to vector<8x128xf32>
    %30 = vector.extract_strided_slice %25 {offsets = [0, 256], sizes = [8, 128], strides = [1, 1]} : vector<8x384xf32> to vector<8x128xf32>
    %c0_19 = arith.constant 0 : index
    %c0_20 = arith.constant 0 : index
    %31 = vector.load %arg7[%c0_19, %c0_20] : memref<8x128xf32, #tpu.memory_space<vmem>>, vector<8x128xf32>
    %32 = arith.mulf %29, %31 : vector<8x128xf32>
    %33 = arith.mulf %28, %27 : vector<8x128xf32>
    %34 = arith.addf %32, %33 : vector<8x128xf32>
    %35 = math.tanh %34 : vector<8x128xf32>
    %36 = arith.mulf %30, %35 : vector<8x128xf32>
    %c0_21 = arith.constant 0 : index
    %c0_22 = arith.constant 0 : index
    %37 = vector.load %arg7[%c0_21, %c0_22] : memref<8x128xf32, #tpu.memory_space<vmem>>, vector<8x128xf32>
    tpu.vector_store %arg7[%c0_21, %c0_22], %34 {strides = array<i32>} : memref<8x128xf32, #tpu.memory_space<vmem>>, vector<8x128xf32>,
    %c0_23 = arith.constant 0 : index
    %c0_24 = arith.constant 0 : index
    %38 = vector.load %arg6[%c0_23, %c0_24] : memref<8x128xf32, #tpu.memory_space<vmem>>, vector<8x128xf32>
    tpu.vector_store %arg6[%c0_23, %c0_24], %36 {strides = array<i32>} : memref<8x128xf32, #tpu.memory_space<vmem>>, vector<8x128xf32>,
    %c1_i32 = arith.constant 1 : i32
    %39 = arith.index_cast %c1_i32 : i32 to index
    %c0_25 = arith.constant 0 : index
    %c0_26 = arith.constant 0 : index
    %40 = vector.load %arg8[%39, %c0_25, %c0_26] : memref<8x8x512xf32, #tpu.memory_space<vmem>>, vector<1x8x512xf32>
    %41 = vector.shape_cast %40 : vector<1x8x512xf32> to vector<8x512xf32>
    %c0_27 = arith.constant 0 : index
    %c0_28 = arith.constant 0 : index
    %42 = vector.load %arg6[%c0_27, %c0_28] : memref<8x128xf32, #tpu.memory_space<vmem>>, vector<8x128xf32>
    %43 = arith.truncf %42 : vector<8x128xf32> to vector<8x128xbf16>
    %c0_29 = arith.constant 0 : index
    %c0_30 = arith.constant 0 : index
    %44 = vector.load %arg4[%c0_29, %c0_30] : memref<128x512xbf16, #tpu.memory_space<vmem>>, vector<128x512xbf16>
    %cst_31 = arith.constant dense<0.000000e+00> : vector<8x512xf32>
    %45 = tpu.matmul %43, %44, %cst_31 {dimension_numbers = #tpu.dot_dimension_numbers<[1], [0], [0], [1], [0, 0, 1, 1], [], []>} : vector<8x128xbf16>, vector<128x512xbf16>, vector<8x512xf32> -> vector<8x512xf32>
    %46 = arith.addf %41, %45 : vector<8x512xf32>
    %47 = vector.extract_strided_slice %46 {offsets = [0, 0], sizes = [8, 384], strides = [1, 1]} : vector<8x512xf32> to vector<8x384xf32>
    %48 = arith.negf %47 : vector<8x384xf32>
    %49 = math.exp %48 : vector<8x384xf32>
    %cst_32 = arith.constant 1.000000e+00 : f32
    %50 = vector.broadcast %cst_32 : f32 to vector<8x384xf32>
    %51 = arith.addf %50, %49 : vector<8x384xf32>
    %52 = arith.divf %50, %51 : vector<8x384xf32>
    %53 = vector.extract_strided_slice %46 {offsets = [0, 384], sizes = [8, 128], strides = [1, 1]} : vector<8x512xf32> to vector<8x128xf32>
    %54 = math.tanh %53 : vector<8x128xf32>
    %55 = vector.extract_strided_slice %52 {offsets = [0, 0], sizes = [8, 128], strides = [1, 1]} : vector<8x384xf32> to vector<8x128xf32>
    %56 = vector.extract_strided_slice %52 {offsets = [0, 128], sizes = [8, 128], strides = [1, 1]} : vector<8x384xf32> to vector<8x128xf32>
    %57 = vector.extract_strided_slice %52 {offsets = [0, 256], sizes = [8, 128], strides = [1, 1]} : vector<8x384xf32> to vector<8x128xf32>
    %c0_33 = arith.constant 0 : index
    %c0_34 = arith.constant 0 : index
    %58 = vector.load %arg7[%c0_33, %c0_34] : memref<8x128xf32, #tpu.memory_space<vmem>>, vector<8x128xf32>
    %59 = arith.mulf %56, %58 : vector<8x128xf32>
    %60 = arith.mulf %55, %54 : vector<8x128xf32>
    %61 = arith.addf %59, %60 : vector<8x128xf32>
    %62 = math.tanh %61 : vector<8x128xf32>
    %63 = arith.mulf %57, %62 : vector<8x128xf32>
    %c0_35 = arith.constant 0 : index
    %c0_36 = arith.constant 0 : index
    %64 = vector.load %arg7[%c0_35, %c0_36] : memref<8x128xf32, #tpu.memory_space<vmem>>, vector<8x128xf32>
    tpu.vector_store %arg7[%c0_35, %c0_36], %61 {strides = array<i32>} : memref<8x128xf32, #tpu.memory_space<vmem>>, vector<8x128xf32>,
    %c0_37 = arith.constant 0 : index
    %c0_38 = arith.constant 0 : index
    %65 = vector.load %arg6[%c0_37, %c0_38] : memref<8x128xf32, #tpu.memory_space<vmem>>, vector<8x128xf32>
    tpu.vector_store %arg6[%c0_37, %c0_38], %63 {strides = array<i32>} : memref<8x128xf32, #tpu.memory_space<vmem>>, vector<8x128xf32>,
    %c2_i32 = arith.constant 2 : i32
    %66 = arith.index_cast %c2_i32 : i32 to index
    %c0_39 = arith.constant 0 : index
    %c0_40 = arith.constant 0 : index
    %67 = vector.load %arg8[%66, %c0_39, %c0_40] : memref<8x8x512xf32, #tpu.memory_space<vmem>>, vector<1x8x512xf32>
    %68 = vector.shape_cast %67 : vector<1x8x512xf32> to vector<8x512xf32>
    %c0_41 = arith.constant 0 : index
    %c0_42 = arith.constant 0 : index
    %69 = vector.load %arg6[%c0_41, %c0_42] : memref<8x128xf32, #tpu.memory_space<vmem>>, vector<8x128xf32>
    %70 = arith.truncf %69 : vector<8x128xf32> to vector<8x128xbf16>
    %c0_43 = arith.constant 0 : index
    %c0_44 = arith.constant 0 : index
    %71 = vector.load %arg4[%c0_43, %c0_44] : memref<128x512xbf16, #tpu.memory_space<vmem>>, vector<128x512xbf16>
    %cst_45 = arith.constant dense<0.000000e+00> : vector<8x512xf32>
    %72 = tpu.matmul %70, %71, %cst_45 {dimension_numbers = #tpu.dot_dimension_numbers<[1], [0], [0], [1], [0, 0, 1, 1], [], []>} : vector<8x128xbf16>, vector<128x512xbf16>, vector<8x512xf32> -> vector<8x512xf32>
    %73 = arith.addf %68, %72 : vector<8x512xf32>
    %74 = vector.extract_strided_slice %73 {offsets = [0, 0], sizes = [8, 384], strides = [1, 1]} : vector<8x512xf32> to vector<8x384xf32>
    %75 = arith.negf %74 : vector<8x384xf32>
    %76 = math.exp %75 : vector<8x384xf32>
    %cst_46 = arith.constant 1.000000e+00 : f32
    %77 = vector.broadcast %cst_46 : f32 to vector<8x384xf32>
    %78 = arith.addf %77, %76 : vector<8x384xf32>
    %79 = arith.divf %77, %78 : vector<8x384xf32>
    %80 = vector.extract_strided_slice %73 {offsets = [0, 384], sizes = [8, 128], strides = [1, 1]} : vector<8x512xf32> to vector<8x128xf32>
    %81 = math.tanh %80 : vector<8x128xf32>
    %82 = vector.extract_strided_slice %79 {offsets = [0, 0], sizes = [8, 128], strides = [1, 1]} : vector<8x384xf32> to vector<8x128xf32>
    %83 = vector.extract_strided_slice %79 {offsets = [0, 128], sizes = [8, 128], strides = [1, 1]} : vector<8x384xf32> to vector<8x128xf32>
    %84 = vector.extract_strided_slice %79 {offsets = [0, 256], sizes = [8, 128], strides = [1, 1]} : vector<8x384xf32> to vector<8x128xf32>
    %c0_47 = arith.constant 0 : index
    %c0_48 = arith.constant 0 : index
    %85 = vector.load %arg7[%c0_47, %c0_48] : memref<8x128xf32, #tpu.memory_space<vmem>>, vector<8x128xf32>
    %86 = arith.mulf %83, %85 : vector<8x128xf32>
    %87 = arith.mulf %82, %81 : vector<8x128xf32>
    %88 = arith.addf %86, %87 : vector<8x128xf32>
    %89 = math.tanh %88 : vector<8x128xf32>
    %90 = arith.mulf %84, %89 : vector<8x128xf32>
    %c0_49 = arith.constant 0 : index
    %c0_50 = arith.constant 0 : index
    %91 = vector.load %arg7[%c0_49, %c0_50] : memref<8x128xf32, #tpu.memory_space<vmem>>, vector<8x128xf32>
    tpu.vector_store %arg7[%c0_49, %c0_50], %88 {strides = array<i32>} : memref<8x128xf32, #tpu.memory_space<vmem>>, vector<8x128xf32>,
    %c0_51 = arith.constant 0 : index
    %c0_52 = arith.constant 0 : index
    %92 = vector.load %arg6[%c0_51, %c0_52] : memref<8x128xf32, #tpu.memory_space<vmem>>, vector<8x128xf32>
    tpu.vector_store %arg6[%c0_51, %c0_52], %90 {strides = array<i32>} : memref<8x128xf32, #tpu.memory_space<vmem>>, vector<8x128xf32>,
    %c3_i32 = arith.constant 3 : i32
    %93 = arith.index_cast %c3_i32 : i32 to index
    %c0_53 = arith.constant 0 : index
    %c0_54 = arith.constant 0 : index
    %94 = vector.load %arg8[%93, %c0_53, %c0_54] : memref<8x8x512xf32, #tpu.memory_space<vmem>>, vector<1x8x512xf32>
    %95 = vector.shape_cast %94 : vector<1x8x512xf32> to vector<8x512xf32>
    %c0_55 = arith.constant 0 : index
    %c0_56 = arith.constant 0 : index
    %96 = vector.load %arg6[%c0_55, %c0_56] : memref<8x128xf32, #tpu.memory_space<vmem>>, vector<8x128xf32>
    %97 = arith.truncf %96 : vector<8x128xf32> to vector<8x128xbf16>
    %c0_57 = arith.constant 0 : index
    %c0_58 = arith.constant 0 : index
    %98 = vector.load %arg4[%c0_57, %c0_58] : memref<128x512xbf16, #tpu.memory_space<vmem>>, vector<128x512xbf16>
    %cst_59 = arith.constant dense<0.000000e+00> : vector<8x512xf32>
    %99 = tpu.matmul %97, %98, %cst_59 {dimension_numbers = #tpu.dot_dimension_numbers<[1], [0], [0], [1], [0, 0, 1, 1], [], []>} : vector<8x128xbf16>, vector<128x512xbf16>, vector<8x512xf32> -> vector<8x512xf32>
    %100 = arith.addf %95, %99 : vector<8x512xf32>
    %101 = vector.extract_strided_slice %100 {offsets = [0, 0], sizes = [8, 384], strides = [1, 1]} : vector<8x512xf32> to vector<8x384xf32>
    %102 = arith.negf %101 : vector<8x384xf32>
    %103 = math.exp %102 : vector<8x384xf32>
    %cst_60 = arith.constant 1.000000e+00 : f32
    %104 = vector.broadcast %cst_60 : f32 to vector<8x384xf32>
    %105 = arith.addf %104, %103 : vector<8x384xf32>
    %106 = arith.divf %104, %105 : vector<8x384xf32>
    %107 = vector.extract_strided_slice %100 {offsets = [0, 384], sizes = [8, 128], strides = [1, 1]} : vector<8x512xf32> to vector<8x128xf32>
    %108 = math.tanh %107 : vector<8x128xf32>
    %109 = vector.extract_strided_slice %106 {offsets = [0, 0], sizes = [8, 128], strides = [1, 1]} : vector<8x384xf32> to vector<8x128xf32>
    %110 = vector.extract_strided_slice %106 {offsets = [0, 128], sizes = [8, 128], strides = [1, 1]} : vector<8x384xf32> to vector<8x128xf32>
    %111 = vector.extract_strided_slice %106 {offsets = [0, 256], sizes = [8, 128], strides = [1, 1]} : vector<8x384xf32> to vector<8x128xf32>
    %c0_61 = arith.constant 0 : index
    %c0_62 = arith.constant 0 : index
    %112 = vector.load %arg7[%c0_61, %c0_62] : memref<8x128xf32, #tpu.memory_space<vmem>>, vector<8x128xf32>
    %113 = arith.mulf %110, %112 : vector<8x128xf32>
    %114 = arith.mulf %109, %108 : vector<8x128xf32>
    %115 = arith.addf %113, %114 : vector<8x128xf32>
    %116 = math.tanh %115 : vector<8x128xf32>
    %117 = arith.mulf %111, %116 : vector<8x128xf32>
    %c0_63 = arith.constant 0 : index
    %c0_64 = arith.constant 0 : index
    %118 = vector.load %arg7[%c0_63, %c0_64] : memref<8x128xf32, #tpu.memory_space<vmem>>, vector<8x128xf32>
    tpu.vector_store %arg7[%c0_63, %c0_64], %115 {strides = array<i32>} : memref<8x128xf32, #tpu.memory_space<vmem>>, vector<8x128xf32>,
    %c0_65 = arith.constant 0 : index
    %c0_66 = arith.constant 0 : index
    %119 = vector.load %arg6[%c0_65, %c0_66] : memref<8x128xf32, #tpu.memory_space<vmem>>, vector<8x128xf32>
    tpu.vector_store %arg6[%c0_65, %c0_66], %117 {strides = array<i32>} : memref<8x128xf32, #tpu.memory_space<vmem>>, vector<8x128xf32>,
    %c4_i32 = arith.constant 4 : i32
    %120 = arith.index_cast %c4_i32 : i32 to index
    %c0_67 = arith.constant 0 : index
    %c0_68 = arith.constant 0 : index
    %121 = vector.load %arg8[%120, %c0_67, %c0_68] : memref<8x8x512xf32, #tpu.memory_space<vmem>>, vector<1x8x512xf32>
    %122 = vector.shape_cast %121 : vector<1x8x512xf32> to vector<8x512xf32>
    %c0_69 = arith.constant 0 : index
    %c0_70 = arith.constant 0 : index
    %123 = vector.load %arg6[%c0_69, %c0_70] : memref<8x128xf32, #tpu.memory_space<vmem>>, vector<8x128xf32>
    %124 = arith.truncf %123 : vector<8x128xf32> to vector<8x128xbf16>
    %c0_71 = arith.constant 0 : index
    %c0_72 = arith.constant 0 : index
    %125 = vector.load %arg4[%c0_71, %c0_72] : memref<128x512xbf16, #tpu.memory_space<vmem>>, vector<128x512xbf16>
    %cst_73 = arith.constant dense<0.000000e+00> : vector<8x512xf32>
    %126 = tpu.matmul %124, %125, %cst_73 {dimension_numbers = #tpu.dot_dimension_numbers<[1], [0], [0], [1], [0, 0, 1, 1], [], []>} : vector<8x128xbf16>, vector<128x512xbf16>, vector<8x512xf32> -> vector<8x512xf32>
    %127 = arith.addf %122, %126 : vector<8x512xf32>
    %128 = vector.extract_strided_slice %127 {offsets = [0, 0], sizes = [8, 384], strides = [1, 1]} : vector<8x512xf32> to vector<8x384xf32>
    %129 = arith.negf %128 : vector<8x384xf32>
    %130 = math.exp %129 : vector<8x384xf32>
    %cst_74 = arith.constant 1.000000e+00 : f32
    %131 = vector.broadcast %cst_74 : f32 to vector<8x384xf32>
    %132 = arith.addf %131, %130 : vector<8x384xf32>
    %133 = arith.divf %131, %132 : vector<8x384xf32>
    %134 = vector.extract_strided_slice %127 {offsets = [0, 384], sizes = [8, 128], strides = [1, 1]} : vector<8x512xf32> to vector<8x128xf32>
    %135 = math.tanh %134 : vector<8x128xf32>
    %136 = vector.extract_strided_slice %133 {offsets = [0, 0], sizes = [8, 128], strides = [1, 1]} : vector<8x384xf32> to vector<8x128xf32>
    %137 = vector.extract_strided_slice %133 {offsets = [0, 128], sizes = [8, 128], strides = [1, 1]} : vector<8x384xf32> to vector<8x128xf32>
    %138 = vector.extract_strided_slice %133 {offsets = [0, 256], sizes = [8, 128], strides = [1, 1]} : vector<8x384xf32> to vector<8x128xf32>
    %c0_75 = arith.constant 0 : index
    %c0_76 = arith.constant 0 : index
    %139 = vector.load %arg7[%c0_75, %c0_76] : memref<8x128xf32, #tpu.memory_space<vmem>>, vector<8x128xf32>
    %140 = arith.mulf %137, %139 : vector<8x128xf32>
    %141 = arith.mulf %136, %135 : vector<8x128xf32>
    %142 = arith.addf %140, %141 : vector<8x128xf32>
    %143 = math.tanh %142 : vector<8x128xf32>
    %144 = arith.mulf %138, %143 : vector<8x128xf32>
    %c0_77 = arith.constant 0 : index
    %c0_78 = arith.constant 0 : index
    %145 = vector.load %arg7[%c0_77, %c0_78] : memref<8x128xf32, #tpu.memory_space<vmem>>, vector<8x128xf32>
    tpu.vector_store %arg7[%c0_77, %c0_78], %142 {strides = array<i32>} : memref<8x128xf32, #tpu.memory_space<vmem>>, vector<8x128xf32>,
    %c0_79 = arith.constant 0 : index
    %c0_80 = arith.constant 0 : index
    %146 = vector.load %arg6[%c0_79, %c0_80] : memref<8x128xf32, #tpu.memory_space<vmem>>, vector<8x128xf32>
    tpu.vector_store %arg6[%c0_79, %c0_80], %144 {strides = array<i32>} : memref<8x128xf32, #tpu.memory_space<vmem>>, vector<8x128xf32>,
    %c5_i32 = arith.constant 5 : i32
    %147 = arith.index_cast %c5_i32 : i32 to index
    %c0_81 = arith.constant 0 : index
    %c0_82 = arith.constant 0 : index
    %148 = vector.load %arg8[%147, %c0_81, %c0_82] : memref<8x8x512xf32, #tpu.memory_space<vmem>>, vector<1x8x512xf32>
    %149 = vector.shape_cast %148 : vector<1x8x512xf32> to vector<8x512xf32>
    %c0_83 = arith.constant 0 : index
    %c0_84 = arith.constant 0 : index
    %150 = vector.load %arg6[%c0_83, %c0_84] : memref<8x128xf32, #tpu.memory_space<vmem>>, vector<8x128xf32>
    %151 = arith.truncf %150 : vector<8x128xf32> to vector<8x128xbf16>
    %c0_85 = arith.constant 0 : index
    %c0_86 = arith.constant 0 : index
    %152 = vector.load %arg4[%c0_85, %c0_86] : memref<128x512xbf16, #tpu.memory_space<vmem>>, vector<128x512xbf16>
    %cst_87 = arith.constant dense<0.000000e+00> : vector<8x512xf32>
    %153 = tpu.matmul %151, %152, %cst_87 {dimension_numbers = #tpu.dot_dimension_numbers<[1], [0], [0], [1], [0, 0, 1, 1], [], []>} : vector<8x128xbf16>, vector<128x512xbf16>, vector<8x512xf32> -> vector<8x512xf32>
    %154 = arith.addf %149, %153 : vector<8x512xf32>
    %155 = vector.extract_strided_slice %154 {offsets = [0, 0], sizes = [8, 384], strides = [1, 1]} : vector<8x512xf32> to vector<8x384xf32>
    %156 = arith.negf %155 : vector<8x384xf32>
    %157 = math.exp %156 : vector<8x384xf32>
    %cst_88 = arith.constant 1.000000e+00 : f32
    %158 = vector.broadcast %cst_88 : f32 to vector<8x384xf32>
    %159 = arith.addf %158, %157 : vector<8x384xf32>
    %160 = arith.divf %158, %159 : vector<8x384xf32>
    %161 = vector.extract_strided_slice %154 {offsets = [0, 384], sizes = [8, 128], strides = [1, 1]} : vector<8x512xf32> to vector<8x128xf32>
    %162 = math.tanh %161 : vector<8x128xf32>
    %163 = vector.extract_strided_slice %160 {offsets = [0, 0], sizes = [8, 128], strides = [1, 1]} : vector<8x384xf32> to vector<8x128xf32>
    %164 = vector.extract_strided_slice %160 {offsets = [0, 128], sizes = [8, 128], strides = [1, 1]} : vector<8x384xf32> to vector<8x128xf32>
    %165 = vector.extract_strided_slice %160 {offsets = [0, 256], sizes = [8, 128], strides = [1, 1]} : vector<8x384xf32> to vector<8x128xf32>
    %c0_89 = arith.constant 0 : index
    %c0_90 = arith.constant 0 : index
    %166 = vector.load %arg7[%c0_89, %c0_90] : memref<8x128xf32, #tpu.memory_space<vmem>>, vector<8x128xf32>
    %167 = arith.mulf %164, %166 : vector<8x128xf32>
    %168 = arith.mulf %163, %162 : vector<8x128xf32>
    %169 = arith.addf %167, %168 : vector<8x128xf32>
    %170 = math.tanh %169 : vector<8x128xf32>
    %171 = arith.mulf %165, %170 : vector<8x128xf32>
    %c0_91 = arith.constant 0 : index
    %c0_92 = arith.constant 0 : index
    %172 = vector.load %arg7[%c0_91, %c0_92] : memref<8x128xf32, #tpu.memory_space<vmem>>, vector<8x128xf32>
    tpu.vector_store %arg7[%c0_91, %c0_92], %169 {strides = array<i32>} : memref<8x128xf32, #tpu.memory_space<vmem>>, vector<8x128xf32>,
    %c0_93 = arith.constant 0 : index
    %c0_94 = arith.constant 0 : index
    %173 = vector.load %arg6[%c0_93, %c0_94] : memref<8x128xf32, #tpu.memory_space<vmem>>, vector<8x128xf32>
    tpu.vector_store %arg6[%c0_93, %c0_94], %171 {strides = array<i32>} : memref<8x128xf32, #tpu.memory_space<vmem>>, vector<8x128xf32>,
    %c6_i32 = arith.constant 6 : i32
    %174 = arith.index_cast %c6_i32 : i32 to index
    %c0_95 = arith.constant 0 : index
    %c0_96 = arith.constant 0 : index
    %175 = vector.load %arg8[%174, %c0_95, %c0_96] : memref<8x8x512xf32, #tpu.memory_space<vmem>>, vector<1x8x512xf32>
    %176 = vector.shape_cast %175 : vector<1x8x512xf32> to vector<8x512xf32>
    %c0_97 = arith.constant 0 : index
    %c0_98 = arith.constant 0 : index
    %177 = vector.load %arg6[%c0_97, %c0_98] : memref<8x128xf32, #tpu.memory_space<vmem>>, vector<8x128xf32>
    %178 = arith.truncf %177 : vector<8x128xf32> to vector<8x128xbf16>
    %c0_99 = arith.constant 0 : index
    %c0_100 = arith.constant 0 : index
    %179 = vector.load %arg4[%c0_99, %c0_100] : memref<128x512xbf16, #tpu.memory_space<vmem>>, vector<128x512xbf16>
    %cst_101 = arith.constant dense<0.000000e+00> : vector<8x512xf32>
    %180 = tpu.matmul %178, %179, %cst_101 {dimension_numbers = #tpu.dot_dimension_numbers<[1], [0], [0], [1], [0, 0, 1, 1], [], []>} : vector<8x128xbf16>, vector<128x512xbf16>, vector<8x512xf32> -> vector<8x512xf32>
    %181 = arith.addf %176, %180 : vector<8x512xf32>
    %182 = vector.extract_strided_slice %181 {offsets = [0, 0], sizes = [8, 384], strides = [1, 1]} : vector<8x512xf32> to vector<8x384xf32>
    %183 = arith.negf %182 : vector<8x384xf32>
    %184 = math.exp %183 : vector<8x384xf32>
    %cst_102 = arith.constant 1.000000e+00 : f32
    %185 = vector.broadcast %cst_102 : f32 to vector<8x384xf32>
    %186 = arith.addf %185, %184 : vector<8x384xf32>
    %187 = arith.divf %185, %186 : vector<8x384xf32>
    %188 = vector.extract_strided_slice %181 {offsets = [0, 384], sizes = [8, 128], strides = [1, 1]} : vector<8x512xf32> to vector<8x128xf32>
    %189 = math.tanh %188 : vector<8x128xf32>
    %190 = vector.extract_strided_slice %187 {offsets = [0, 0], sizes = [8, 128], strides = [1, 1]} : vector<8x384xf32> to vector<8x128xf32>
    %191 = vector.extract_strided_slice %187 {offsets = [0, 128], sizes = [8, 128], strides = [1, 1]} : vector<8x384xf32> to vector<8x128xf32>
    %192 = vector.extract_strided_slice %187 {offsets = [0, 256], sizes = [8, 128], strides = [1, 1]} : vector<8x384xf32> to vector<8x128xf32>
    %c0_103 = arith.constant 0 : index
    %c0_104 = arith.constant 0 : index
    %193 = vector.load %arg7[%c0_103, %c0_104] : memref<8x128xf32, #tpu.memory_space<vmem>>, vector<8x128xf32>
    %194 = arith.mulf %191, %193 : vector<8x128xf32>
    %195 = arith.mulf %190, %189 : vector<8x128xf32>
    %196 = arith.addf %194, %195 : vector<8x128xf32>
    %197 = math.tanh %196 : vector<8x128xf32>
    %198 = arith.mulf %192, %197 : vector<8x128xf32>
    %c0_105 = arith.constant 0 : index
    %c0_106 = arith.constant 0 : index
    %199 = vector.load %arg7[%c0_105, %c0_106] : memref<8x128xf32, #tpu.memory_space<vmem>>, vector<8x128xf32>
    tpu.vector_store %arg7[%c0_105, %c0_106], %196 {strides = array<i32>} : memref<8x128xf32, #tpu.memory_space<vmem>>, vector<8x128xf32>,
    %c0_107 = arith.constant 0 : index
    %c0_108 = arith.constant 0 : index
    %200 = vector.load %arg6[%c0_107, %c0_108] : memref<8x128xf32, #tpu.memory_space<vmem>>, vector<8x128xf32>
    tpu.vector_store %arg6[%c0_107, %c0_108], %198 {strides = array<i32>} : memref<8x128xf32, #tpu.memory_space<vmem>>, vector<8x128xf32>,
    %c7_i32 = arith.constant 7 : i32
    %201 = arith.index_cast %c7_i32 : i32 to index
    %c0_109 = arith.constant 0 : index
    %c0_110 = arith.constant 0 : index
    %202 = vector.load %arg8[%201, %c0_109, %c0_110] : memref<8x8x512xf32, #tpu.memory_space<vmem>>, vector<1x8x512xf32>
    %203 = vector.shape_cast %202 : vector<1x8x512xf32> to vector<8x512xf32>
    %c0_111 = arith.constant 0 : index
    %c0_112 = arith.constant 0 : index
    %204 = vector.load %arg6[%c0_111, %c0_112] : memref<8x128xf32, #tpu.memory_space<vmem>>, vector<8x128xf32>
    %205 = arith.truncf %204 : vector<8x128xf32> to vector<8x128xbf16>
    %c0_113 = arith.constant 0 : index
    %c0_114 = arith.constant 0 : index
    %206 = vector.load %arg4[%c0_113, %c0_114] : memref<128x512xbf16, #tpu.memory_space<vmem>>, vector<128x512xbf16>
    %cst_115 = arith.constant dense<0.000000e+00> : vector<8x512xf32>
    %207 = tpu.matmul %205, %206, %cst_115 {dimension_numbers = #tpu.dot_dimension_numbers<[1], [0], [0], [1], [0, 0, 1, 1], [], []>} : vector<8x128xbf16>, vector<128x512xbf16>, vector<8x512xf32> -> vector<8x512xf32>
    %208 = arith.addf %203, %207 : vector<8x512xf32>
    %209 = vector.extract_strided_slice %208 {offsets = [0, 0], sizes = [8, 384], strides = [1, 1]} : vector<8x512xf32> to vector<8x384xf32>
    %210 = arith.negf %209 : vector<8x384xf32>
    %211 = math.exp %210 : vector<8x384xf32>
    %cst_116 = arith.constant 1.000000e+00 : f32
    %212 = vector.broadcast %cst_116 : f32 to vector<8x384xf32>
    %213 = arith.addf %212, %211 : vector<8x384xf32>
    %214 = arith.divf %212, %213 : vector<8x384xf32>
    %215 = vector.extract_strided_slice %208 {offsets = [0, 384], sizes = [8, 128], strides = [1, 1]} : vector<8x512xf32> to vector<8x128xf32>
    %216 = math.tanh %215 : vector<8x128xf32>
    %217 = vector.extract_strided_slice %214 {offsets = [0, 0], sizes = [8, 128], strides = [1, 1]} : vector<8x384xf32> to vector<8x128xf32>
    %218 = vector.extract_strided_slice %214 {offsets = [0, 128], sizes = [8, 128], strides = [1, 1]} : vector<8x384xf32> to vector<8x128xf32>
    %219 = vector.extract_strided_slice %214 {offsets = [0, 256], sizes = [8, 128], strides = [1, 1]} : vector<8x384xf32> to vector<8x128xf32>
    %c0_117 = arith.constant 0 : index
    %c0_118 = arith.constant 0 : index
    %220 = vector.load %arg7[%c0_117, %c0_118] : memref<8x128xf32, #tpu.memory_space<vmem>>, vector<8x128xf32>
    %221 = arith.mulf %218, %220 : vector<8x128xf32>
    %222 = arith.mulf %217, %216 : vector<8x128xf32>
    %223 = arith.addf %221, %222 : vector<8x128xf32>
    %224 = math.tanh %223 : vector<8x128xf32>
    %225 = arith.mulf %219, %224 : vector<8x128xf32>
    %c0_119 = arith.constant 0 : index
    %c0_120 = arith.constant 0 : index
    %226 = vector.load %arg7[%c0_119, %c0_120] : memref<8x128xf32, #tpu.memory_space<vmem>>, vector<8x128xf32>
    tpu.vector_store %arg7[%c0_119, %c0_120], %223 {strides = array<i32>} : memref<8x128xf32, #tpu.memory_space<vmem>>, vector<8x128xf32>,
    %c0_121 = arith.constant 0 : index
    %c0_122 = arith.constant 0 : index
    %227 = vector.load %arg6[%c0_121, %c0_122] : memref<8x128xf32, #tpu.memory_space<vmem>>, vector<8x128xf32>
    tpu.vector_store %arg6[%c0_121, %c0_122], %225 {strides = array<i32>} : memref<8x128xf32, #tpu.memory_space<vmem>>, vector<8x128xf32>,
    %c8_i32 = arith.constant 8 : i32
    return
  }
  func.func @transform_0(%arg0: i32, %arg1: i32) -> (i32, i32, i32) {
    %c0_i32 = arith.constant 0 : i32
    %c0_i32_0 = arith.constant 0 : i32
    return %arg1, %arg0, %c0_i32 : i32, i32, i32
  }
  func.func @transform_1(%arg0: i32, %arg1: i32) -> (i32, i32) {
    %c0_i32 = arith.constant 0 : i32
    %c0_i32_0 = arith.constant 0 : i32
    %c0_i32_1 = arith.constant 0 : i32
    return %c0_i32, %c0_i32_0 : i32, i32
  }
  func.func @transform_2(%arg0: i32, %arg1: i32) -> (i32, i32) {
    %c0_i32 = arith.constant 0 : i32
    %c0_i32_0 = arith.constant 0 : i32
    %c0_i32_1 = arith.constant 0 : i32
    return %c0_i32, %c0_i32_0 : i32, i32
  }
  func.func @transform_3(%arg0: i32, %arg1: i32) -> (i32, i32) {
    %c0_i32 = arith.constant 0 : i32
    %c0_i32_0 = arith.constant 0 : i32
    %c0_i32_1 = arith.constant 0 : i32
    return %c0_i32, %c0_i32_0 : i32, i32
  }
  func.func @transform_4(%arg0: i32, %arg1: i32) -> (i32, i32) {
    %c0_i32 = arith.constant 0 : i32
    %c0_i32_0 = arith.constant 0 : i32
    return %arg0, %c0_i32 : i32, i32
  }
}

</mosaic_0001>

<llo_original>
// kernel: tpu_custom_call.1
$region0: #{tpu_custom_call.1}
  #allocation0 [shape = 'u32[]', space=smem, size = 0x4, offset = 0x4, fixed_abs, tag = 'smem constant byte address 0x4 - core index']
  #allocation1 [shape = 'u32[72,128]{1,0:T(1,128)}', space=vmem, size = 0x9000, scoped, tag = 'internal scratch']
  #allocation2 [shape = 'f32[8,128]{1,0:T(8,128)}', space=vmem, size = 0x1000, scoped, tag = 'scratch operand']
  #allocation3 [shape = 'f32[8,8,512]{2,1,0:T(8,128)}', space=vmem, size = 0x20000, scoped, tag = 'scratch operand']
  %s0 = inlined_call_operand.hbm [shape: bf16[8,8,32], index: 0, kind: input, shape index: {}]
  %s1 = inlined_call_operand.hbm [shape: bf16[32,512], index: 1, kind: input, shape index: {}]
  %s2 = inlined_call_operand.hbm [shape: bf16[128,512], index: 2, kind: input, shape index: {}]
  %s3 = inlined_call_operand.hbm [shape: f32[1,512], index: 3, kind: input, shape index: {}]
  %s4 = inlined_call_operand.hbm [shape: f32[8,128], index: 4, kind: output, shape index: {}]
  %s5 = sld [smem:[#allocation0]]
  $region46: #{tpu_custom_call.1} parent=0
    _
  %s7 = ssub.s32 1, %s5
  %s8 = scalar_select 0, %s7, %s5
  $region1: #{tpu_custom_call.1} parent=0
    #allocation4 [shape = 'u8[16384]{0}', space=vmem, size = 0x4000, scoped, tag = 'input window, operand 0, single buffered']
    #allocation5 [shape = 's32[1]{0}', space=sflag, size = 0x4, scoped, tag = 'scoped memory for tpu_custom_call.1']
    #allocation6 [shape = 's32[1]{0}', space=sflag, size = 0x4, scoped, tag = 'scoped memory for tpu_custom_call.1']
    #allocation7 [shape = 'u8[32768]{0}', space=vmem, size = 0x8000, scoped, tag = 'input window, operand 1, single buffered']
    #allocation8 [shape = 's32[1]{0}', space=sflag, size = 0x4, scoped, tag = 'scoped memory for tpu_custom_call.1']
    #allocation9 [shape = 'u8[131072]{0}', space=vmem, size = 0x20000, scoped, tag = 'input window, operand 2, single buffered']
    #allocation10 [shape = 'u8[2048]{0}', space=vmem, size = 0x800, scoped, tag = 'input window, operand 3, single buffered']
    #allocation11 [shape = 's32[1]{0}', space=sflag, size = 0x4, scoped, tag = 'scoped memory for tpu_custom_call.1']
    #allocation12 [shape = 'u8[4096]{0}', space=vmem, size = 0x1000, scoped, tag = 'output window, operand 0, single buffered']
    %9 = vsyncpa [#allocation5], 0
    %10 = vsyncpa [#allocation8], 0
    %11 = vsyncpa [#allocation11], 0
    %12 = vsyncpa [#allocation6], 0
    // Predicated region
    $region2: #{tpu_custom_call.1} parent=1 // pred_check
      _
    $region3: #{tpu_custom_call.1} parent=1 // pred_check_branch
      %14 = sbr.rel (0) target = $region5
    $region4: #{tpu_custom_call.1} parent=1 // pred_region
      %16 = vsyncadd [#allocation5], 0
      %s17 = sshll.u32 %s0, 4
      %s18 = int_to_ptr.hbm [resolvable:$true] %s17
      %s19 = sshll.u32 [#allocation4], 4
      %s20 = int_to_ptr.vmem [resolvable:$true] %s19
      %25 = dma.hbm_to_vmem [thread:$0]  %s18, 512, %s20, [#allocation5], 64, 64, 4
    $region5: #{tpu_custom_call.1} parent=1 // pred_fallthru
      _
    // Predicated region
    $region6: #{tpu_custom_call.1} parent=1 // pred_check
      _
    $region7: #{tpu_custom_call.1} parent=1 // pred_check_branch
      %27 = sbr.rel (0) target = $region9
    $region8: #{tpu_custom_call.1} parent=1 // pred_region
      %29 = vsyncadd [#allocation8], 0
      %s30 = sshll.u32 %s1, 4
      %s31 = int_to_ptr.hbm [resolvable:$true] %s30
      %s32 = sshll.u32 [#allocation7], 4
      %s33 = int_to_ptr.vmem [resolvable:$true] %s32
      %38 = dma.hbm_to_vmem [thread:$0]  %s31, 1024, %s33, [#allocation8], 256, 256, 16
    $region9: #{tpu_custom_call.1} parent=1 // pred_fallthru
      _
    // Predicated region
    $region10: #{tpu_custom_call.1} parent=1 // pred_check
      _
    $region11: #{tpu_custom_call.1} parent=1 // pred_check_branch
      %40 = sbr.rel (0) target = $region13
    $region12: #{tpu_custom_call.1} parent=1 // pred_region
      %42 = vsyncadd [#allocation8], 0
      %s43 = sshll.u32 %s2, 4
      %s44 = int_to_ptr.hbm [resolvable:$true] %s43
      %s45 = sshll.u32 [#allocation9], 4
      %s46 = int_to_ptr.vmem [resolvable:$true] %s45
      %51 = dma.hbm_to_vmem [thread:$0]  %s44, 4096, %s46, [#allocation8], 256, 256, 16
    $region13: #{tpu_custom_call.1} parent=1 // pred_fallthru
      _
    // Predicated region
    $region14: #{tpu_custom_call.1} parent=1 // pred_check
      _
    $region15: #{tpu_custom_call.1} parent=1 // pred_check_branch
      %53 = sbr.rel (0) target = $region17
    $region16: #{tpu_custom_call.1} parent=1 // pred_region
      %55 = vsyncadd [#allocation11], 0
      %s57 = sshll.u32 %s3, 4
      %s58 = int_to_ptr.hbm [resolvable:$true] %s57
      %s59 = sshll.u32 [#allocation10], 4
      %s60 = int_to_ptr.vmem [resolvable:$true] %s59
      %62 = dma.hbm_to_vmem [thread:$0]  %s58, 64, %s60, [#allocation11]
    $region17: #{tpu_custom_call.1} parent=1 // pred_fallthru
      _
    // Predicated region
    $region18: #{tpu_custom_call.1} parent=1 // pred_check
      _
    $region19: #{tpu_custom_call.1} parent=1 // pred_check_branch
      %64 = sbr.rel (0) target = $region21
    $region20: #{tpu_custom_call.1} parent=1 // pred_region
      %66 = dma.done [#allocation5], 512
    $region21: #{tpu_custom_call.1} parent=1 // pred_fallthru
      _
    // Predicated region
    $region22: #{tpu_custom_call.1} parent=1 // pred_check
      _
    $region23: #{tpu_custom_call.1} parent=1 // pred_check_branch
      %68 = sbr.rel (0) target = $region25
    $region24: #{tpu_custom_call.1} parent=1 // pred_region
      %70 = dma.done [#allocation8], 1024
    $region25: #{tpu_custom_call.1} parent=1 // pred_fallthru
      _
    // Predicated region
    $region26: #{tpu_custom_call.1} parent=1 // pred_check
      _
    $region27: #{tpu_custom_call.1} parent=1 // pred_check_branch
      %72 = sbr.rel (0) target = $region29
    $region28: #{tpu_custom_call.1} parent=1 // pred_region
      %74 = dma.done [#allocation8], 4096
    $region29: #{tpu_custom_call.1} parent=1 // pred_fallthru
      _
    // Predicated region
    $region30: #{tpu_custom_call.1} parent=1 // pred_check
      _
    $region31: #{tpu_custom_call.1} parent=1 // pred_check_branch
      %76 = sbr.rel (0) target = $region33
    $region32: #{tpu_custom_call.1} parent=1 // pred_region
      %78 = dma.done [#allocation11], 64
    $region33: #{tpu_custom_call.1} parent=1 // pred_fallthru
      _
    %p80 = scmp.eq.s32.totalorder 0, 0
    // Predicated region
    $region34: #{tpu_custom_call.1} parent=1 // pred_check
      %p81 = pneg %p80
    $region35: #{tpu_custom_call.1} parent=1 // pred_check_branch
      %83 = sbr.rel (%p81) target = $region37
    $region36: #{tpu_custom_call.1} parent=1 // pred_region
      %84 = vst [vmem:[#allocation12] sm:$0xff] 0.0
      %85 = vst [vmem:[#allocation2] sm:$0xff] 0.0
    $region37: #{tpu_custom_call.1} parent=1 // pred_fallthru
      _
    %v86 = vld [vmem:[#allocation4] sm:$0xf]
    %v87 = vld [vmem:[#allocation4 + $0x4] sm:$0xf]
    %v88 = vld [vmem:[#allocation4 + $0x8] sm:$0xf]
    %v89 = vld [vmem:[#allocation4 + $0xc] sm:$0xf]
    %v90 = vld [vmem:[#allocation4 + $0x10] sm:$0xf]
    %v91 = vld [vmem:[#allocation4 + $0x14] sm:$0xf]
    %v92 = vld [vmem:[#allocation4 + $0x18] sm:$0xf]
    %v93 = vld [vmem:[#allocation4 + $0x1c] sm:$0xf]
    %v94 = vld [vmem:[#allocation7] sm:$0xff]
    %v95 = vld [vmem:[#allocation7 + $0x8] sm:$0xff]
    %v96 = vld [vmem:[#allocation7 + $0x10] sm:$0xff]
    %v97 = vld [vmem:[#allocation7 + $0x18] sm:$0xff]
    %v98 = vld [vmem:[#allocation7 + $0x20] sm:$0xff]
    %v99 = vld [vmem:[#allocation7 + $0x28] sm:$0xff]
    %v100 = vld [vmem:[#allocation7 + $0x30] sm:$0xff]
    %v101 = vld [vmem:[#allocation7 + $0x38] sm:$0xff]
    %v102 = vld [vmem:[#allocation10] sm:$0xf]
    %v104 = vperm.slane %v102, 0
    %v105 = vperm.slane %v102, 1
    %v106 = vperm.slane %v102, 2
    %v107 = vperm.slane %v102, 3
    %v120 = vunpack.c.l.b16 %v86
    %v121 = vunpack.c.l.b16 %v87
    %v122 = vunpack.c.l.b16 %v88
    %v123 = vunpack.c.l.b16 %v89
    %v124 = vunpack.c.l.b16 %v90
    %v125 = vunpack.c.l.b16 %v91
    %v126 = vunpack.c.l.b16 %v92
    %v127 = vunpack.c.l.b16 %v93
    %v128 = vpack.c.b16 %v121, %v120
    %v129 = vpack.c.b16 %v123, %v122
    %v130 = vpack.c.b16 %v125, %v124
    %v131 = vpack.c.b16 %v127, %v126
    %v140 = vunpack.c.l.b16 %v94
    %v141 = vunpack.c.h.b16 %v94
    %v142 = vunpack.c.l.b16 %v95
    %v143 = vunpack.c.h.b16 %v95
    %v144 = vunpack.c.l.b16 %v96
    %v145 = vunpack.c.h.b16 %v96
    %v146 = vunpack.c.l.b16 %v97
    %v147 = vunpack.c.h.b16 %v97
    %v148 = vunpack.c.l.b16 %v98
    %v149 = vunpack.c.h.b16 %v98
    %v150 = vunpack.c.l.b16 %v99
    %v151 = vunpack.c.h.b16 %v99
    %v152 = vunpack.c.l.b16 %v100
    %v153 = vunpack.c.h.b16 %v100
    %v154 = vunpack.c.l.b16 %v101
    %v155 = vunpack.c.h.b16 %v101
    %v156 = vpack.c.b16 %v144, %v140
    %v157 = vpack.c.b16 %v145, %v141
    %v158 = vpack.c.b16 %v146, %v142
    %v159 = vpack.c.b16 %v147, %v143
    %v160 = vpack.c.b16 %v152, %v148
    %v161 = vpack.c.b16 %v153, %v149
    %v162 = vpack.c.b16 %v154, %v150
    %v163 = vpack.c.b16 %v155, %v151
    %vm172 = vcmask 261120
    %v174 = vsel %vm172, %v128, 0
    %v177 = vsel %vm172, %v129, 0
    %v180 = vsel %vm172, %v130, 0
    %v183 = vsel %vm172, %v131, 0
    %185 = vmatpush.bf16.msra.mxu0 0
    %186 = vmatpush.bf16.msra.mxu0 0
    %187 = vmatpush.bf16.msra.mxu0 0
    %188 = vmatpush.bf16.msra.mxu0 0
    %189 = vmatpush.bf16.msra.mxu0 0
    %190 = vmatpush.bf16.msra.mxu0 0
    %191 = vmatpush.bf16.msra.mxu0 %v160
    %192 = vmatpush.bf16.msra.mxu0 %v156
    %193 = vmatmul.bf16.gmra.mxu0 %v174
    %v194 = vpop.f32.mrf.mxu0
    %v195 = vadd.f32 %v104, %v194
    %v196 = vpop.f32.mrf.mxu0
    %v197 = vadd.f32 %v104, %v196
    %198 = vmatmul.bf16.gmra.mxu0 %v177
    %v199 = vpop.f32.mrf.mxu0
    %v200 = vadd.f32 %v104, %v199
    %v201 = vpop.f32.mrf.mxu0
    %v202 = vadd.f32 %v104, %v201
    %203 = vmatmul.bf16.gmra.mxu0 %v180
    %v204 = vpop.f32.mrf.mxu0
    %v205 = vadd.f32 %v104, %v204
    %v206 = vpop.f32.mrf.mxu0
    %v207 = vadd.f32 %v104, %v206
    %208 = vmatmul.bf16.gmra.mxu0 %v183
    %v209 = vpop.f32.mrf.mxu0
    %v210 = vadd.f32 %v104, %v209
    %v211 = vpop.f32.mrf.mxu0
    %v212 = vadd.f32 %v104, %v211
    %213 = vdwg.mxu0
    %214 = vmatpush.bf16.msra.mxu0 0
    %215 = vmatpush.bf16.msra.mxu0 0
    %216 = vmatpush.bf16.msra.mxu0 0
    %217 = vmatpush.bf16.msra.mxu0 0
    %218 = vmatpush.bf16.msra.mxu0 0
    %219 = vmatpush.bf16.msra.mxu0 0
    %220 = vmatpush.bf16.msra.mxu0 %v161
    %221 = vmatpush.bf16.msra.mxu0 %v157
    %222 = vmatmul.bf16.gmra.mxu0 %v174
    %v223 = vpop.f32.mrf.mxu0
    %v224 = vadd.f32 %v105, %v223
    %v225 = vpop.f32.mrf.mxu0
    %v226 = vadd.f32 %v105, %v225
    %227 = vmatmul.bf16.gmra.mxu0 %v177
    %v228 = vpop.f32.mrf.mxu0
    %v229 = vadd.f32 %v105, %v228
    %v230 = vpop.f32.mrf.mxu0
    %v231 = vadd.f32 %v105, %v230
    %232 = vmatmul.bf16.gmra.mxu0 %v180
    %v233 = vpop.f32.mrf.mxu0
    %v234 = vadd.f32 %v105, %v233
    %v235 = vpop.f32.mrf.mxu0
    %v236 = vadd.f32 %v105, %v235
    %237 = vmatmul.bf16.gmra.mxu0 %v183
    %v238 = vpop.f32.mrf.mxu0
    %v239 = vadd.f32 %v105, %v238
    %v240 = vpop.f32.mrf.mxu0
    %v241 = vadd.f32 %v105, %v240
    %242 = vdwg.mxu0
    %243 = vmatpush.bf16.msra.mxu0 0
    %244 = vmatpush.bf16.msra.mxu0 0
    %245 = vmatpush.bf16.msra.mxu0 0
    %246 = vmatpush.bf16.msra.mxu0 0
    %247 = vmatpush.bf16.msra.mxu0 0
    %248 = vmatpush.bf16.msra.mxu0 0
    %249 = vmatpush.bf16.msra.mxu0 %v162
    %250 = vmatpush.bf16.msra.mxu0 %v158
    %251 = vmatmul.bf16.gmra.mxu0 %v174
    %v252 = vpop.f32.mrf.mxu0
    %v253 = vadd.f32 %v106, %v252
    %v254 = vpop.f32.mrf.mxu0
    %v255 = vadd.f32 %v106, %v254
    %256 = vmatmul.bf16.gmra.mxu0 %v177
    %v257 = vpop.f32.mrf.mxu0
    %v258 = vadd.f32 %v106, %v257
    %v259 = vpop.f32.mrf.mxu0
    %v260 = vadd.f32 %v106, %v259
    %261 = vmatmul.bf16.gmra.mxu0 %v180
    %v262 = vpop.f32.mrf.mxu0
    %v263 = vadd.f32 %v106, %v262
    %v264 = vpop.f32.mrf.mxu0
    %v265 = vadd.f32 %v106, %v264
    %266 = vmatmul.bf16.gmra.mxu0 %v183
    %v267 = vpop.f32.mrf.mxu0
    %v268 = vadd.f32 %v106, %v267
    %v269 = vpop.f32.mrf.mxu0
    %v270 = vadd.f32 %v106, %v269
    %271 = vdwg.mxu0
    %272 = vmatpush.bf16.msra.mxu0 0
    %273 = vmatpush.bf16.msra.mxu0 0
    %274 = vmatpush.bf16.msra.mxu0 0
    %275 = vmatpush.bf16.msra.mxu0 0
    %276 = vmatpush.bf16.msra.mxu0 0
    %277 = vmatpush.bf16.msra.mxu0 0
    %278 = vmatpush.bf16.msra.mxu0 %v163
    %279 = vmatpush.bf16.msra.mxu0 %v159
    %280 = vmatmul.bf16.gmra.mxu0 %v174
    %v281 = vpop.f32.mrf.mxu0
    %v282 = vadd.f32 %v107, %v281
    %v283 = vpop.f32.mrf.mxu0
    %v284 = vadd.f32 %v107, %v283
    %285 = vmatmul.bf16.gmra.mxu0 %v177
    %v286 = vpop.f32.mrf.mxu0
    %v287 = vadd.f32 %v107, %v286
    %v288 = vpop.f32.mrf.mxu0
    %v289 = vadd.f32 %v107, %v288
    %290 = vmatmul.bf16.gmra.mxu0 %v180
    %v291 = vpop.f32.mrf.mxu0
    %v292 = vadd.f32 %v107, %v291
    %v293 = vpop.f32.mrf.mxu0
    %v294 = vadd.f32 %v107, %v293
    %295 = vmatmul.bf16.gmra.mxu0 %v183
    %v296 = vpop.f32.mrf.mxu0
    %v297 = vadd.f32 %v107, %v296
    %v298 = vpop.f32.mrf.mxu0
    %v299 = vadd.f32 %v107, %v298
    %300 = vdwg.mxu0
    %301 = vst [vmem:[#allocation3] sm:$0xff] %v195
    %302 = vst [vmem:[#allocation3 + $0x8] sm:$0xff] %v224
    %303 = vst [vmem:[#allocation3 + $0x10] sm:$0xff] %v253
    %304 = vst [vmem:[#allocation3 + $0x18] sm:$0xff] %v282
    %305 = vst [vmem:[#allocation3 + $0x20] sm:$0xff] %v197
    %306 = vst [vmem:[#allocation3 + $0x28] sm:$0xff] %v226
    %307 = vst [vmem:[#allocation3 + $0x30] sm:$0xff] %v255
    %308 = vst [vmem:[#allocation3 + $0x38] sm:$0xff] %v284
    %309 = vst [vmem:[#allocation3 + $0x40] sm:$0xff] %v200
    %310 = vst [vmem:[#allocation3 + $0x48] sm:$0xff] %v229
    %311 = vst [vmem:[#allocation3 + $0x50] sm:$0xff] %v258
    %312 = vst [vmem:[#allocation3 + $0x58] sm:$0xff] %v287
    %313 = vst [vmem:[#allocation3 + $0x60] sm:$0xff] %v202
    %314 = vst [vmem:[#allocation3 + $0x68] sm:$0xff] %v231
    %315 = vst [vmem:[#allocation3 + $0x70] sm:$0xff] %v260
    %316 = vst [vmem:[#allocation3 + $0x78] sm:$0xff] %v289
    %317 = vst [vmem:[#allocation3 + $0x80] sm:$0xff] %v205
    %318 = vst [vmem:[#allocation3 + $0x88] sm:$0xff] %v234
    %319 = vst [vmem:[#allocation3 + $0x90] sm:$0xff] %v263
    %320 = vst [vmem:[#allocation3 + $0x98] sm:$0xff] %v292
    %321 = vst [vmem:[#allocation3 + $0xa0] sm:$0xff] %v207
    %322 = vst [vmem:[#allocation3 + $0xa8] sm:$0xff] %v236
    %323 = vst [vmem:[#allocation3 + $0xb0] sm:$0xff] %v265
    %324 = vst [vmem:[#allocation3 + $0xb8] sm:$0xff] %v294
    %325 = vst [vmem:[#allocation3 + $0xc0] sm:$0xff] %v210
    %326 = vst [vmem:[#allocation3 + $0xc8] sm:$0xff] %v239
    %327 = vst [vmem:[#allocation3 + $0xd0] sm:$0xff] %v268
    %328 = vst [vmem:[#allocation3 + $0xd8] sm:$0xff] %v297
    %329 = vst [vmem:[#allocation3 + $0xe0] sm:$0xff] %v212
    %330 = vst [vmem:[#allocation3 + $0xe8] sm:$0xff] %v241
    %331 = vst [vmem:[#allocation3 + $0xf0] sm:$0xff] %v270
    %332 = vst [vmem:[#allocation3 + $0xf8] sm:$0xff] %v299
    %v333 = vld [vmem:[#allocation3] sm:$0xff]
    %v334 = vld [vmem:[#allocation3 + $0x8] sm:$0xff]
    %v335 = vld [vmem:[#allocation3 + $0x10] sm:$0xff]
    %v336 = vld [vmem:[#allocation3 + $0x18] sm:$0xff]
    %v337 = vld [vmem:[#allocation12] sm:$0xff]
    %v338 = vpack.c.bf16 %v337, %v337
    %v339 = vld [vmem:[#allocation9] sm:$0xff]
    %v340 = vld [vmem:[#allocation9 + $0x8] sm:$0xff]
    %v341 = vld [vmem:[#allocation9 + $0x10] sm:$0xff]
    %v342 = vld [vmem:[#allocation9 + $0x18] sm:$0xff]
    %v343 = vld [vmem:[#allocation9 + $0x20] sm:$0xff]
    %v344 = vld [vmem:[#allocation9 + $0x28] sm:$0xff]
    %v345 = vld [vmem:[#allocation9 + $0x30] sm:$0xff]
    %v346 = vld [vmem:[#allocation9 + $0x38] sm:$0xff]
    %v347 = vld [vmem:[#allocation9 + $0x40] sm:$0xff]
    %v348 = vld [vmem:[#allocation9 + $0x48] sm:$0xff]
    %v349 = vld [vmem:[#allocation9 + $0x50] sm:$0xff]
    %v350 = vld [vmem:[#allocation9 + $0x58] sm:$0xff]
    %v351 = vld [vmem:[#allocation9 + $0x60] sm:$0xff]
    %v352 = vld [vmem:[#allocation9 + $0x68] sm:$0xff]
    %v353 = vld [vmem:[#allocation9 + $0x70] sm:$0xff]
    %v354 = vld [vmem:[#allocation9 + $0x78] sm:$0xff]
    %v355 = vld [vmem:[#allocation9 + $0x80] sm:$0xff]
    %v356 = vld [vmem:[#allocation9 + $0x88] sm:$0xff]
    %v357 = vld [vmem:[#allocation9 + $0x90] sm:$0xff]
    %v358 = vld [vmem:[#allocation9 + $0x98] sm:$0xff]
    %v359 = vld [vmem:[#allocation9 + $0xa0] sm:$0xff]
    %v360 = vld [vmem:[#allocation9 + $0xa8] sm:$0xff]
    %v361 = vld [vmem:[#allocation9 + $0xb0] sm:$0xff]
    %v362 = vld [vmem:[#allocation9 + $0xb8] sm:$0xff]
    %v363 = vld [vmem:[#allocation9 + $0xc0] sm:$0xff]
    %v364 = vld [vmem:[#allocation9 + $0xc8] sm:$0xff]
    %v365 = vld [vmem:[#allocation9 + $0xd0] sm:$0xff]
    %v366 = vld [vmem:[#allocation9 + $0xd8] sm:$0xff]
    %v367 = vld [vmem:[#allocation9 + $0xe0] sm:$0xff]
    %v368 = vld [vmem:[#allocation9 + $0xe8] sm:$0xff]
    %v369 = vld [vmem:[#allocation9 + $0xf0] sm:$0xff]
    %v370 = vld [vmem:[#allocation9 + $0xf8] sm:$0xff]
    %v403 = vunpack.c.l.b16 %v339
    %v404 = vunpack.c.h.b16 %v339
    %v405 = vunpack.c.l.b16 %v340
    %v406 = vunpack.c.h.b16 %v340
    %v407 = vunpack.c.l.b16 %v341
    %v408 = vunpack.c.h.b16 %v341
    %v409 = vunpack.c.l.b16 %v342
    %v410 = vunpack.c.h.b16 %v342
    %v411 = vunpack.c.l.b16 %v343
    %v412 = vunpack.c.h.b16 %v343
    %v413 = vunpack.c.l.b16 %v344
    %v414 = vunpack.c.h.b16 %v344
    %v415 = vunpack.c.l.b16 %v345
    %v416 = vunpack.c.h.b16 %v345
    %v417 = vunpack.c.l.b16 %v346
    %v418 = vunpack.c.h.b16 %v346
    %v419 = vunpack.c.l.b16 %v347
    %v420 = vunpack.c.h.b16 %v347
    %v421 = vunpack.c.l.b16 %v348
    %v422 = vunpack.c.h.b16 %v348
    %v423 = vunpack.c.l.b16 %v349
    %v424 = vunpack.c.h.b16 %v349
    %v425 = vunpack.c.l.b16 %v350
    %v426 = vunpack.c.h.b16 %v350
    %v427 = vunpack.c.l.b16 %v351
    %v428 = vunpack.c.h.b16 %v351
    %v429 = vunpack.c.l.b16 %v352
    %v430 = vunpack.c.h.b16 %v352
    %v431 = vunpack.c.l.b16 %v353
    %v432 = vunpack.c.h.b16 %v353
    %v433 = vunpack.c.l.b16 %v354
    %v434 = vunpack.c.h.b16 %v354
    %v435 = vunpack.c.l.b16 %v355
    %v436 = vunpack.c.h.b16 %v355
    %v437 = vunpack.c.l.b16 %v356
    %v438 = vunpack.c.h.b16 %v356
    %v439 = vunpack.c.l.b16 %v357
    %v440 = vunpack.c.h.b16 %v357
    %v441 = vunpack.c.l.b16 %v358
    %v442 = vunpack.c.h.b16 %v358
    %v443 = vunpack.c.l.b16 %v359
    %v444 = vunpack.c.h.b16 %v359
    %v445 = vunpack.c.l.b16 %v360
    %v446 = vunpack.c.h.b16 %v360
    %v447 = vunpack.c.l.b16 %v361
    %v448 = vunpack.c.h.b16 %v361
    %v449 = vunpack.c.l.b16 %v362
    %v450 = vunpack.c.h.b16 %v362
    %v451 = vunpack.c.l.b16 %v363
    %v452 = vunpack.c.h.b16 %v363
    %v453 = vunpack.c.l.b16 %v364
    %v454 = vunpack.c.h.b16 %v364
    %v455 = vunpack.c.l.b16 %v365
    %v456 = vunpack.c.h.b16 %v365
    %v457 = vunpack.c.l.b16 %v366
    %v458 = vunpack.c.h.b16 %v366
    %v459 = vunpack.c.l.b16 %v367
    %v460 = vunpack.c.h.b16 %v367
    %v461 = vunpack.c.l.b16 %v368
    %v462 = vunpack.c.h.b16 %v368
    %v463 = vunpack.c.l.b16 %v369
    %v464 = vunpack.c.h.b16 %v369
    %v465 = vunpack.c.l.b16 %v370
    %v466 = vunpack.c.h.b16 %v370
    %v467 = vpack.c.b16 %v407, %v403
    %v468 = vpack.c.b16 %v408, %v404
    %v469 = vpack.c.b16 %v409, %v405
    %v470 = vpack.c.b16 %v410, %v406
    %v471 = vpack.c.b16 %v415, %v411
    %v472 = vpack.c.b16 %v416, %v412
    %v473 = vpack.c.b16 %v417, %v413
    %v474 = vpack.c.b16 %v418, %v414
    %v475 = vpack.c.b16 %v423, %v419
    %v476 = vpack.c.b16 %v424, %v420
    %v477 = vpack.c.b16 %v425, %v421
    %v478 = vpack.c.b16 %v426, %v422
    %v479 = vpack.c.b16 %v431, %v427
    %v480 = vpack.c.b16 %v432, %v428
    %v481 = vpack.c.b16 %v433, %v429
    %v482 = vpack.c.b16 %v434, %v430
    %v483 = vpack.c.b16 %v439, %v435
    %v484 = vpack.c.b16 %v440, %v436
    %v485 = vpack.c.b16 %v441, %v437
    %v486 = vpack.c.b16 %v442, %v438
    %v487 = vpack.c.b16 %v447, %v443
    %v488 = vpack.c.b16 %v448, %v444
    %v489 = vpack.c.b16 %v449, %v445
    %v490 = vpack.c.b16 %v450, %v446
    %v491 = vpack.c.b16 %v455, %v451
    %v492 = vpack.c.b16 %v456, %v452
    %v493 = vpack.c.b16 %v457, %v453
    %v494 = vpack.c.b16 %v458, %v454
    %v495 = vpack.c.b16 %v463, %v459
    %v496 = vpack.c.b16 %v464, %v460
    %v497 = vpack.c.b16 %v465, %v461
    %v498 = vpack.c.b16 %v466, %v462
    %531 = vmatpush.bf16.msra.mxu0 %v495
    %532 = vmatpush.bf16.msra.mxu0 %v491
    %533 = vmatpush.bf16.msra.mxu0 %v487
    %534 = vmatpush.bf16.msra.mxu0 %v483
    %535 = vmatpush.bf16.msra.mxu0 %v479
    %536 = vmatpush.bf16.msra.mxu0 %v475
    %537 = vmatpush.bf16.msra.mxu0 %v471
    %538 = vmatpush.bf16.msra.mxu0 %v467
    %539 = vmatmul.bf16.gmra.mxu0 %v338
    %v540 = vpop.f32.mrf.mxu0
    %v541 = vadd.f32 0.0, %v540
    %v542 = vpop.f32.mrf.mxu0
    %543 = vdwg.mxu0
    %544 = vmatpush.bf16.msra.mxu0 %v496
    %545 = vmatpush.bf16.msra.mxu0 %v492
    %546 = vmatpush.bf16.msra.mxu0 %v488
    %547 = vmatpush.bf16.msra.mxu0 %v484
    %548 = vmatpush.bf16.msra.mxu0 %v480
    %549 = vmatpush.bf16.msra.mxu0 %v476
    %550 = vmatpush.bf16.msra.mxu0 %v472
    %551 = vmatpush.bf16.msra.mxu0 %v468
    %552 = vmatmul.bf16.gmra.mxu0 %v338
    %v553 = vpop.f32.mrf.mxu0
    %v554 = vadd.f32 0.0, %v553
    %v555 = vpop.f32.mrf.mxu0
    %556 = vdwg.mxu0
    %557 = vmatpush.bf16.msra.mxu0 %v497
    %558 = vmatpush.bf16.msra.mxu0 %v493
    %559 = vmatpush.bf16.msra.mxu0 %v489
    %560 = vmatpush.bf16.msra.mxu0 %v485
    %561 = vmatpush.bf16.msra.mxu0 %v481
    %562 = vmatpush.bf16.msra.mxu0 %v477
    %563 = vmatpush.bf16.msra.mxu0 %v473
    %564 = vmatpush.bf16.msra.mxu0 %v469
    %565 = vmatmul.bf16.gmra.mxu0 %v338
    %v566 = vpop.f32.mrf.mxu0
    %v567 = vadd.f32 0.0, %v566
    %v568 = vpop.f32.mrf.mxu0
    %569 = vdwg.mxu0
    %570 = vmatpush.bf16.msra.mxu0 %v498
    %571 = vmatpush.bf16.msra.mxu0 %v494
    %572 = vmatpush.bf16.msra.mxu0 %v490
    %573 = vmatpush.bf16.msra.mxu0 %v486
    %574 = vmatpush.bf16.msra.mxu0 %v482
    %575 = vmatpush.bf16.msra.mxu0 %v478
    %576 = vmatpush.bf16.msra.mxu0 %v474
    %577 = vmatpush.bf16.msra.mxu0 %v470
    %578 = vmatmul.bf16.gmra.mxu0 %v338
    %v579 = vpop.f32.mrf.mxu0
    %v580 = vadd.f32 0.0, %v579
    %v581 = vpop.f32.mrf.mxu0
    %582 = vdwg.mxu0
    %v583 = vadd.f32 %v333, %v541
    %v584 = vadd.f32 %v334, %v554
    %v585 = vadd.f32 %v335, %v567
    %v586 = vadd.f32 %v336, %v580
    %v587 = vxor.u32 %v583, 2147483648
    %v588 = vxor.u32 %v584, 2147483648
    %v589 = vxor.u32 %v585, 2147483648
    %v590 = vmul.f32 %v587, 1.442695
    %v591 = vpow.pop %v590
    %v592 = vmul.f32 %v588, 1.442695
    %v593 = vpow.pop %v592
    %v594 = vmul.f32 %v589, 1.442695
    %v595 = vpow.pop %v594
    %v596 = vadd.f32 %v591, 1.0
    %v597 = vadd.f32 %v593, 1.0
    %v598 = vadd.f32 %v595, 1.0
    %v599 = vrcp.pop %v596
    %v600 = vmul.f32 %v596, %v599
    %v601 = vsub.f32 1.0, %v600
    %v602 = vmul.f32 %v599, %v601
    %v603 = vadd.f32 %v599, %v602
    %vm604 = vweird.f32 %v596
    %vm605 = vweird.f32 %v599
    %vm606 = vmor %vm604, %vm605
    %v607 = vsel %vm606, %v599, %v603
    %v608 = vand.u32 2147483647, %v596
    %vm609 = vcmp.eq.f32.partialorder %v608, 8.507059e+37
    %v610 = vand.u32 %v596, 2147483648
    %v611 = vor.u32 1.1754944e-38, %v610
    %v612 = vsel %vm609, %v611, %v607
    %v613 = vmul.f32 1.0, %v612
    %v614 = vrcp.pop %v597
    %v615 = vmul.f32 %v597, %v614
    %v616 = vsub.f32 1.0, %v615
    %v617 = vmul.f32 %v614, %v616
    %v618 = vadd.f32 %v614, %v617
    %vm619 = vweird.f32 %v597
    %vm620 = vweird.f32 %v614
    %vm621 = vmor %vm619, %vm620
    %v622 = vsel %vm621, %v614, %v618
    %v623 = vand.u32 2147483647, %v597
    %vm624 = vcmp.eq.f32.partialorder %v623, 8.507059e+37
    %v625 = vand.u32 %v597, 2147483648
    %v626 = vor.u32 1.1754944e-38, %v625
    %v627 = vsel %vm624, %v626, %v622
    %v628 = vmul.f32 1.0, %v627
    %v629 = vrcp.pop %v598
    %v630 = vmul.f32 %v598, %v629
    %v631 = vsub.f32 1.0, %v630
    %v632 = vmul.f32 %v629, %v631
    %v633 = vadd.f32 %v629, %v632
    %vm634 = vweird.f32 %v598
    %vm635 = vweird.f32 %v629
    %vm636 = vmor %vm634, %vm635
    %v637 = vsel %vm636, %v629, %v633
    %v638 = vand.u32 2147483647, %v598
    %vm639 = vcmp.eq.f32.partialorder %v638, 8.507059e+37
    %v640 = vand.u32 %v598, 2147483648
    %v641 = vor.u32 1.1754944e-38, %v640
    %v642 = vsel %vm639, %v641, %v637
    %v643 = vmul.f32 1.0, %v642
    %v644 = vtanh.pop %v586
    %v645 = vld [vmem:[#allocation2] sm:$0xff]
    %v646 = vmul.f32 %v628, %v645
    %v647 = vmul.f32 %v613, %v644
    %v648 = vadd.f32 %v646, %v647
    %v649 = vtanh.pop %v648
    %v650 = vmul.f32 %v643, %v649
    %651 = vst [vmem:[#allocation2] sm:$0xff] %v648
    %652 = vst [vmem:[#allocation12] sm:$0xff] %v650
    %s653 = scalar_lea.vmem [#allocation3], 32
    %v654 = vld [vmem:[%s653] sm:$0xff]
    %v655 = vld [vmem:[%s653 + $0x8] sm:$0xff]
    %v656 = vld [vmem:[%s653 + $0x10] sm:$0xff]
    %v657 = vld [vmem:[%s653 + $0x18] sm:$0xff]
    %v658 = vld [vmem:[#allocation12] sm:$0xff]
    %v659 = vpack.c.bf16 %v658, %v658
    %v660 = vld [vmem:[#allocation9] sm:$0xff]
    %v661 = vld [vmem:[#allocation9 + $0x8] sm:$0xff]
    %v662 = vld [vmem:[#allocation9 + $0x10] sm:$0xff]
    %v663 = vld [vmem:[#allocation9 + $0x18] sm:$0xff]
    %v664 = vld [vmem:[#allocation9 + $0x20] sm:$0xff]
    %v665 = vld [vmem:[#allocation9 + $0x28] sm:$0xff]
    %v666 = vld [vmem:[#allocation9 + $0x30] sm:$0xff]
    %v667 = vld [vmem:[#allocation9 + $0x38] sm:$0xff]
    %v668 = vld [vmem:[#allocation9 + $0x40] sm:$0xff]
    %v669 = vld [vmem:[#allocation9 + $0x48] sm:$0xff]
    %v670 = vld [vmem:[#allocation9 + $0x50] sm:$0xff]
    %v671 = vld [vmem:[#allocation9 + $0x58] sm:$0xff]
    %v672 = vld [vmem:[#allocation9 + $0x60] sm:$0xff]
    %v673 = vld [vmem:[#allocation9 + $0x68] sm:$0xff]
    %v674 = vld [vmem:[#allocation9 + $0x70] sm:$0xff]
    %v675 = vld [vmem:[#allocation9 + $0x78] sm:$0xff]
    %v676 = vld [vmem:[#allocation9 + $0x80] sm:$0xff]
    %v677 = vld [vmem:[#allocation9 + $0x88] sm:$0xff]
    %v678 = vld [vmem:[#allocation9 + $0x90] sm:$0xff]
    %v679 = vld [vmem:[#allocation9 + $0x98] sm:$0xff]
    %v680 = vld [vmem:[#allocation9 + $0xa0] sm:$0xff]
    %v681 = vld [vmem:[#allocation9 + $0xa8] sm:$0xff]
    %v682 = vld [vmem:[#allocation9 + $0xb0] sm:$0xff]
    %v683 = vld [vmem:[#allocation9 + $0xb8] sm:$0xff]
    %v684 = vld [vmem:[#allocation9 + $0xc0] sm:$0xff]
    %v685 = vld [vmem:[#allocation9 + $0xc8] sm:$0xff]
    %v686 = vld [vmem:[#allocation9 + $0xd0] sm:$0xff]
    %v687 = vld [vmem:[#allocation9 + $0xd8] sm:$0xff]
    %v688 = vld [vmem:[#allocation9 + $0xe0] sm:$0xff]
    %v689 = vld [vmem:[#allocation9 + $0xe8] sm:$0xff]
    %v690 = vld [vmem:[#allocation9 + $0xf0] sm:$0xff]
    %v691 = vld [vmem:[#allocation9 + $0xf8] sm:$0xff]
    %v724 = vunpack.c.l.b16 %v660
    %v725 = vunpack.c.h.b16 %v660
    %v726 = vunpack.c.l.b16 %v661
    %v727 = vunpack.c.h.b16 %v661
    %v728 = vunpack.c.l.b16 %v662
    %v729 = vunpack.c.h.b16 %v662
    %v730 = vunpack.c.l.b16 %v663
    %v731 = vunpack.c.h.b16 %v663
    %v732 = vunpack.c.l.b16 %v664
    %v733 = vunpack.c.h.b16 %v664
    %v734 = vunpack.c.l.b16 %v665
    %v735 = vunpack.c.h.b16 %v665
    %v736 = vunpack.c.l.b16 %v666
    %v737 = vunpack.c.h.b16 %v666
    %v738 = vunpack.c.l.b16 %v667
    %v739 = vunpack.c.h.b16 %v667
    %v740 = vunpack.c.l.b16 %v668
    %v741 = vunpack.c.h.b16 %v668
    %v742 = vunpack.c.l.b16 %v669
    %v743 = vunpack.c.h.b16 %v669
    %v744 = vunpack.c.l.b16 %v670
    %v745 = vunpack.c.h.b16 %v670
    %v746 = vunpack.c.l.b16 %v671
    %v747 = vunpack.c.h.b16 %v671
    %v748 = vunpack.c.l.b16 %v672
    %v749 = vunpack.c.h.b16 %v672
    %v750 = vunpack.c.l.b16 %v673
    %v751 = vunpack.c.h.b16 %v673
    %v752 = vunpack.c.l.b16 %v674
    %v753 = vunpack.c.h.b16 %v674
    %v754 = vunpack.c.l.b16 %v675
    %v755 = vunpack.c.h.b16 %v675
    %v756 = vunpack.c.l.b16 %v676
    %v757 = vunpack.c.h.b16 %v676
    %v758 = vunpack.c.l.b16 %v677
    %v759 = vunpack.c.h.b16 %v677
    %v760 = vunpack.c.l.b16 %v678
    %v761 = vunpack.c.h.b16 %v678
    %v762 = vunpack.c.l.b16 %v679
    %v763 = vunpack.c.h.b16 %v679
    %v764 = vunpack.c.l.b16 %v680
    %v765 = vunpack.c.h.b16 %v680
    %v766 = vunpack.c.l.b16 %v681
    %v767 = vunpack.c.h.b16 %v681
    %v768 = vunpack.c.l.b16 %v682
    %v769 = vunpack.c.h.b16 %v682
    %v770 = vunpack.c.l.b16 %v683
    %v771 = vunpack.c.h.b16 %v683
    %v772 = vunpack.c.l.b16 %v684
    %v773 = vunpack.c.h.b16 %v684
    %v774 = vunpack.c.l.b16 %v685
    %v775 = vunpack.c.h.b16 %v685
    %v776 = vunpack.c.l.b16 %v686
    %v777 = vunpack.c.h.b16 %v686
    %v778 = vunpack.c.l.b16 %v687
    %v779 = vunpack.c.h.b16 %v687
    %v780 = vunpack.c.l.b16 %v688
    %v781 = vunpack.c.h.b16 %v688
    %v782 = vunpack.c.l.b16 %v689
    %v783 = vunpack.c.h.b16 %v689
    %v784 = vunpack.c.l.b16 %v690
    %v785 = vunpack.c.h.b16 %v690
    %v786 = vunpack.c.l.b16 %v691
    %v787 = vunpack.c.h.b16 %v691
    %v788 = vpack.c.b16 %v728, %v724
    %v789 = vpack.c.b16 %v729, %v725
    %v790 = vpack.c.b16 %v730, %v726
    %v791 = vpack.c.b16 %v731, %v727
    %v792 = vpack.c.b16 %v736, %v732
    %v793 = vpack.c.b16 %v737, %v733
    %v794 = vpack.c.b16 %v738, %v734
    %v795 = vpack.c.b16 %v739, %v735
    %v796 = vpack.c.b16 %v744, %v740
    %v797 = vpack.c.b16 %v745, %v741
    %v798 = vpack.c.b16 %v746, %v742
    %v799 = vpack.c.b16 %v747, %v743
    %v800 = vpack.c.b16 %v752, %v748
    %v801 = vpack.c.b16 %v753, %v749
    %v802 = vpack.c.b16 %v754, %v750
    %v803 = vpack.c.b16 %v755, %v751
    %v804 = vpack.c.b16 %v760, %v756
    %v805 = vpack.c.b16 %v761, %v757
    %v806 = vpack.c.b16 %v762, %v758
    %v807 = vpack.c.b16 %v763, %v759
    %v808 = vpack.c.b16 %v768, %v764
    %v809 = vpack.c.b16 %v769, %v765
    %v810 = vpack.c.b16 %v770, %v766
    %v811 = vpack.c.b16 %v771, %v767
    %v812 = vpack.c.b16 %v776, %v772
    %v813 = vpack.c.b16 %v777, %v773
    %v814 = vpack.c.b16 %v778, %v774
    %v815 = vpack.c.b16 %v779, %v775
    %v816 = vpack.c.b16 %v784, %v780
    %v817 = vpack.c.b16 %v785, %v781
    %v818 = vpack.c.b16 %v786, %v782
    %v819 = vpack.c.b16 %v787, %v783
    %852 = vmatpush.bf16.msra.mxu0 %v816
    %853 = vmatpush.bf16.msra.mxu0 %v812
    %854 = vmatpush.bf16.msra.mxu0 %v808
    %855 = vmatpush.bf16.msra.mxu0 %v804
    %856 = vmatpush.bf16.msra.mxu0 %v800
    %857 = vmatpush.bf16.msra.mxu0 %v796
    %858 = vmatpush.bf16.msra.mxu0 %v792
    %859 = vmatpush.bf16.msra.mxu0 %v788
    %860 = vmatmul.bf16.gmra.mxu0 %v659
    %v861 = vpop.f32.mrf.mxu0
    %v862 = vadd.f32 0.0, %v861
    %v863 = vpop.f32.mrf.mxu0
    %864 = vdwg.mxu0
    %865 = vmatpush.bf16.msra.mxu0 %v817
    %866 = vmatpush.bf16.msra.mxu0 %v813
    %867 = vmatpush.bf16.msra.mxu0 %v809
    %868 = vmatpush.bf16.msra.mxu0 %v805
    %869 = vmatpush.bf16.msra.mxu0 %v801
    %870 = vmatpush.bf16.msra.mxu0 %v797
    %871 = vmatpush.bf16.msra.mxu0 %v793
    %872 = vmatpush.bf16.msra.mxu0 %v789
    %873 = vmatmul.bf16.gmra.mxu0 %v659
    %v874 = vpop.f32.mrf.mxu0
    %v875 = vadd.f32 0.0, %v874
    %v876 = vpop.f32.mrf.mxu0
    %877 = vdwg.mxu0
    %878 = vmatpush.bf16.msra.mxu0 %v818
    %879 = vmatpush.bf16.msra.mxu0 %v814
    %880 = vmatpush.bf16.msra.mxu0 %v810
    %881 = vmatpush.bf16.msra.mxu0 %v806
    %882 = vmatpush.bf16.msra.mxu0 %v802
    %883 = vmatpush.bf16.msra.mxu0 %v798
    %884 = vmatpush.bf16.msra.mxu0 %v794
    %885 = vmatpush.bf16.msra.mxu0 %v790
    %886 = vmatmul.bf16.gmra.mxu0 %v659
    %v887 = vpop.f32.mrf.mxu0
    %v888 = vadd.f32 0.0, %v887
    %v889 = vpop.f32.mrf.mxu0
    %890 = vdwg.mxu0
    %891 = vmatpush.bf16.msra.mxu0 %v819
    %892 = vmatpush.bf16.msra.mxu0 %v815
    %893 = vmatpush.bf16.msra.mxu0 %v811
    %894 = vmatpush.bf16.msra.mxu0 %v807
    %895 = vmatpush.bf16.msra.mxu0 %v803
    %896 = vmatpush.bf16.msra.mxu0 %v799
    %897 = vmatpush.bf16.msra.mxu0 %v795
    %898 = vmatpush.bf16.msra.mxu0 %v791
    %899 = vmatmul.bf16.gmra.mxu0 %v659
    %v900 = vpop.f32.mrf.mxu0
    %v901 = vadd.f32 0.0, %v900
    %v902 = vpop.f32.mrf.mxu0
    %903 = vdwg.mxu0
    %v904 = vadd.f32 %v654, %v862
    %v905 = vadd.f32 %v655, %v875
    %v906 = vadd.f32 %v656, %v888
    %v907 = vadd.f32 %v657, %v901
    %v908 = vxor.u32 %v904, 2147483648
    %v909 = vxor.u32 %v905, 2147483648
    %v910 = vxor.u32 %v906, 2147483648
    %v911 = vmul.f32 %v908, 1.442695
    %v912 = vpow.pop %v911
    %v913 = vmul.f32 %v909, 1.442695
    %v914 = vpow.pop %v913
    %v915 = vmul.f32 %v910, 1.442695
    %v916 = vpow.pop %v915
    %v917 = vadd.f32 %v912, 1.0
    %v918 = vadd.f32 %v914, 1.0
    %v919 = vadd.f32 %v916, 1.0
    %v920 = vrcp.pop %v917
    %v921 = vmul.f32 %v917, %v920
    %v922 = vsub.f32 1.0, %v921
    %v923 = vmul.f32 %v920, %v922
    %v924 = vadd.f32 %v920, %v923
    %vm925 = vweird.f32 %v917
    %vm926 = vweird.f32 %v920
    %vm927 = vmor %vm925, %vm926
    %v928 = vsel %vm927, %v920, %v924
    %v929 = vand.u32 2147483647, %v917
    %vm930 = vcmp.eq.f32.partialorder %v929, 8.507059e+37
    %v931 = vand.u32 %v917, 2147483648
    %v932 = vor.u32 1.1754944e-38, %v931
    %v933 = vsel %vm930, %v932, %v928
    %v934 = vmul.f32 1.0, %v933
    %v935 = vrcp.pop %v918
    %v936 = vmul.f32 %v918, %v935
    %v937 = vsub.f32 1.0, %v936
    %v938 = vmul.f32 %v935, %v937
    %v939 = vadd.f32 %v935, %v938
    %vm940 = vweird.f32 %v918
    %vm941 = vweird.f32 %v935
    %vm942 = vmor %vm940, %vm941
    %v943 = vsel %vm942, %v935, %v939
    %v944 = vand.u32 2147483647, %v918
    %vm945 = vcmp.eq.f32.partialorder %v944, 8.507059e+37
    %v946 = vand.u32 %v918, 2147483648
    %v947 = vor.u32 1.1754944e-38, %v946
    %v948 = vsel %vm945, %v947, %v943
    %v949 = vmul.f32 1.0, %v948
    %v950 = vrcp.pop %v919
    %v951 = vmul.f32 %v919, %v950
    %v952 = vsub.f32 1.0, %v951
    %v953 = vmul.f32 %v950, %v952
    %v954 = vadd.f32 %v950, %v953
    %vm955 = vweird.f32 %v919
    %vm956 = vweird.f32 %v950
    %vm957 = vmor %vm955, %vm956
    %v958 = vsel %vm957, %v950, %v954
    %v959 = vand.u32 2147483647, %v919
    %vm960 = vcmp.eq.f32.partialorder %v959, 8.507059e+37
    %v961 = vand.u32 %v919, 2147483648
    %v962 = vor.u32 1.1754944e-38, %v961
    %v963 = vsel %vm960, %v962, %v958
    %v964 = vmul.f32 1.0, %v963
    %v965 = vtanh.pop %v907
    %v966 = vld [vmem:[#allocation2] sm:$0xff]
    %v967 = vmul.f32 %v949, %v966
    %v968 = vmul.f32 %v934, %v965
    %v969 = vadd.f32 %v967, %v968
    %v970 = vtanh.pop %v969
    %v971 = vmul.f32 %v964, %v970
    %972 = vst [vmem:[#allocation2] sm:$0xff] %v969
    %973 = vst [vmem:[#allocation12] sm:$0xff] %v971
    %s974 = scalar_lea.vmem [#allocation3], 64
    %v975 = vld [vmem:[%s974] sm:$0xff]
    %v976 = vld [vmem:[%s974 + $0x8] sm:$0xff]
    %v977 = vld [vmem:[%s974 + $0x10] sm:$0xff]
    %v978 = vld [vmem:[%s974 + $0x18] sm:$0xff]
    %v979 = vld [vmem:[#allocation12] sm:$0xff]
    %v980 = vpack.c.bf16 %v979, %v979
    %v981 = vld [vmem:[#allocation9] sm:$0xff]
    %v982 = vld [vmem:[#allocation9 + $0x8] sm:$0xff]
    %v983 = vld [vmem:[#allocation9 + $0x10] sm:$0xff]
    %v984 = vld [vmem:[#allocation9 + $0x18] sm:$0xff]
    %v985 = vld [vmem:[#allocation9 + $0x20] sm:$0xff]
    %v986 = vld [vmem:[#allocation9 + $0x28] sm:$0xff]
    %v987 = vld [vmem:[#allocation9 + $0x30] sm:$0xff]
    %v988 = vld [vmem:[#allocation9 + $0x38] sm:$0xff]
    %v989 = vld [vmem:[#allocation9 + $0x40] sm:$0xff]
    %v990 = vld [vmem:[#allocation9 + $0x48] sm:$0xff]
    %v991 = vld [vmem:[#allocation9 + $0x50] sm:$0xff]
    %v992 = vld [vmem:[#allocation9 + $0x58] sm:$0xff]
    %v993 = vld [vmem:[#allocation9 + $0x60] sm:$0xff]
    %v994 = vld [vmem:[#allocation9 + $0x68] sm:$0xff]
    %v995 = vld [vmem:[#allocation9 + $0x70] sm:$0xff]
    %v996 = vld [vmem:[#allocation9 + $0x78] sm:$0xff]
    %v997 = vld [vmem:[#allocation9 + $0x80] sm:$0xff]
    %v998 = vld [vmem:[#allocation9 + $0x88] sm:$0xff]
    %v999 = vld [vmem:[#allocation9 + $0x90] sm:$0xff]
    %v1000 = vld [vmem:[#allocation9 + $0x98] sm:$0xff]
    %v1001 = vld [vmem:[#allocation9 + $0xa0] sm:$0xff]
    %v1002 = vld [vmem:[#allocation9 + $0xa8] sm:$0xff]
    %v1003 = vld [vmem:[#allocation9 + $0xb0] sm:$0xff]
    %v1004 = vld [vmem:[#allocation9 + $0xb8] sm:$0xff]
    %v1005 = vld [vmem:[#allocation9 + $0xc0] sm:$0xff]
    %v1006 = vld [vmem:[#allocation9 + $0xc8] sm:$0xff]
    %v1007 = vld [vmem:[#allocation9 + $0xd0] sm:$0xff]
    %v1008 = vld [vmem:[#allocation9 + $0xd8] sm:$0xff]
    %v1009 = vld [vmem:[#allocation9 + $0xe0] sm:$0xff]
    %v1010 = vld [vmem:[#allocation9 + $0xe8] sm:$0xff]
    %v1011 = vld [vmem:[#allocation9 + $0xf0] sm:$0xff]
    %v1012 = vld [vmem:[#allocation9 + $0xf8] sm:$0xff]
    %v1045 = vunpack.c.l.b16 %v981
    %v1046 = vunpack.c.h.b16 %v981
    %v1047 = vunpack.c.l.b16 %v982
    %v1048 = vunpack.c.h.b16 %v982
    %v1049 = vunpack.c.l.b16 %v983
    %v1050 = vunpack.c.h.b16 %v983
    %v1051 = vunpack.c.l.b16 %v984
    %v1052 = vunpack.c.h.b16 %v984
    %v1053 = vunpack.c.l.b16 %v985
    %v1054 = vunpack.c.h.b16 %v985
    %v1055 = vunpack.c.l.b16 %v986
    %v1056 = vunpack.c.h.b16 %v986
    %v1057 = vunpack.c.l.b16 %v987
    %v1058 = vunpack.c.h.b16 %v987
    %v1059 = vunpack.c.l.b16 %v988
    %v1060 = vunpack.c.h.b16 %v988
    %v1061 = vunpack.c.l.b16 %v989
    %v1062 = vunpack.c.h.b16 %v989
    %v1063 = vunpack.c.l.b16 %v990
    %v1064 = vunpack.c.h.b16 %v990
    %v1065 = vunpack.c.l.b16 %v991
    %v1066 = vunpack.c.h.b16 %v991
    %v1067 = vunpack.c.l.b16 %v992
    %v1068 = vunpack.c.h.b16 %v992
    %v1069 = vunpack.c.l.b16 %v993
    %v1070 = vunpack.c.h.b16 %v993
    %v1071 = vunpack.c.l.b16 %v994
    %v1072 = vunpack.c.h.b16 %v994
    %v1073 = vunpack.c.l.b16 %v995
    %v1074 = vunpack.c.h.b16 %v995
    %v1075 = vunpack.c.l.b16 %v996
    %v1076 = vunpack.c.h.b16 %v996
    %v1077 = vunpack.c.l.b16 %v997
    %v1078 = vunpack.c.h.b16 %v997
    %v1079 = vunpack.c.l.b16 %v998
    %v1080 = vunpack.c.h.b16 %v998
    %v1081 = vunpack.c.l.b16 %v999
    %v1082 = vunpack.c.h.b16 %v999
    %v1083 = vunpack.c.l.b16 %v1000
    %v1084 = vunpack.c.h.b16 %v1000
    %v1085 = vunpack.c.l.b16 %v1001
    %v1086 = vunpack.c.h.b16 %v1001
    %v1087 = vunpack.c.l.b16 %v1002
    %v1088 = vunpack.c.h.b16 %v1002
    %v1089 = vunpack.c.l.b16 %v1003
    %v1090 = vunpack.c.h.b16 %v1003
    %v1091 = vunpack.c.l.b16 %v1004
    %v1092 = vunpack.c.h.b16 %v1004
    %v1093 = vunpack.c.l.b16 %v1005
    %v1094 = vunpack.c.h.b16 %v1005
    %v1095 = vunpack.c.l.b16 %v1006
    %v1096 = vunpack.c.h.b16 %v1006
    %v1097 = vunpack.c.l.b16 %v1007
    %v1098 = vunpack.c.h.b16 %v1007
    %v1099 = vunpack.c.l.b16 %v1008
    %v1100 = vunpack.c.h.b16 %v1008
    %v1101 = vunpack.c.l.b16 %v1009
    %v1102 = vunpack.c.h.b16 %v1009
    %v1103 = vunpack.c.l.b16 %v1010
    %v1104 = vunpack.c.h.b16 %v1010
    %v1105 = vunpack.c.l.b16 %v1011
    %v1106 = vunpack.c.h.b16 %v1011
    %v1107 = vunpack.c.l.b16 %v1012
    %v1108 = vunpack.c.h.b16 %v1012
    %v1109 = vpack.c.b16 %v1049, %v1045
    %v1110 = vpack.c.b16 %v1050, %v1046
    %v1111 = vpack.c.b16 %v1051, %v1047
    %v1112 = vpack.c.b16 %v1052, %v1048
    %v1113 = vpack.c.b16 %v1057, %v1053
    %v1114 = vpack.c.b16 %v1058, %v1054
    %v1115 = vpack.c.b16 %v1059, %v1055
    %v1116 = vpack.c.b16 %v1060, %v1056
    %v1117 = vpack.c.b16 %v1065, %v1061
    %v1118 = vpack.c.b16 %v1066, %v1062
    %v1119 = vpack.c.b16 %v1067, %v1063
    %v1120 = vpack.c.b16 %v1068, %v1064
    %v1121 = vpack.c.b16 %v1073, %v1069
    %v1122 = vpack.c.b16 %v1074, %v1070
    %v1123 = vpack.c.b16 %v1075, %v1071
    %v1124 = vpack.c.b16 %v1076, %v1072
    %v1125 = vpack.c.b16 %v1081, %v1077
    %v1126 = vpack.c.b16 %v1082, %v1078
    %v1127 = vpack.c.b16 %v1083, %v1079
    %v1128 = vpack.c.b16 %v1084, %v1080
    %v1129 = vpack.c.b16 %v1089, %v1085
    %v1130 = vpack.c.b16 %v1090, %v1086
    %v1131 = vpack.c.b16 %v1091, %v1087
    %v1132 = vpack.c.b16 %v1092, %v1088
    %v1133 = vpack.c.b16 %v1097, %v1093
    %v1134 = vpack.c.b16 %v1098, %v1094
    %v1135 = vpack.c.b16 %v1099, %v1095
    %v1136 = vpack.c.b16 %v1100, %v1096
    %v1137 = vpack.c.b16 %v1105, %v1101
    %v1138 = vpack.c.b16 %v1106, %v1102
    %v1139 = vpack.c.b16 %v1107, %v1103
    %v1140 = vpack.c.b16 %v1108, %v1104
    %1173 = vmatpush.bf16.msra.mxu0 %v1137
    %1174 = vmatpush.bf16.msra.mxu0 %v1133
    %1175 = vmatpush.bf16.msra.mxu0 %v1129
    %1176 = vmatpush.bf16.msra.mxu0 %v1125
    %1177 = vmatpush.bf16.msra.mxu0 %v1121
    %1178 = vmatpush.bf16.msra.mxu0 %v1117
    %1179 = vmatpush.bf16.msra.mxu0 %v1113
    %1180 = vmatpush.bf16.msra.mxu0 %v1109
    %1181 = vmatmul.bf16.gmra.mxu0 %v980
    %v1182 = vpop.f32.mrf.mxu0
    %v1183 = vadd.f32 0.0, %v1182
    %v1184 = vpop.f32.mrf.mxu0
    %1185 = vdwg.mxu0
    %1186 = vmatpush.bf16.msra.mxu0 %v1138
    %1187 = vmatpush.bf16.msra.mxu0 %v1134
    %1188 = vmatpush.bf16.msra.mxu0 %v1130
    %1189 = vmatpush.bf16.msra.mxu0 %v1126
    %1190 = vmatpush.bf16.msra.mxu0 %v1122
    %1191 = vmatpush.bf16.msra.mxu0 %v1118
    %1192 = vmatpush.bf16.msra.mxu0 %v1114
    %1193 = vmatpush.bf16.msra.mxu0 %v1110
    %1194 = vmatmul.bf16.gmra.mxu0 %v980
    %v1195 = vpop.f32.mrf.mxu0
    %v1196 = vadd.f32 0.0, %v1195
    %v1197 = vpop.f32.mrf.mxu0
    %1198 = vdwg.mxu0
    %1199 = vmatpush.bf16.msra.mxu0 %v1139
    %1200 = vmatpush.bf16.msra.mxu0 %v1135
    %1201 = vmatpush.bf16.msra.mxu0 %v1131
    %1202 = vmatpush.bf16.msra.mxu0 %v1127
    %1203 = vmatpush.bf16.msra.mxu0 %v1123
    %1204 = vmatpush.bf16.msra.mxu0 %v1119
    %1205 = vmatpush.bf16.msra.mxu0 %v1115
    %1206 = vmatpush.bf16.msra.mxu0 %v1111
    %1207 = vmatmul.bf16.gmra.mxu0 %v980
    %v1208 = vpop.f32.mrf.mxu0
    %v1209 = vadd.f32 0.0, %v1208
    %v1210 = vpop.f32.mrf.mxu0
    %1211 = vdwg.mxu0
    %1212 = vmatpush.bf16.msra.mxu0 %v1140
    %1213 = vmatpush.bf16.msra.mxu0 %v1136
    %1214 = vmatpush.bf16.msra.mxu0 %v1132
    %1215 = vmatpush.bf16.msra.mxu0 %v1128
    %1216 = vmatpush.bf16.msra.mxu0 %v1124
    %1217 = vmatpush.bf16.msra.mxu0 %v1120
    %1218 = vmatpush.bf16.msra.mxu0 %v1116
    %1219 = vmatpush.bf16.msra.mxu0 %v1112
    %1220 = vmatmul.bf16.gmra.mxu0 %v980
    %v1221 = vpop.f32.mrf.mxu0
    %v1222 = vadd.f32 0.0, %v1221
    %v1223 = vpop.f32.mrf.mxu0
    %1224 = vdwg.mxu0
    %v1225 = vadd.f32 %v975, %v1183
    %v1226 = vadd.f32 %v976, %v1196
    %v1227 = vadd.f32 %v977, %v1209
    %v1228 = vadd.f32 %v978, %v1222
    %v1229 = vxor.u32 %v1225, 2147483648
    %v1230 = vxor.u32 %v1226, 2147483648
    %v1231 = vxor.u32 %v1227, 2147483648
    %v1232 = vmul.f32 %v1229, 1.442695
    %v1233 = vpow.pop %v1232
    %v1234 = vmul.f32 %v1230, 1.442695
    %v1235 = vpow.pop %v1234
    %v1236 = vmul.f32 %v1231, 1.442695
    %v1237 = vpow.pop %v1236
    %v1238 = vadd.f32 %v1233, 1.0
    %v1239 = vadd.f32 %v1235, 1.0
    %v1240 = vadd.f32 %v1237, 1.0
    %v1241 = vrcp.pop %v1238
    %v1242 = vmul.f32 %v1238, %v1241
    %v1243 = vsub.f32 1.0, %v1242
    %v1244 = vmul.f32 %v1241, %v1243
    %v1245 = vadd.f32 %v1241, %v1244
    %vm1246 = vweird.f32 %v1238
    %vm1247 = vweird.f32 %v1241
    %vm1248 = vmor %vm1246, %vm1247
    %v1249 = vsel %vm1248, %v1241, %v1245
    %v1250 = vand.u32 2147483647, %v1238
    %vm1251 = vcmp.eq.f32.partialorder %v1250, 8.507059e+37
    %v1252 = vand.u32 %v1238, 2147483648
    %v1253 = vor.u32 1.1754944e-38, %v1252
    %v1254 = vsel %vm1251, %v1253, %v1249
    %v1255 = vmul.f32 1.0, %v1254
    %v1256 = vrcp.pop %v1239
    %v1257 = vmul.f32 %v1239, %v1256
    %v1258 = vsub.f32 1.0, %v1257
    %v1259 = vmul.f32 %v1256, %v1258
    %v1260 = vadd.f32 %v1256, %v1259
    %vm1261 = vweird.f32 %v1239
    %vm1262 = vweird.f32 %v1256
    %vm1263 = vmor %vm1261, %vm1262
    %v1264 = vsel %vm1263, %v1256, %v1260
    %v1265 = vand.u32 2147483647, %v1239
    %vm1266 = vcmp.eq.f32.partialorder %v1265, 8.507059e+37
    %v1267 = vand.u32 %v1239, 2147483648
    %v1268 = vor.u32 1.1754944e-38, %v1267
    %v1269 = vsel %vm1266, %v1268, %v1264
    %v1270 = vmul.f32 1.0, %v1269
    %v1271 = vrcp.pop %v1240
    %v1272 = vmul.f32 %v1240, %v1271
    %v1273 = vsub.f32 1.0, %v1272
    %v1274 = vmul.f32 %v1271, %v1273
    %v1275 = vadd.f32 %v1271, %v1274
    %vm1276 = vweird.f32 %v1240
    %vm1277 = vweird.f32 %v1271
    %vm1278 = vmor %vm1276, %vm1277
    %v1279 = vsel %vm1278, %v1271, %v1275
    %v1280 = vand.u32 2147483647, %v1240
    %vm1281 = vcmp.eq.f32.partialorder %v1280, 8.507059e+37
    %v1282 = vand.u32 %v1240, 2147483648
    %v1283 = vor.u32 1.1754944e-38, %v1282
    %v1284 = vsel %vm1281, %v1283, %v1279
    %v1285 = vmul.f32 1.0, %v1284
    %v1286 = vtanh.pop %v1228
    %v1287 = vld [vmem:[#allocation2] sm:$0xff]
    %v1288 = vmul.f32 %v1270, %v1287
    %v1289 = vmul.f32 %v1255, %v1286
    %v1290 = vadd.f32 %v1288, %v1289
    %v1291 = vtanh.pop %v1290
    %v1292 = vmul.f32 %v1285, %v1291
    %1293 = vst [vmem:[#allocation2] sm:$0xff] %v1290
    %1294 = vst [vmem:[#allocation12] sm:$0xff] %v1292
    %s1295 = scalar_lea.vmem [#allocation3], 96
    %v1296 = vld [vmem:[%s1295] sm:$0xff]
    %v1297 = vld [vmem:[%s1295 + $0x8] sm:$0xff]
    %v1298 = vld [vmem:[%s1295 + $0x10] sm:$0xff]
    %v1299 = vld [vmem:[%s1295 + $0x18] sm:$0xff]
    %v1300 = vld [vmem:[#allocation12] sm:$0xff]
    %v1301 = vpack.c.bf16 %v1300, %v1300
    %v1302 = vld [vmem:[#allocation9] sm:$0xff]
    %v1303 = vld [vmem:[#allocation9 + $0x8] sm:$0xff]
    %v1304 = vld [vmem:[#allocation9 + $0x10] sm:$0xff]
    %v1305 = vld [vmem:[#allocation9 + $0x18] sm:$0xff]
    %v1306 = vld [vmem:[#allocation9 + $0x20] sm:$0xff]
    %v1307 = vld [vmem:[#allocation9 + $0x28] sm:$0xff]
    %v1308 = vld [vmem:[#allocation9 + $0x30] sm:$0xff]
    %v1309 = vld [vmem:[#allocation9 + $0x38] sm:$0xff]
    %v1310 = vld [vmem:[#allocation9 + $0x40] sm:$0xff]
    %v1311 = vld [vmem:[#allocation9 + $0x48] sm:$0xff]
    %v1312 = vld [vmem:[#allocation9 + $0x50] sm:$0xff]
    %v1313 = vld [vmem:[#allocation9 + $0x58] sm:$0xff]
    %v1314 = vld [vmem:[#allocation9 + $0x60] sm:$0xff]
    %v1315 = vld [vmem:[#allocation9 + $0x68] sm:$0xff]
    %v1316 = vld [vmem:[#allocation9 + $0x70] sm:$0xff]
    %v1317 = vld [vmem:[#allocation9 + $0x78] sm:$0xff]
    %v1318 = vld [vmem:[#allocation9 + $0x80] sm:$0xff]
    %v1319 = vld [vmem:[#allocation9 + $0x88] sm:$0xff]
    %v1320 = vld [vmem:[#allocation9 + $0x90] sm:$0xff]
    %v1321 = vld [vmem:[#allocation9 + $0x98] sm:$0xff]
    %v1322 = vld [vmem:[#allocation9 + $0xa0] sm:$0xff]
    %v1323 = vld [vmem:[#allocation9 + $0xa8] sm:$0xff]
    %v1324 = vld [vmem:[#allocation9 + $0xb0] sm:$0xff]
    %v1325 = vld [vmem:[#allocation9 + $0xb8] sm:$0xff]
    %v1326 = vld [vmem:[#allocation9 + $0xc0] sm:$0xff]
    %v1327 = vld [vmem:[#allocation9 + $0xc8] sm:$0xff]
    %v1328 = vld [vmem:[#allocation9 + $0xd0] sm:$0xff]
    %v1329 = vld [vmem:[#allocation9 + $0xd8] sm:$0xff]
    %v1330 = vld [vmem:[#allocation9 + $0xe0] sm:$0xff]
    %v1331 = vld [vmem:[#allocation9 + $0xe8] sm:$0xff]
    %v1332 = vld [vmem:[#allocation9 + $0xf0] sm:$0xff]
    %v1333 = vld [vmem:[#allocation9 + $0xf8] sm:$0xff]
    %v1366 = vunpack.c.l.b16 %v1302
    %v1367 = vunpack.c.h.b16 %v1302
    %v1368 = vunpack.c.l.b16 %v1303
    %v1369 = vunpack.c.h.b16 %v1303
    %v1370 = vunpack.c.l.b16 %v1304
    %v1371 = vunpack.c.h.b16 %v1304
    %v1372 = vunpack.c.l.b16 %v1305
    %v1373 = vunpack.c.h.b16 %v1305
    %v1374 = vunpack.c.l.b16 %v1306
    %v1375 = vunpack.c.h.b16 %v1306
    %v1376 = vunpack.c.l.b16 %v1307
    %v1377 = vunpack.c.h.b16 %v1307
    %v1378 = vunpack.c.l.b16 %v1308
    %v1379 = vunpack.c.h.b16 %v1308
    %v1380 = vunpack.c.l.b16 %v1309
    %v1381 = vunpack.c.h.b16 %v1309
    %v1382 = vunpack.c.l.b16 %v1310
    %v1383 = vunpack.c.h.b16 %v1310
    %v1384 = vunpack.c.l.b16 %v1311
    %v1385 = vunpack.c.h.b16 %v1311
    %v1386 = vunpack.c.l.b16 %v1312
    %v1387 = vunpack.c.h.b16 %v1312
    %v1388 = vunpack.c.l.b16 %v1313
    %v1389 = vunpack.c.h.b16 %v1313
    %v1390 = vunpack.c.l.b16 %v1314
    %v1391 = vunpack.c.h.b16 %v1314
    %v1392 = vunpack.c.l.b16 %v1315
    %v1393 = vunpack.c.h.b16 %v1315
    %v1394 = vunpack.c.l.b16 %v1316
    %v1395 = vunpack.c.h.b16 %v1316
    %v1396 = vunpack.c.l.b16 %v1317
    %v1397 = vunpack.c.h.b16 %v1317
    %v1398 = vunpack.c.l.b16 %v1318
    %v1399 = vunpack.c.h.b16 %v1318
    %v1400 = vunpack.c.l.b16 %v1319
    %v1401 = vunpack.c.h.b16 %v1319
    %v1402 = vunpack.c.l.b16 %v1320
    %v1403 = vunpack.c.h.b16 %v1320
    %v1404 = vunpack.c.l.b16 %v1321
    %v1405 = vunpack.c.h.b16 %v1321
    %v1406 = vunpack.c.l.b16 %v1322
    %v1407 = vunpack.c.h.b16 %v1322
    %v1408 = vunpack.c.l.b16 %v1323
    %v1409 = vunpack.c.h.b16 %v1323
    %v1410 = vunpack.c.l.b16 %v1324
    %v1411 = vunpack.c.h.b16 %v1324
    %v1412 = vunpack.c.l.b16 %v1325
    %v1413 = vunpack.c.h.b16 %v1325
    %v1414 = vunpack.c.l.b16 %v1326
    %v1415 = vunpack.c.h.b16 %v1326
    %v1416 = vunpack.c.l.b16 %v1327
    %v1417 = vunpack.c.h.b16 %v1327
    %v1418 = vunpack.c.l.b16 %v1328
    %v1419 = vunpack.c.h.b16 %v1328
    %v1420 = vunpack.c.l.b16 %v1329
    %v1421 = vunpack.c.h.b16 %v1329
    %v1422 = vunpack.c.l.b16 %v1330
    %v1423 = vunpack.c.h.b16 %v1330
    %v1424 = vunpack.c.l.b16 %v1331
    %v1425 = vunpack.c.h.b16 %v1331
    %v1426 = vunpack.c.l.b16 %v1332
    %v1427 = vunpack.c.h.b16 %v1332
    %v1428 = vunpack.c.l.b16 %v1333
    %v1429 = vunpack.c.h.b16 %v1333
    %v1430 = vpack.c.b16 %v1370, %v1366
    %v1431 = vpack.c.b16 %v1371, %v1367
    %v1432 = vpack.c.b16 %v1372, %v1368
    %v1433 = vpack.c.b16 %v1373, %v1369
    %v1434 = vpack.c.b16 %v1378, %v1374
    %v1435 = vpack.c.b16 %v1379, %v1375
    %v1436 = vpack.c.b16 %v1380, %v1376
    %v1437 = vpack.c.b16 %v1381, %v1377
    %v1438 = vpack.c.b16 %v1386, %v1382
    %v1439 = vpack.c.b16 %v1387, %v1383
    %v1440 = vpack.c.b16 %v1388, %v1384
    %v1441 = vpack.c.b16 %v1389, %v1385
    %v1442 = vpack.c.b16 %v1394, %v1390
    %v1443 = vpack.c.b16 %v1395, %v1391
    %v1444 = vpack.c.b16 %v1396, %v1392
    %v1445 = vpack.c.b16 %v1397, %v1393
    %v1446 = vpack.c.b16 %v1402, %v1398
    %v1447 = vpack.c.b16 %v1403, %v1399
    %v1448 = vpack.c.b16 %v1404, %v1400
    %v1449 = vpack.c.b16 %v1405, %v1401
    %v1450 = vpack.c.b16 %v1410, %v1406
    %v1451 = vpack.c.b16 %v1411, %v1407
    %v1452 = vpack.c.b16 %v1412, %v1408
    %v1453 = vpack.c.b16 %v1413, %v1409
    %v1454 = vpack.c.b16 %v1418, %v1414
    %v1455 = vpack.c.b16 %v1419, %v1415
    %v1456 = vpack.c.b16 %v1420, %v1416
    %v1457 = vpack.c.b16 %v1421, %v1417
    %v1458 = vpack.c.b16 %v1426, %v1422
    %v1459 = vpack.c.b16 %v1427, %v1423
    %v1460 = vpack.c.b16 %v1428, %v1424
    %v1461 = vpack.c.b16 %v1429, %v1425
    %1494 = vmatpush.bf16.msra.mxu0 %v1458
    %1495 = vmatpush.bf16.msra.mxu0 %v1454
    %1496 = vmatpush.bf16.msra.mxu0 %v1450
    %1497 = vmatpush.bf16.msra.mxu0 %v1446
    %1498 = vmatpush.bf16.msra.mxu0 %v1442
    %1499 = vmatpush.bf16.msra.mxu0 %v1438
    %1500 = vmatpush.bf16.msra.mxu0 %v1434
    %1501 = vmatpush.bf16.msra.mxu0 %v1430
    %1502 = vmatmul.bf16.gmra.mxu0 %v1301
    %v1503 = vpop.f32.mrf.mxu0
    %v1504 = vadd.f32 0.0, %v1503
    %v1505 = vpop.f32.mrf.mxu0
    %1506 = vdwg.mxu0
    %1507 = vmatpush.bf16.msra.mxu0 %v1459
    %1508 = vmatpush.bf16.msra.mxu0 %v1455
    %1509 = vmatpush.bf16.msra.mxu0 %v1451
    %1510 = vmatpush.bf16.msra.mxu0 %v1447
    %1511 = vmatpush.bf16.msra.mxu0 %v1443
    %1512 = vmatpush.bf16.msra.mxu0 %v1439
    %1513 = vmatpush.bf16.msra.mxu0 %v1435
    %1514 = vmatpush.bf16.msra.mxu0 %v1431
    %1515 = vmatmul.bf16.gmra.mxu0 %v1301
    %v1516 = vpop.f32.mrf.mxu0
    %v1517 = vadd.f32 0.0, %v1516
    %v1518 = vpop.f32.mrf.mxu0
    %1519 = vdwg.mxu0
    %1520 = vmatpush.bf16.msra.mxu0 %v1460
    %1521 = vmatpush.bf16.msra.mxu0 %v1456
    %1522 = vmatpush.bf16.msra.mxu0 %v1452
    %1523 = vmatpush.bf16.msra.mxu0 %v1448
    %1524 = vmatpush.bf16.msra.mxu0 %v1444
    %1525 = vmatpush.bf16.msra.mxu0 %v1440
    %1526 = vmatpush.bf16.msra.mxu0 %v1436
    %1527 = vmatpush.bf16.msra.mxu0 %v1432
    %1528 = vmatmul.bf16.gmra.mxu0 %v1301
    %v1529 = vpop.f32.mrf.mxu0
    %v1530 = vadd.f32 0.0, %v1529
    %v1531 = vpop.f32.mrf.mxu0
    %1532 = vdwg.mxu0
    %1533 = vmatpush.bf16.msra.mxu0 %v1461
    %1534 = vmatpush.bf16.msra.mxu0 %v1457
    %1535 = vmatpush.bf16.msra.mxu0 %v1453
    %1536 = vmatpush.bf16.msra.mxu0 %v1449
    %1537 = vmatpush.bf16.msra.mxu0 %v1445
    %1538 = vmatpush.bf16.msra.mxu0 %v1441
    %1539 = vmatpush.bf16.msra.mxu0 %v1437
    %1540 = vmatpush.bf16.msra.mxu0 %v1433
    %1541 = vmatmul.bf16.gmra.mxu0 %v1301
    %v1542 = vpop.f32.mrf.mxu0
    %v1543 = vadd.f32 0.0, %v1542
    %v1544 = vpop.f32.mrf.mxu0
    %1545 = vdwg.mxu0
    %v1546 = vadd.f32 %v1296, %v1504
    %v1547 = vadd.f32 %v1297, %v1517
    %v1548 = vadd.f32 %v1298, %v1530
    %v1549 = vadd.f32 %v1299, %v1543
    %v1550 = vxor.u32 %v1546, 2147483648
    %v1551 = vxor.u32 %v1547, 2147483648
    %v1552 = vxor.u32 %v1548, 2147483648
    %v1553 = vmul.f32 %v1550, 1.442695
    %v1554 = vpow.pop %v1553
    %v1555 = vmul.f32 %v1551, 1.442695
    %v1556 = vpow.pop %v1555
    %v1557 = vmul.f32 %v1552, 1.442695
    %v1558 = vpow.pop %v1557
    %v1559 = vadd.f32 %v1554, 1.0
    %v1560 = vadd.f32 %v1556, 1.0
    %v1561 = vadd.f32 %v1558, 1.0
    %v1562 = vrcp.pop %v1559
    %v1563 = vmul.f32 %v1559, %v1562
    %v1564 = vsub.f32 1.0, %v1563
    %v1565 = vmul.f32 %v1562, %v1564
    %v1566 = vadd.f32 %v1562, %v1565
    %vm1567 = vweird.f32 %v1559
    %vm1568 = vweird.f32 %v1562
    %vm1569 = vmor %vm1567, %vm1568
    %v1570 = vsel %vm1569, %v1562, %v1566
    %v1571 = vand.u32 2147483647, %v1559
    %vm1572 = vcmp.eq.f32.partialorder %v1571, 8.507059e+37
    %v1573 = vand.u32 %v1559, 2147483648
    %v1574 = vor.u32 1.1754944e-38, %v1573
    %v1575 = vsel %vm1572, %v1574, %v1570
    %v1576 = vmul.f32 1.0, %v1575
    %v1577 = vrcp.pop %v1560
    %v1578 = vmul.f32 %v1560, %v1577
    %v1579 = vsub.f32 1.0, %v1578
    %v1580 = vmul.f32 %v1577, %v1579
    %v1581 = vadd.f32 %v1577, %v1580
    %vm1582 = vweird.f32 %v1560
    %vm1583 = vweird.f32 %v1577
    %vm1584 = vmor %vm1582, %vm1583
    %v1585 = vsel %vm1584, %v1577, %v1581
    %v1586 = vand.u32 2147483647, %v1560
    %vm1587 = vcmp.eq.f32.partialorder %v1586, 8.507059e+37
    %v1588 = vand.u32 %v1560, 2147483648
    %v1589 = vor.u32 1.1754944e-38, %v1588
    %v1590 = vsel %vm1587, %v1589, %v1585
    %v1591 = vmul.f32 1.0, %v1590
    %v1592 = vrcp.pop %v1561
    %v1593 = vmul.f32 %v1561, %v1592
    %v1594 = vsub.f32 1.0, %v1593
    %v1595 = vmul.f32 %v1592, %v1594
    %v1596 = vadd.f32 %v1592, %v1595
    %vm1597 = vweird.f32 %v1561
    %vm1598 = vweird.f32 %v1592
    %vm1599 = vmor %vm1597, %vm1598
    %v1600 = vsel %vm1599, %v1592, %v1596
    %v1601 = vand.u32 2147483647, %v1561
    %vm1602 = vcmp.eq.f32.partialorder %v1601, 8.507059e+37
    %v1603 = vand.u32 %v1561, 2147483648
    %v1604 = vor.u32 1.1754944e-38, %v1603
    %v1605 = vsel %vm1602, %v1604, %v1600
    %v1606 = vmul.f32 1.0, %v1605
    %v1607 = vtanh.pop %v1549
    %v1608 = vld [vmem:[#allocation2] sm:$0xff]
    %v1609 = vmul.f32 %v1591, %v1608
    %v1610 = vmul.f32 %v1576, %v1607
    %v1611 = vadd.f32 %v1609, %v1610
    %v1612 = vtanh.pop %v1611
    %v1613 = vmul.f32 %v1606, %v1612
    %1614 = vst [vmem:[#allocation2] sm:$0xff] %v1611
    %1615 = vst [vmem:[#allocation12] sm:$0xff] %v1613
    %s1616 = scalar_lea.vmem [#allocation3], 128
    %v1617 = vld [vmem:[%s1616] sm:$0xff]
    %v1618 = vld [vmem:[%s1616 + $0x8] sm:$0xff]
    %v1619 = vld [vmem:[%s1616 + $0x10] sm:$0xff]
    %v1620 = vld [vmem:[%s1616 + $0x18] sm:$0xff]
    %v1621 = vld [vmem:[#allocation12] sm:$0xff]
    %v1622 = vpack.c.bf16 %v1621, %v1621
    %v1623 = vld [vmem:[#allocation9] sm:$0xff]
    %v1624 = vld [vmem:[#allocation9 + $0x8] sm:$0xff]
    %v1625 = vld [vmem:[#allocation9 + $0x10] sm:$0xff]
    %v1626 = vld [vmem:[#allocation9 + $0x18] sm:$0xff]
    %v1627 = vld [vmem:[#allocation9 + $0x20] sm:$0xff]
    %v1628 = vld [vmem:[#allocation9 + $0x28] sm:$0xff]
    %v1629 = vld [vmem:[#allocation9 + $0x30] sm:$0xff]
    %v1630 = vld [vmem:[#allocation9 + $0x38] sm:$0xff]
    %v1631 = vld [vmem:[#allocation9 + $0x40] sm:$0xff]
    %v1632 = vld [vmem:[#allocation9 + $0x48] sm:$0xff]
    %v1633 = vld [vmem:[#allocation9 + $0x50] sm:$0xff]
    %v1634 = vld [vmem:[#allocation9 + $0x58] sm:$0xff]
    %v1635 = vld [vmem:[#allocation9 + $0x60] sm:$0xff]
    %v1636 = vld [vmem:[#allocation9 + $0x68] sm:$0xff]
    %v1637 = vld [vmem:[#allocation9 + $0x70] sm:$0xff]
    %v1638 = vld [vmem:[#allocation9 + $0x78] sm:$0xff]
    %v1639 = vld [vmem:[#allocation9 + $0x80] sm:$0xff]
    %v1640 = vld [vmem:[#allocation9 + $0x88] sm:$0xff]
    %v1641 = vld [vmem:[#allocation9 + $0x90] sm:$0xff]
    %v1642 = vld [vmem:[#allocation9 + $0x98] sm:$0xff]
    %v1643 = vld [vmem:[#allocation9 + $0xa0] sm:$0xff]
    %v1644 = vld [vmem:[#allocation9 + $0xa8] sm:$0xff]
    %v1645 = vld [vmem:[#allocation9 + $0xb0] sm:$0xff]
    %v1646 = vld [vmem:[#allocation9 + $0xb8] sm:$0xff]
    %v1647 = vld [vmem:[#allocation9 + $0xc0] sm:$0xff]
    %v1648 = vld [vmem:[#allocation9 + $0xc8] sm:$0xff]
    %v1649 = vld [vmem:[#allocation9 + $0xd0] sm:$0xff]
    %v1650 = vld [vmem:[#allocation9 + $0xd8] sm:$0xff]
    %v1651 = vld [vmem:[#allocation9 + $0xe0] sm:$0xff]
    %v1652 = vld [vmem:[#allocation9 + $0xe8] sm:$0xff]
    %v1653 = vld [vmem:[#allocation9 + $0xf0] sm:$0xff]
    %v1654 = vld [vmem:[#allocation9 + $0xf8] sm:$0xff]
    %v1687 = vunpack.c.l.b16 %v1623
    %v1688 = vunpack.c.h.b16 %v1623
    %v1689 = vunpack.c.l.b16 %v1624
    %v1690 = vunpack.c.h.b16 %v1624
    %v1691 = vunpack.c.l.b16 %v1625
    %v1692 = vunpack.c.h.b16 %v1625
    %v1693 = vunpack.c.l.b16 %v1626
    %v1694 = vunpack.c.h.b16 %v1626
    %v1695 = vunpack.c.l.b16 %v1627
    %v1696 = vunpack.c.h.b16 %v1627
    %v1697 = vunpack.c.l.b16 %v1628
    %v1698 = vunpack.c.h.b16 %v1628
    %v1699 = vunpack.c.l.b16 %v1629
    %v1700 = vunpack.c.h.b16 %v1629
    %v1701 = vunpack.c.l.b16 %v1630
    %v1702 = vunpack.c.h.b16 %v1630
    %v1703 = vunpack.c.l.b16 %v1631
    %v1704 = vunpack.c.h.b16 %v1631
    %v1705 = vunpack.c.l.b16 %v1632
    %v1706 = vunpack.c.h.b16 %v1632
    %v1707 = vunpack.c.l.b16 %v1633
    %v1708 = vunpack.c.h.b16 %v1633
    %v1709 = vunpack.c.l.b16 %v1634
    %v1710 = vunpack.c.h.b16 %v1634
    %v1711 = vunpack.c.l.b16 %v1635
    %v1712 = vunpack.c.h.b16 %v1635
    %v1713 = vunpack.c.l.b16 %v1636
    %v1714 = vunpack.c.h.b16 %v1636
    %v1715 = vunpack.c.l.b16 %v1637
    %v1716 = vunpack.c.h.b16 %v1637
    %v1717 = vunpack.c.l.b16 %v1638
    %v1718 = vunpack.c.h.b16 %v1638
    %v1719 = vunpack.c.l.b16 %v1639
    %v1720 = vunpack.c.h.b16 %v1639
    %v1721 = vunpack.c.l.b16 %v1640
    %v1722 = vunpack.c.h.b16 %v1640
    %v1723 = vunpack.c.l.b16 %v1641
    %v1724 = vunpack.c.h.b16 %v1641
    %v1725 = vunpack.c.l.b16 %v1642
    %v1726 = vunpack.c.h.b16 %v1642
    %v1727 = vunpack.c.l.b16 %v1643
    %v1728 = vunpack.c.h.b16 %v1643
    %v1729 = vunpack.c.l.b16 %v1644
    %v1730 = vunpack.c.h.b16 %v1644
    %v1731 = vunpack.c.l.b16 %v1645
    %v1732 = vunpack.c.h.b16 %v1645
    %v1733 = vunpack.c.l.b16 %v1646
    %v1734 = vunpack.c.h.b16 %v1646
    %v1735 = vunpack.c.l.b16 %v1647
    %v1736 = vunpack.c.h.b16 %v1647
    %v1737 = vunpack.c.l.b16 %v1648
    %v1738 = vunpack.c.h.b16 %v1648
    %v1739 = vunpack.c.l.b16 %v1649
    %v1740 = vunpack.c.h.b16 %v1649
    %v1741 = vunpack.c.l.b16 %v1650
    %v1742 = vunpack.c.h.b16 %v1650
    %v1743 = vunpack.c.l.b16 %v1651
    %v1744 = vunpack.c.h.b16 %v1651
    %v1745 = vunpack.c.l.b16 %v1652
    %v1746 = vunpack.c.h.b16 %v1652
    %v1747 = vunpack.c.l.b16 %v1653
    %v1748 = vunpack.c.h.b16 %v1653
    %v1749 = vunpack.c.l.b16 %v1654
    %v1750 = vunpack.c.h.b16 %v1654
    %v1751 = vpack.c.b16 %v1691, %v1687
    %v1752 = vpack.c.b16 %v1692, %v1688
    %v1753 = vpack.c.b16 %v1693, %v1689
    %v1754 = vpack.c.b16 %v1694, %v1690
    %v1755 = vpack.c.b16 %v1699, %v1695
    %v1756 = vpack.c.b16 %v1700, %v1696
    %v1757 = vpack.c.b16 %v1701, %v1697
    %v1758 = vpack.c.b16 %v1702, %v1698
    %v1759 = vpack.c.b16 %v1707, %v1703
    %v1760 = vpack.c.b16 %v1708, %v1704
    %v1761 = vpack.c.b16 %v1709, %v1705
    %v1762 = vpack.c.b16 %v1710, %v1706
    %v1763 = vpack.c.b16 %v1715, %v1711
    %v1764 = vpack.c.b16 %v1716, %v1712
    %v1765 = vpack.c.b16 %v1717, %v1713
    %v1766 = vpack.c.b16 %v1718, %v1714
    %v1767 = vpack.c.b16 %v1723, %v1719
    %v1768 = vpack.c.b16 %v1724, %v1720
    %v1769 = vpack.c.b16 %v1725, %v1721
    %v1770 = vpack.c.b16 %v1726, %v1722
    %v1771 = vpack.c.b16 %v1731, %v1727
    %v1772 = vpack.c.b16 %v1732, %v1728
    %v1773 = vpack.c.b16 %v1733, %v1729
    %v1774 = vpack.c.b16 %v1734, %v1730
    %v1775 = vpack.c.b16 %v1739, %v1735
    %v1776 = vpack.c.b16 %v1740, %v1736
    %v1777 = vpack.c.b16 %v1741, %v1737
    %v1778 = vpack.c.b16 %v1742, %v1738
    %v1779 = vpack.c.b16 %v1747, %v1743
    %v1780 = vpack.c.b16 %v1748, %v1744
    %v1781 = vpack.c.b16 %v1749, %v1745
    %v1782 = vpack.c.b16 %v1750, %v1746
    %1815 = vmatpush.bf16.msra.mxu0 %v1779
    %1816 = vmatpush.bf16.msra.mxu0 %v1775
    %1817 = vmatpush.bf16.msra.mxu0 %v1771
    %1818 = vmatpush.bf16.msra.mxu0 %v1767
    %1819 = vmatpush.bf16.msra.mxu0 %v1763
    %1820 = vmatpush.bf16.msra.mxu0 %v1759
    %1821 = vmatpush.bf16.msra.mxu0 %v1755
    %1822 = vmatpush.bf16.msra.mxu0 %v1751
    %1823 = vmatmul.bf16.gmra.mxu0 %v1622
    %v1824 = vpop.f32.mrf.mxu0
    %v1825 = vadd.f32 0.0, %v1824
    %v1826 = vpop.f32.mrf.mxu0
    %1827 = vdwg.mxu0
    %1828 = vmatpush.bf16.msra.mxu0 %v1780
    %1829 = vmatpush.bf16.msra.mxu0 %v1776
    %1830 = vmatpush.bf16.msra.mxu0 %v1772
    %1831 = vmatpush.bf16.msra.mxu0 %v1768
    %1832 = vmatpush.bf16.msra.mxu0 %v1764
    %1833 = vmatpush.bf16.msra.mxu0 %v1760
    %1834 = vmatpush.bf16.msra.mxu0 %v1756
    %1835 = vmatpush.bf16.msra.mxu0 %v1752
    %1836 = vmatmul.bf16.gmra.mxu0 %v1622
    %v1837 = vpop.f32.mrf.mxu0
    %v1838 = vadd.f32 0.0, %v1837
    %v1839 = vpop.f32.mrf.mxu0
    %1840 = vdwg.mxu0
    %1841 = vmatpush.bf16.msra.mxu0 %v1781
    %1842 = vmatpush.bf16.msra.mxu0 %v1777
    %1843 = vmatpush.bf16.msra.mxu0 %v1773
    %1844 = vmatpush.bf16.msra.mxu0 %v1769
    %1845 = vmatpush.bf16.msra.mxu0 %v1765
    %1846 = vmatpush.bf16.msra.mxu0 %v1761
    %1847 = vmatpush.bf16.msra.mxu0 %v1757
    %1848 = vmatpush.bf16.msra.mxu0 %v1753
    %1849 = vmatmul.bf16.gmra.mxu0 %v1622
    %v1850 = vpop.f32.mrf.mxu0
    %v1851 = vadd.f32 0.0, %v1850
    %v1852 = vpop.f32.mrf.mxu0
    %1853 = vdwg.mxu0
    %1854 = vmatpush.bf16.msra.mxu0 %v1782
    %1855 = vmatpush.bf16.msra.mxu0 %v1778
    %1856 = vmatpush.bf16.msra.mxu0 %v1774
    %1857 = vmatpush.bf16.msra.mxu0 %v1770
    %1858 = vmatpush.bf16.msra.mxu0 %v1766
    %1859 = vmatpush.bf16.msra.mxu0 %v1762
    %1860 = vmatpush.bf16.msra.mxu0 %v1758
    %1861 = vmatpush.bf16.msra.mxu0 %v1754
    %1862 = vmatmul.bf16.gmra.mxu0 %v1622
    %v1863 = vpop.f32.mrf.mxu0
    %v1864 = vadd.f32 0.0, %v1863
    %v1865 = vpop.f32.mrf.mxu0
    %1866 = vdwg.mxu0
    %v1867 = vadd.f32 %v1617, %v1825
    %v1868 = vadd.f32 %v1618, %v1838
    %v1869 = vadd.f32 %v1619, %v1851
    %v1870 = vadd.f32 %v1620, %v1864
    %v1871 = vxor.u32 %v1867, 2147483648
    %v1872 = vxor.u32 %v1868, 2147483648
    %v1873 = vxor.u32 %v1869, 2147483648
    %v1874 = vmul.f32 %v1871, 1.442695
    %v1875 = vpow.pop %v1874
    %v1876 = vmul.f32 %v1872, 1.442695
    %v1877 = vpow.pop %v1876
    %v1878 = vmul.f32 %v1873, 1.442695
    %v1879 = vpow.pop %v1878
    %v1880 = vadd.f32 %v1875, 1.0
    %v1881 = vadd.f32 %v1877, 1.0
    %v1882 = vadd.f32 %v1879, 1.0
    %v1883 = vrcp.pop %v1880
    %v1884 = vmul.f32 %v1880, %v1883
    %v1885 = vsub.f32 1.0, %v1884
    %v1886 = vmul.f32 %v1883, %v1885
    %v1887 = vadd.f32 %v1883, %v1886
    %vm1888 = vweird.f32 %v1880
    %vm1889 = vweird.f32 %v1883
    %vm1890 = vmor %vm1888, %vm1889
    %v1891 = vsel %vm1890, %v1883, %v1887
    %v1892 = vand.u32 2147483647, %v1880
    %vm1893 = vcmp.eq.f32.partialorder %v1892, 8.507059e+37
    %v1894 = vand.u32 %v1880, 2147483648
    %v1895 = vor.u32 1.1754944e-38, %v1894
    %v1896 = vsel %vm1893, %v1895, %v1891
    %v1897 = vmul.f32 1.0, %v1896
    %v1898 = vrcp.pop %v1881
    %v1899 = vmul.f32 %v1881, %v1898
    %v1900 = vsub.f32 1.0, %v1899
    %v1901 = vmul.f32 %v1898, %v1900
    %v1902 = vadd.f32 %v1898, %v1901
    %vm1903 = vweird.f32 %v1881
    %vm1904 = vweird.f32 %v1898
    %vm1905 = vmor %vm1903, %vm1904
    %v1906 = vsel %vm1905, %v1898, %v1902
    %v1907 = vand.u32 2147483647, %v1881
    %vm1908 = vcmp.eq.f32.partialorder %v1907, 8.507059e+37
    %v1909 = vand.u32 %v1881, 2147483648
    %v1910 = vor.u32 1.1754944e-38, %v1909
    %v1911 = vsel %vm1908, %v1910, %v1906
    %v1912 = vmul.f32 1.0, %v1911
    %v1913 = vrcp.pop %v1882
    %v1914 = vmul.f32 %v1882, %v1913
    %v1915 = vsub.f32 1.0, %v1914
    %v1916 = vmul.f32 %v1913, %v1915
    %v1917 = vadd.f32 %v1913, %v1916
    %vm1918 = vweird.f32 %v1882
    %vm1919 = vweird.f32 %v1913
    %vm1920 = vmor %vm1918, %vm1919
    %v1921 = vsel %vm1920, %v1913, %v1917
    %v1922 = vand.u32 2147483647, %v1882
    %vm1923 = vcmp.eq.f32.partialorder %v1922, 8.507059e+37
    %v1924 = vand.u32 %v1882, 2147483648
    %v1925 = vor.u32 1.1754944e-38, %v1924
    %v1926 = vsel %vm1923, %v1925, %v1921
    %v1927 = vmul.f32 1.0, %v1926
    %v1928 = vtanh.pop %v1870
    %v1929 = vld [vmem:[#allocation2] sm:$0xff]
    %v1930 = vmul.f32 %v1912, %v1929
    %v1931 = vmul.f32 %v1897, %v1928
    %v1932 = vadd.f32 %v1930, %v1931
    %v1933 = vtanh.pop %v1932
    %v1934 = vmul.f32 %v1927, %v1933
    %1935 = vst [vmem:[#allocation2] sm:$0xff] %v1932
    %1936 = vst [vmem:[#allocation12] sm:$0xff] %v1934
    %s1937 = scalar_lea.vmem [#allocation3], 160
    %v1938 = vld [vmem:[%s1937] sm:$0xff]
    %v1939 = vld [vmem:[%s1937 + $0x8] sm:$0xff]
    %v1940 = vld [vmem:[%s1937 + $0x10] sm:$0xff]
    %v1941 = vld [vmem:[%s1937 + $0x18] sm:$0xff]
    %v1942 = vld [vmem:[#allocation12] sm:$0xff]
    %v1943 = vpack.c.bf16 %v1942, %v1942
    %v1944 = vld [vmem:[#allocation9] sm:$0xff]
    %v1945 = vld [vmem:[#allocation9 + $0x8] sm:$0xff]
    %v1946 = vld [vmem:[#allocation9 + $0x10] sm:$0xff]
    %v1947 = vld [vmem:[#allocation9 + $0x18] sm:$0xff]
    %v1948 = vld [vmem:[#allocation9 + $0x20] sm:$0xff]
    %v1949 = vld [vmem:[#allocation9 + $0x28] sm:$0xff]
    %v1950 = vld [vmem:[#allocation9 + $0x30] sm:$0xff]
    %v1951 = vld [vmem:[#allocation9 + $0x38] sm:$0xff]
    %v1952 = vld [vmem:[#allocation9 + $0x40] sm:$0xff]
    %v1953 = vld [vmem:[#allocation9 + $0x48] sm:$0xff]
    %v1954 = vld [vmem:[#allocation9 + $0x50] sm:$0xff]
    %v1955 = vld [vmem:[#allocation9 + $0x58] sm:$0xff]
    %v1956 = vld [vmem:[#allocation9 + $0x60] sm:$0xff]
    %v1957 = vld [vmem:[#allocation9 + $0x68] sm:$0xff]
    %v1958 = vld [vmem:[#allocation9 + $0x70] sm:$0xff]
    %v1959 = vld [vmem:[#allocation9 + $0x78] sm:$0xff]
    %v1960 = vld [vmem:[#allocation9 + $0x80] sm:$0xff]
    %v1961 = vld [vmem:[#allocation9 + $0x88] sm:$0xff]
    %v1962 = vld [vmem:[#allocation9 + $0x90] sm:$0xff]
    %v1963 = vld [vmem:[#allocation9 + $0x98] sm:$0xff]
    %v1964 = vld [vmem:[#allocation9 + $0xa0] sm:$0xff]
    %v1965 = vld [vmem:[#allocation9 + $0xa8] sm:$0xff]
    %v1966 = vld [vmem:[#allocation9 + $0xb0] sm:$0xff]
    %v1967 = vld [vmem:[#allocation9 + $0xb8] sm:$0xff]
    %v1968 = vld [vmem:[#allocation9 + $0xc0] sm:$0xff]
    %v1969 = vld [vmem:[#allocation9 + $0xc8] sm:$0xff]
    %v1970 = vld [vmem:[#allocation9 + $0xd0] sm:$0xff]
    %v1971 = vld [vmem:[#allocation9 + $0xd8] sm:$0xff]
    %v1972 = vld [vmem:[#allocation9 + $0xe0] sm:$0xff]
    %v1973 = vld [vmem:[#allocation9 + $0xe8] sm:$0xff]
    %v1974 = vld [vmem:[#allocation9 + $0xf0] sm:$0xff]
    %v1975 = vld [vmem:[#allocation9 + $0xf8] sm:$0xff]
    %v2008 = vunpack.c.l.b16 %v1944
    %v2009 = vunpack.c.h.b16 %v1944
    %v2010 = vunpack.c.l.b16 %v1945
    %v2011 = vunpack.c.h.b16 %v1945
    %v2012 = vunpack.c.l.b16 %v1946
    %v2013 = vunpack.c.h.b16 %v1946
    %v2014 = vunpack.c.l.b16 %v1947
    %v2015 = vunpack.c.h.b16 %v1947
    %v2016 = vunpack.c.l.b16 %v1948
    %v2017 = vunpack.c.h.b16 %v1948
    %v2018 = vunpack.c.l.b16 %v1949
    %v2019 = vunpack.c.h.b16 %v1949
    %v2020 = vunpack.c.l.b16 %v1950
    %v2021 = vunpack.c.h.b16 %v1950
    %v2022 = vunpack.c.l.b16 %v1951
    %v2023 = vunpack.c.h.b16 %v1951
    %v2024 = vunpack.c.l.b16 %v1952
    %v2025 = vunpack.c.h.b16 %v1952
    %v2026 = vunpack.c.l.b16 %v1953
    %v2027 = vunpack.c.h.b16 %v1953
    %v2028 = vunpack.c.l.b16 %v1954
    %v2029 = vunpack.c.h.b16 %v1954
    %v2030 = vunpack.c.l.b16 %v1955
    %v2031 = vunpack.c.h.b16 %v1955
    %v2032 = vunpack.c.l.b16 %v1956
    %v2033 = vunpack.c.h.b16 %v1956
    %v2034 = vunpack.c.l.b16 %v1957
    %v2035 = vunpack.c.h.b16 %v1957
    %v2036 = vunpack.c.l.b16 %v1958
    %v2037 = vunpack.c.h.b16 %v1958
    %v2038 = vunpack.c.l.b16 %v1959
    %v2039 = vunpack.c.h.b16 %v1959
    %v2040 = vunpack.c.l.b16 %v1960
    %v2041 = vunpack.c.h.b16 %v1960
    %v2042 = vunpack.c.l.b16 %v1961
    %v2043 = vunpack.c.h.b16 %v1961
    %v2044 = vunpack.c.l.b16 %v1962
    %v2045 = vunpack.c.h.b16 %v1962
    %v2046 = vunpack.c.l.b16 %v1963
    %v2047 = vunpack.c.h.b16 %v1963
    %v2048 = vunpack.c.l.b16 %v1964
    %v2049 = vunpack.c.h.b16 %v1964
    %v2050 = vunpack.c.l.b16 %v1965
    %v2051 = vunpack.c.h.b16 %v1965
    %v2052 = vunpack.c.l.b16 %v1966
    %v2053 = vunpack.c.h.b16 %v1966
    %v2054 = vunpack.c.l.b16 %v1967
    %v2055 = vunpack.c.h.b16 %v1967
    %v2056 = vunpack.c.l.b16 %v1968
    %v2057 = vunpack.c.h.b16 %v1968
    %v2058 = vunpack.c.l.b16 %v1969
    %v2059 = vunpack.c.h.b16 %v1969
    %v2060 = vunpack.c.l.b16 %v1970
    %v2061 = vunpack.c.h.b16 %v1970
    %v2062 = vunpack.c.l.b16 %v1971
    %v2063 = vunpack.c.h.b16 %v1971
    %v2064 = vunpack.c.l.b16 %v1972
    %v2065 = vunpack.c.h.b16 %v1972
    %v2066 = vunpack.c.l.b16 %v1973
    %v2067 = vunpack.c.h.b16 %v1973
    %v2068 = vunpack.c.l.b16 %v1974
    %v2069 = vunpack.c.h.b16 %v1974
    %v2070 = vunpack.c.l.b16 %v1975
    %v2071 = vunpack.c.h.b16 %v1975
    %v2072 = vpack.c.b16 %v2012, %v2008
    %v2073 = vpack.c.b16 %v2013, %v2009
    %v2074 = vpack.c.b16 %v2014, %v2010
    %v2075 = vpack.c.b16 %v2015, %v2011
    %v2076 = vpack.c.b16 %v2020, %v2016
    %v2077 = vpack.c.b16 %v2021, %v2017
    %v2078 = vpack.c.b16 %v2022, %v2018
    %v2079 = vpack.c.b16 %v2023, %v2019
    %v2080 = vpack.c.b16 %v2028, %v2024
    %v2081 = vpack.c.b16 %v2029, %v2025
    %v2082 = vpack.c.b16 %v2030, %v2026
    %v2083 = vpack.c.b16 %v2031, %v2027
    %v2084 = vpack.c.b16 %v2036, %v2032
    %v2085 = vpack.c.b16 %v2037, %v2033
    %v2086 = vpack.c.b16 %v2038, %v2034
    %v2087 = vpack.c.b16 %v2039, %v2035
    %v2088 = vpack.c.b16 %v2044, %v2040
    %v2089 = vpack.c.b16 %v2045, %v2041
    %v2090 = vpack.c.b16 %v2046, %v2042
    %v2091 = vpack.c.b16 %v2047, %v2043
    %v2092 = vpack.c.b16 %v2052, %v2048
    %v2093 = vpack.c.b16 %v2053, %v2049
    %v2094 = vpack.c.b16 %v2054, %v2050
    %v2095 = vpack.c.b16 %v2055, %v2051
    %v2096 = vpack.c.b16 %v2060, %v2056
    %v2097 = vpack.c.b16 %v2061, %v2057
    %v2098 = vpack.c.b16 %v2062, %v2058
    %v2099 = vpack.c.b16 %v2063, %v2059
    %v2100 = vpack.c.b16 %v2068, %v2064
    %v2101 = vpack.c.b16 %v2069, %v2065
    %v2102 = vpack.c.b16 %v2070, %v2066
    %v2103 = vpack.c.b16 %v2071, %v2067
    %2136 = vmatpush.bf16.msra.mxu0 %v2100
    %2137 = vmatpush.bf16.msra.mxu0 %v2096
    %2138 = vmatpush.bf16.msra.mxu0 %v2092
    %2139 = vmatpush.bf16.msra.mxu0 %v2088
    %2140 = vmatpush.bf16.msra.mxu0 %v2084
    %2141 = vmatpush.bf16.msra.mxu0 %v2080
    %2142 = vmatpush.bf16.msra.mxu0 %v2076
    %2143 = vmatpush.bf16.msra.mxu0 %v2072
    %2144 = vmatmul.bf16.gmra.mxu0 %v1943
    %v2145 = vpop.f32.mrf.mxu0
    %v2146 = vadd.f32 0.0, %v2145
    %v2147 = vpop.f32.mrf.mxu0
    %2148 = vdwg.mxu0
    %2149 = vmatpush.bf16.msra.mxu0 %v2101
    %2150 = vmatpush.bf16.msra.mxu0 %v2097
    %2151 = vmatpush.bf16.msra.mxu0 %v2093
    %2152 = vmatpush.bf16.msra.mxu0 %v2089
    %2153 = vmatpush.bf16.msra.mxu0 %v2085
    %2154 = vmatpush.bf16.msra.mxu0 %v2081
    %2155 = vmatpush.bf16.msra.mxu0 %v2077
    %2156 = vmatpush.bf16.msra.mxu0 %v2073
    %2157 = vmatmul.bf16.gmra.mxu0 %v1943
    %v2158 = vpop.f32.mrf.mxu0
    %v2159 = vadd.f32 0.0, %v2158
    %v2160 = vpop.f32.mrf.mxu0
    %2161 = vdwg.mxu0
    %2162 = vmatpush.bf16.msra.mxu0 %v2102
    %2163 = vmatpush.bf16.msra.mxu0 %v2098
    %2164 = vmatpush.bf16.msra.mxu0 %v2094
    %2165 = vmatpush.bf16.msra.mxu0 %v2090
    %2166 = vmatpush.bf16.msra.mxu0 %v2086
    %2167 = vmatpush.bf16.msra.mxu0 %v2082
    %2168 = vmatpush.bf16.msra.mxu0 %v2078
    %2169 = vmatpush.bf16.msra.mxu0 %v2074
    %2170 = vmatmul.bf16.gmra.mxu0 %v1943
    %v2171 = vpop.f32.mrf.mxu0
    %v2172 = vadd.f32 0.0, %v2171
    %v2173 = vpop.f32.mrf.mxu0
    %2174 = vdwg.mxu0
    %2175 = vmatpush.bf16.msra.mxu0 %v2103
    %2176 = vmatpush.bf16.msra.mxu0 %v2099
    %2177 = vmatpush.bf16.msra.mxu0 %v2095
    %2178 = vmatpush.bf16.msra.mxu0 %v2091
    %2179 = vmatpush.bf16.msra.mxu0 %v2087
    %2180 = vmatpush.bf16.msra.mxu0 %v2083
    %2181 = vmatpush.bf16.msra.mxu0 %v2079
    %2182 = vmatpush.bf16.msra.mxu0 %v2075
    %2183 = vmatmul.bf16.gmra.mxu0 %v1943
    %v2184 = vpop.f32.mrf.mxu0
    %v2185 = vadd.f32 0.0, %v2184
    %v2186 = vpop.f32.mrf.mxu0
    %2187 = vdwg.mxu0
    %v2188 = vadd.f32 %v1938, %v2146
    %v2189 = vadd.f32 %v1939, %v2159
    %v2190 = vadd.f32 %v1940, %v2172
    %v2191 = vadd.f32 %v1941, %v2185
    %v2192 = vxor.u32 %v2188, 2147483648
    %v2193 = vxor.u32 %v2189, 2147483648
    %v2194 = vxor.u32 %v2190, 2147483648
    %v2195 = vmul.f32 %v2192, 1.442695
    %v2196 = vpow.pop %v2195
    %v2197 = vmul.f32 %v2193, 1.442695
    %v2198 = vpow.pop %v2197
    %v2199 = vmul.f32 %v2194, 1.442695
    %v2200 = vpow.pop %v2199
    %v2201 = vadd.f32 %v2196, 1.0
    %v2202 = vadd.f32 %v2198, 1.0
    %v2203 = vadd.f32 %v2200, 1.0
    %v2204 = vrcp.pop %v2201
    %v2205 = vmul.f32 %v2201, %v2204
    %v2206 = vsub.f32 1.0, %v2205
    %v2207 = vmul.f32 %v2204, %v2206
    %v2208 = vadd.f32 %v2204, %v2207
    %vm2209 = vweird.f32 %v2201
    %vm2210 = vweird.f32 %v2204
    %vm2211 = vmor %vm2209, %vm2210
    %v2212 = vsel %vm2211, %v2204, %v2208
    %v2213 = vand.u32 2147483647, %v2201
    %vm2214 = vcmp.eq.f32.partialorder %v2213, 8.507059e+37
    %v2215 = vand.u32 %v2201, 2147483648
    %v2216 = vor.u32 1.1754944e-38, %v2215
    %v2217 = vsel %vm2214, %v2216, %v2212
    %v2218 = vmul.f32 1.0, %v2217
    %v2219 = vrcp.pop %v2202
    %v2220 = vmul.f32 %v2202, %v2219
    %v2221 = vsub.f32 1.0, %v2220
    %v2222 = vmul.f32 %v2219, %v2221
    %v2223 = vadd.f32 %v2219, %v2222
    %vm2224 = vweird.f32 %v2202
    %vm2225 = vweird.f32 %v2219
    %vm2226 = vmor %vm2224, %vm2225
    %v2227 = vsel %vm2226, %v2219, %v2223
    %v2228 = vand.u32 2147483647, %v2202
    %vm2229 = vcmp.eq.f32.partialorder %v2228, 8.507059e+37
    %v2230 = vand.u32 %v2202, 2147483648
    %v2231 = vor.u32 1.1754944e-38, %v2230
    %v2232 = vsel %vm2229, %v2231, %v2227
    %v2233 = vmul.f32 1.0, %v2232
    %v2234 = vrcp.pop %v2203
    %v2235 = vmul.f32 %v2203, %v2234
    %v2236 = vsub.f32 1.0, %v2235
    %v2237 = vmul.f32 %v2234, %v2236
    %v2238 = vadd.f32 %v2234, %v2237
    %vm2239 = vweird.f32 %v2203
    %vm2240 = vweird.f32 %v2234
    %vm2241 = vmor %vm2239, %vm2240
    %v2242 = vsel %vm2241, %v2234, %v2238
    %v2243 = vand.u32 2147483647, %v2203
    %vm2244 = vcmp.eq.f32.partialorder %v2243, 8.507059e+37
    %v2245 = vand.u32 %v2203, 2147483648
    %v2246 = vor.u32 1.1754944e-38, %v2245
    %v2247 = vsel %vm2244, %v2246, %v2242
    %v2248 = vmul.f32 1.0, %v2247
    %v2249 = vtanh.pop %v2191
    %v2250 = vld [vmem:[#allocation2] sm:$0xff]
    %v2251 = vmul.f32 %v2233, %v2250
    %v2252 = vmul.f32 %v2218, %v2249
    %v2253 = vadd.f32 %v2251, %v2252
    %v2254 = vtanh.pop %v2253
    %v2255 = vmul.f32 %v2248, %v2254
    %2256 = vst [vmem:[#allocation2] sm:$0xff] %v2253
    %2257 = vst [vmem:[#allocation12] sm:$0xff] %v2255
    %s2258 = scalar_lea.vmem [#allocation3], 192
    %v2259 = vld [vmem:[%s2258] sm:$0xff]
    %v2260 = vld [vmem:[%s2258 + $0x8] sm:$0xff]
    %v2261 = vld [vmem:[%s2258 + $0x10] sm:$0xff]
    %v2262 = vld [vmem:[%s2258 + $0x18] sm:$0xff]
    %v2263 = vld [vmem:[#allocation12] sm:$0xff]
    %v2264 = vpack.c.bf16 %v2263, %v2263
    %v2265 = vld [vmem:[#allocation9] sm:$0xff]
    %v2266 = vld [vmem:[#allocation9 + $0x8] sm:$0xff]
    %v2267 = vld [vmem:[#allocation9 + $0x10] sm:$0xff]
    %v2268 = vld [vmem:[#allocation9 + $0x18] sm:$0xff]
    %v2269 = vld [vmem:[#allocation9 + $0x20] sm:$0xff]
    %v2270 = vld [vmem:[#allocation9 + $0x28] sm:$0xff]
    %v2271 = vld [vmem:[#allocation9 + $0x30] sm:$0xff]
    %v2272 = vld [vmem:[#allocation9 + $0x38] sm:$0xff]
    %v2273 = vld [vmem:[#allocation9 + $0x40] sm:$0xff]
    %v2274 = vld [vmem:[#allocation9 + $0x48] sm:$0xff]
    %v2275 = vld [vmem:[#allocation9 + $0x50] sm:$0xff]
    %v2276 = vld [vmem:[#allocation9 + $0x58] sm:$0xff]
    %v2277 = vld [vmem:[#allocation9 + $0x60] sm:$0xff]
    %v2278 = vld [vmem:[#allocation9 + $0x68] sm:$0xff]
    %v2279 = vld [vmem:[#allocation9 + $0x70] sm:$0xff]
    %v2280 = vld [vmem:[#allocation9 + $0x78] sm:$0xff]
    %v2281 = vld [vmem:[#allocation9 + $0x80] sm:$0xff]
    %v2282 = vld [vmem:[#allocation9 + $0x88] sm:$0xff]
    %v2283 = vld [vmem:[#allocation9 + $0x90] sm:$0xff]
    %v2284 = vld [vmem:[#allocation9 + $0x98] sm:$0xff]
    %v2285 = vld [vmem:[#allocation9 + $0xa0] sm:$0xff]
    %v2286 = vld [vmem:[#allocation9 + $0xa8] sm:$0xff]
    %v2287 = vld [vmem:[#allocation9 + $0xb0] sm:$0xff]
    %v2288 = vld [vmem:[#allocation9 + $0xb8] sm:$0xff]
    %v2289 = vld [vmem:[#allocation9 + $0xc0] sm:$0xff]
    %v2290 = vld [vmem:[#allocation9 + $0xc8] sm:$0xff]
    %v2291 = vld [vmem:[#allocation9 + $0xd0] sm:$0xff]
    %v2292 = vld [vmem:[#allocation9 + $0xd8] sm:$0xff]
    %v2293 = vld [vmem:[#allocation9 + $0xe0] sm:$0xff]
    %v2294 = vld [vmem:[#allocation9 + $0xe8] sm:$0xff]
    %v2295 = vld [vmem:[#allocation9 + $0xf0] sm:$0xff]
    %v2296 = vld [vmem:[#allocation9 + $0xf8] sm:$0xff]
    %v2329 = vunpack.c.l.b16 %v2265
    %v2330 = vunpack.c.h.b16 %v2265
    %v2331 = vunpack.c.l.b16 %v2266
    %v2332 = vunpack.c.h.b16 %v2266
    %v2333 = vunpack.c.l.b16 %v2267
    %v2334 = vunpack.c.h.b16 %v2267
    %v2335 = vunpack.c.l.b16 %v2268
    %v2336 = vunpack.c.h.b16 %v2268
    %v2337 = vunpack.c.l.b16 %v2269
    %v2338 = vunpack.c.h.b16 %v2269
    %v2339 = vunpack.c.l.b16 %v2270
    %v2340 = vunpack.c.h.b16 %v2270
    %v2341 = vunpack.c.l.b16 %v2271
    %v2342 = vunpack.c.h.b16 %v2271
    %v2343 = vunpack.c.l.b16 %v2272
    %v2344 = vunpack.c.h.b16 %v2272
    %v2345 = vunpack.c.l.b16 %v2273
    %v2346 = vunpack.c.h.b16 %v2273
    %v2347 = vunpack.c.l.b16 %v2274
    %v2348 = vunpack.c.h.b16 %v2274
    %v2349 = vunpack.c.l.b16 %v2275
    %v2350 = vunpack.c.h.b16 %v2275
    %v2351 = vunpack.c.l.b16 %v2276
    %v2352 = vunpack.c.h.b16 %v2276
    %v2353 = vunpack.c.l.b16 %v2277
    %v2354 = vunpack.c.h.b16 %v2277
    %v2355 = vunpack.c.l.b16 %v2278
    %v2356 = vunpack.c.h.b16 %v2278
    %v2357 = vunpack.c.l.b16 %v2279
    %v2358 = vunpack.c.h.b16 %v2279
    %v2359 = vunpack.c.l.b16 %v2280
    %v2360 = vunpack.c.h.b16 %v2280
    %v2361 = vunpack.c.l.b16 %v2281
    %v2362 = vunpack.c.h.b16 %v2281
    %v2363 = vunpack.c.l.b16 %v2282
    %v2364 = vunpack.c.h.b16 %v2282
    %v2365 = vunpack.c.l.b16 %v2283
    %v2366 = vunpack.c.h.b16 %v2283
    %v2367 = vunpack.c.l.b16 %v2284
    %v2368 = vunpack.c.h.b16 %v2284
    %v2369 = vunpack.c.l.b16 %v2285
    %v2370 = vunpack.c.h.b16 %v2285
    %v2371 = vunpack.c.l.b16 %v2286
    %v2372 = vunpack.c.h.b16 %v2286
    %v2373 = vunpack.c.l.b16 %v2287
    %v2374 = vunpack.c.h.b16 %v2287
    %v2375 = vunpack.c.l.b16 %v2288
    %v2376 = vunpack.c.h.b16 %v2288
    %v2377 = vunpack.c.l.b16 %v2289
    %v2378 = vunpack.c.h.b16 %v2289
    %v2379 = vunpack.c.l.b16 %v2290
    %v2380 = vunpack.c.h.b16 %v2290
    %v2381 = vunpack.c.l.b16 %v2291
    %v2382 = vunpack.c.h.b16 %v2291
    %v2383 = vunpack.c.l.b16 %v2292
    %v2384 = vunpack.c.h.b16 %v2292
    %v2385 = vunpack.c.l.b16 %v2293
    %v2386 = vunpack.c.h.b16 %v2293
    %v2387 = vunpack.c.l.b16 %v2294
    %v2388 = vunpack.c.h.b16 %v2294
    %v2389 = vunpack.c.l.b16 %v2295
    %v2390 = vunpack.c.h.b16 %v2295
    %v2391 = vunpack.c.l.b16 %v2296
    %v2392 = vunpack.c.h.b16 %v2296
    %v2393 = vpack.c.b16 %v2333, %v2329
    %v2394 = vpack.c.b16 %v2334, %v2330
    %v2395 = vpack.c.b16 %v2335, %v2331
    %v2396 = vpack.c.b16 %v2336, %v2332
    %v2397 = vpack.c.b16 %v2341, %v2337
    %v2398 = vpack.c.b16 %v2342, %v2338
    %v2399 = vpack.c.b16 %v2343, %v2339
    %v2400 = vpack.c.b16 %v2344, %v2340
    %v2401 = vpack.c.b16 %v2349, %v2345
    %v2402 = vpack.c.b16 %v2350, %v2346
    %v2403 = vpack.c.b16 %v2351, %v2347
    %v2404 = vpack.c.b16 %v2352, %v2348
    %v2405 = vpack.c.b16 %v2357, %v2353
    %v2406 = vpack.c.b16 %v2358, %v2354
    %v2407 = vpack.c.b16 %v2359, %v2355
    %v2408 = vpack.c.b16 %v2360, %v2356
    %v2409 = vpack.c.b16 %v2365, %v2361
    %v2410 = vpack.c.b16 %v2366, %v2362
    %v2411 = vpack.c.b16 %v2367, %v2363
    %v2412 = vpack.c.b16 %v2368, %v2364
    %v2413 = vpack.c.b16 %v2373, %v2369
    %v2414 = vpack.c.b16 %v2374, %v2370
    %v2415 = vpack.c.b16 %v2375, %v2371
    %v2416 = vpack.c.b16 %v2376, %v2372
    %v2417 = vpack.c.b16 %v2381, %v2377
    %v2418 = vpack.c.b16 %v2382, %v2378
    %v2419 = vpack.c.b16 %v2383, %v2379
    %v2420 = vpack.c.b16 %v2384, %v2380
    %v2421 = vpack.c.b16 %v2389, %v2385
    %v2422 = vpack.c.b16 %v2390, %v2386
    %v2423 = vpack.c.b16 %v2391, %v2387
    %v2424 = vpack.c.b16 %v2392, %v2388
    %2457 = vmatpush.bf16.msra.mxu0 %v2421
    %2458 = vmatpush.bf16.msra.mxu0 %v2417
    %2459 = vmatpush.bf16.msra.mxu0 %v2413
    %2460 = vmatpush.bf16.msra.mxu0 %v2409
    %2461 = vmatpush.bf16.msra.mxu0 %v2405
    %2462 = vmatpush.bf16.msra.mxu0 %v2401
    %2463 = vmatpush.bf16.msra.mxu0 %v2397
    %2464 = vmatpush.bf16.msra.mxu0 %v2393
    %2465 = vmatmul.bf16.gmra.mxu0 %v2264
    %v2466 = vpop.f32.mrf.mxu0
    %v2467 = vadd.f32 0.0, %v2466
    %v2468 = vpop.f32.mrf.mxu0
    %2469 = vdwg.mxu0
    %2470 = vmatpush.bf16.msra.mxu0 %v2422
    %2471 = vmatpush.bf16.msra.mxu0 %v2418
    %2472 = vmatpush.bf16.msra.mxu0 %v2414
    %2473 = vmatpush.bf16.msra.mxu0 %v2410
    %2474 = vmatpush.bf16.msra.mxu0 %v2406
    %2475 = vmatpush.bf16.msra.mxu0 %v2402
    %2476 = vmatpush.bf16.msra.mxu0 %v2398
    %2477 = vmatpush.bf16.msra.mxu0 %v2394
    %2478 = vmatmul.bf16.gmra.mxu0 %v2264
    %v2479 = vpop.f32.mrf.mxu0
    %v2480 = vadd.f32 0.0, %v2479
    %v2481 = vpop.f32.mrf.mxu0
    %2482 = vdwg.mxu0
    %2483 = vmatpush.bf16.msra.mxu0 %v2423
    %2484 = vmatpush.bf16.msra.mxu0 %v2419
    %2485 = vmatpush.bf16.msra.mxu0 %v2415
    %2486 = vmatpush.bf16.msra.mxu0 %v2411
    %2487 = vmatpush.bf16.msra.mxu0 %v2407
    %2488 = vmatpush.bf16.msra.mxu0 %v2403
    %2489 = vmatpush.bf16.msra.mxu0 %v2399
    %2490 = vmatpush.bf16.msra.mxu0 %v2395
    %2491 = vmatmul.bf16.gmra.mxu0 %v2264
    %v2492 = vpop.f32.mrf.mxu0
    %v2493 = vadd.f32 0.0, %v2492
    %v2494 = vpop.f32.mrf.mxu0
    %2495 = vdwg.mxu0
    %2496 = vmatpush.bf16.msra.mxu0 %v2424
    %2497 = vmatpush.bf16.msra.mxu0 %v2420
    %2498 = vmatpush.bf16.msra.mxu0 %v2416
    %2499 = vmatpush.bf16.msra.mxu0 %v2412
    %2500 = vmatpush.bf16.msra.mxu0 %v2408
    %2501 = vmatpush.bf16.msra.mxu0 %v2404
    %2502 = vmatpush.bf16.msra.mxu0 %v2400
    %2503 = vmatpush.bf16.msra.mxu0 %v2396
    %2504 = vmatmul.bf16.gmra.mxu0 %v2264
    %v2505 = vpop.f32.mrf.mxu0
    %v2506 = vadd.f32 0.0, %v2505
    %v2507 = vpop.f32.mrf.mxu0
    %2508 = vdwg.mxu0
    %v2509 = vadd.f32 %v2259, %v2467
    %v2510 = vadd.f32 %v2260, %v2480
    %v2511 = vadd.f32 %v2261, %v2493
    %v2512 = vadd.f32 %v2262, %v2506
    %v2513 = vxor.u32 %v2509, 2147483648
    %v2514 = vxor.u32 %v2510, 2147483648
    %v2515 = vxor.u32 %v2511, 2147483648
    %v2516 = vmul.f32 %v2513, 1.442695
    %v2517 = vpow.pop %v2516
    %v2518 = vmul.f32 %v2514, 1.442695
    %v2519 = vpow.pop %v2518
    %v2520 = vmul.f32 %v2515, 1.442695
    %v2521 = vpow.pop %v2520
    %v2522 = vadd.f32 %v2517, 1.0
    %v2523 = vadd.f32 %v2519, 1.0
    %v2524 = vadd.f32 %v2521, 1.0
    %v2525 = vrcp.pop %v2522
    %v2526 = vmul.f32 %v2522, %v2525
    %v2527 = vsub.f32 1.0, %v2526
    %v2528 = vmul.f32 %v2525, %v2527
    %v2529 = vadd.f32 %v2525, %v2528
    %vm2530 = vweird.f32 %v2522
    %vm2531 = vweird.f32 %v2525
    %vm2532 = vmor %vm2530, %vm2531
    %v2533 = vsel %vm2532, %v2525, %v2529
    %v2534 = vand.u32 2147483647, %v2522
    %vm2535 = vcmp.eq.f32.partialorder %v2534, 8.507059e+37
    %v2536 = vand.u32 %v2522, 2147483648
    %v2537 = vor.u32 1.1754944e-38, %v2536
    %v2538 = vsel %vm2535, %v2537, %v2533
    %v2539 = vmul.f32 1.0, %v2538
    %v2540 = vrcp.pop %v2523
    %v2541 = vmul.f32 %v2523, %v2540
    %v2542 = vsub.f32 1.0, %v2541
    %v2543 = vmul.f32 %v2540, %v2542
    %v2544 = vadd.f32 %v2540, %v2543
    %vm2545 = vweird.f32 %v2523
    %vm2546 = vweird.f32 %v2540
    %vm2547 = vmor %vm2545, %vm2546
    %v2548 = vsel %vm2547, %v2540, %v2544
    %v2549 = vand.u32 2147483647, %v2523
    %vm2550 = vcmp.eq.f32.partialorder %v2549, 8.507059e+37
    %v2551 = vand.u32 %v2523, 2147483648
    %v2552 = vor.u32 1.1754944e-38, %v2551
    %v2553 = vsel %vm2550, %v2552, %v2548
    %v2554 = vmul.f32 1.0, %v2553
    %v2555 = vrcp.pop %v2524
    %v2556 = vmul.f32 %v2524, %v2555
    %v2557 = vsub.f32 1.0, %v2556
    %v2558 = vmul.f32 %v2555, %v2557
    %v2559 = vadd.f32 %v2555, %v2558
    %vm2560 = vweird.f32 %v2524
    %vm2561 = vweird.f32 %v2555
    %vm2562 = vmor %vm2560, %vm2561
    %v2563 = vsel %vm2562, %v2555, %v2559
    %v2564 = vand.u32 2147483647, %v2524
    %vm2565 = vcmp.eq.f32.partialorder %v2564, 8.507059e+37
    %v2566 = vand.u32 %v2524, 2147483648
    %v2567 = vor.u32 1.1754944e-38, %v2566
    %v2568 = vsel %vm2565, %v2567, %v2563
    %v2569 = vmul.f32 1.0, %v2568
    %v2570 = vtanh.pop %v2512
    %v2571 = vld [vmem:[#allocation2] sm:$0xff]
    %v2572 = vmul.f32 %v2554, %v2571
    %v2573 = vmul.f32 %v2539, %v2570
    %v2574 = vadd.f32 %v2572, %v2573
    %v2575 = vtanh.pop %v2574
    %v2576 = vmul.f32 %v2569, %v2575
    %2577 = vst [vmem:[#allocation2] sm:$0xff] %v2574
    %2578 = vst [vmem:[#allocation12] sm:$0xff] %v2576
    %s2579 = scalar_lea.vmem [#allocation3], 224
    %v2580 = vld [vmem:[%s2579] sm:$0xff]
    %v2581 = vld [vmem:[%s2579 + $0x8] sm:$0xff]
    %v2582 = vld [vmem:[%s2579 + $0x10] sm:$0xff]
    %v2583 = vld [vmem:[%s2579 + $0x18] sm:$0xff]
    %v2584 = vld [vmem:[#allocation12] sm:$0xff]
    %v2585 = vpack.c.bf16 %v2584, %v2584
    %v2586 = vld [vmem:[#allocation9] sm:$0xff]
    %v2587 = vld [vmem:[#allocation9 + $0x8] sm:$0xff]
    %v2588 = vld [vmem:[#allocation9 + $0x10] sm:$0xff]
    %v2589 = vld [vmem:[#allocation9 + $0x18] sm:$0xff]
    %v2590 = vld [vmem:[#allocation9 + $0x20] sm:$0xff]
    %v2591 = vld [vmem:[#allocation9 + $0x28] sm:$0xff]
    %v2592 = vld [vmem:[#allocation9 + $0x30] sm:$0xff]
    %v2593 = vld [vmem:[#allocation9 + $0x38] sm:$0xff]
    %v2594 = vld [vmem:[#allocation9 + $0x40] sm:$0xff]
    %v2595 = vld [vmem:[#allocation9 + $0x48] sm:$0xff]
    %v2596 = vld [vmem:[#allocation9 + $0x50] sm:$0xff]
    %v2597 = vld [vmem:[#allocation9 + $0x58] sm:$0xff]
    %v2598 = vld [vmem:[#allocation9 + $0x60] sm:$0xff]
    %v2599 = vld [vmem:[#allocation9 + $0x68] sm:$0xff]
    %v2600 = vld [vmem:[#allocation9 + $0x70] sm:$0xff]
    %v2601 = vld [vmem:[#allocation9 + $0x78] sm:$0xff]
    %v2602 = vld [vmem:[#allocation9 + $0x80] sm:$0xff]
    %v2603 = vld [vmem:[#allocation9 + $0x88] sm:$0xff]
    %v2604 = vld [vmem:[#allocation9 + $0x90] sm:$0xff]
    %v2605 = vld [vmem:[#allocation9 + $0x98] sm:$0xff]
    %v2606 = vld [vmem:[#allocation9 + $0xa0] sm:$0xff]
    %v2607 = vld [vmem:[#allocation9 + $0xa8] sm:$0xff]
    %v2608 = vld [vmem:[#allocation9 + $0xb0] sm:$0xff]
    %v2609 = vld [vmem:[#allocation9 + $0xb8] sm:$0xff]
    %v2610 = vld [vmem:[#allocation9 + $0xc0] sm:$0xff]
    %v2611 = vld [vmem:[#allocation9 + $0xc8] sm:$0xff]
    %v2612 = vld [vmem:[#allocation9 + $0xd0] sm:$0xff]
    %v2613 = vld [vmem:[#allocation9 + $0xd8] sm:$0xff]
    %v2614 = vld [vmem:[#allocation9 + $0xe0] sm:$0xff]
    %v2615 = vld [vmem:[#allocation9 + $0xe8] sm:$0xff]
    %v2616 = vld [vmem:[#allocation9 + $0xf0] sm:$0xff]
    %v2617 = vld [vmem:[#allocation9 + $0xf8] sm:$0xff]
    %v2650 = vunpack.c.l.b16 %v2586
    %v2651 = vunpack.c.h.b16 %v2586
    %v2652 = vunpack.c.l.b16 %v2587
    %v2653 = vunpack.c.h.b16 %v2587
    %v2654 = vunpack.c.l.b16 %v2588
    %v2655 = vunpack.c.h.b16 %v2588
    %v2656 = vunpack.c.l.b16 %v2589
    %v2657 = vunpack.c.h.b16 %v2589
    %v2658 = vunpack.c.l.b16 %v2590
    %v2659 = vunpack.c.h.b16 %v2590
    %v2660 = vunpack.c.l.b16 %v2591
    %v2661 = vunpack.c.h.b16 %v2591
    %v2662 = vunpack.c.l.b16 %v2592
    %v2663 = vunpack.c.h.b16 %v2592
    %v2664 = vunpack.c.l.b16 %v2593
    %v2665 = vunpack.c.h.b16 %v2593
    %v2666 = vunpack.c.l.b16 %v2594
    %v2667 = vunpack.c.h.b16 %v2594
    %v2668 = vunpack.c.l.b16 %v2595
    %v2669 = vunpack.c.h.b16 %v2595
    %v2670 = vunpack.c.l.b16 %v2596
    %v2671 = vunpack.c.h.b16 %v2596
    %v2672 = vunpack.c.l.b16 %v2597
    %v2673 = vunpack.c.h.b16 %v2597
    %v2674 = vunpack.c.l.b16 %v2598
    %v2675 = vunpack.c.h.b16 %v2598
    %v2676 = vunpack.c.l.b16 %v2599
    %v2677 = vunpack.c.h.b16 %v2599
    %v2678 = vunpack.c.l.b16 %v2600
    %v2679 = vunpack.c.h.b16 %v2600
    %v2680 = vunpack.c.l.b16 %v2601
    %v2681 = vunpack.c.h.b16 %v2601
    %v2682 = vunpack.c.l.b16 %v2602
    %v2683 = vunpack.c.h.b16 %v2602
    %v2684 = vunpack.c.l.b16 %v2603
    %v2685 = vunpack.c.h.b16 %v2603
    %v2686 = vunpack.c.l.b16 %v2604
    %v2687 = vunpack.c.h.b16 %v2604
    %v2688 = vunpack.c.l.b16 %v2605
    %v2689 = vunpack.c.h.b16 %v2605
    %v2690 = vunpack.c.l.b16 %v2606
    %v2691 = vunpack.c.h.b16 %v2606
    %v2692 = vunpack.c.l.b16 %v2607
    %v2693 = vunpack.c.h.b16 %v2607
    %v2694 = vunpack.c.l.b16 %v2608
    %v2695 = vunpack.c.h.b16 %v2608
    %v2696 = vunpack.c.l.b16 %v2609
    %v2697 = vunpack.c.h.b16 %v2609
    %v2698 = vunpack.c.l.b16 %v2610
    %v2699 = vunpack.c.h.b16 %v2610
    %v2700 = vunpack.c.l.b16 %v2611
    %v2701 = vunpack.c.h.b16 %v2611
    %v2702 = vunpack.c.l.b16 %v2612
    %v2703 = vunpack.c.h.b16 %v2612
    %v2704 = vunpack.c.l.b16 %v2613
    %v2705 = vunpack.c.h.b16 %v2613
    %v2706 = vunpack.c.l.b16 %v2614
    %v2707 = vunpack.c.h.b16 %v2614
    %v2708 = vunpack.c.l.b16 %v2615
    %v2709 = vunpack.c.h.b16 %v2615
    %v2710 = vunpack.c.l.b16 %v2616
    %v2711 = vunpack.c.h.b16 %v2616
    %v2712 = vunpack.c.l.b16 %v2617
    %v2713 = vunpack.c.h.b16 %v2617
    %v2714 = vpack.c.b16 %v2654, %v2650
    %v2715 = vpack.c.b16 %v2655, %v2651
    %v2716 = vpack.c.b16 %v2656, %v2652
    %v2717 = vpack.c.b16 %v2657, %v2653
    %v2718 = vpack.c.b16 %v2662, %v2658
    %v2719 = vpack.c.b16 %v2663, %v2659
    %v2720 = vpack.c.b16 %v2664, %v2660
    %v2721 = vpack.c.b16 %v2665, %v2661
    %v2722 = vpack.c.b16 %v2670, %v2666
    %v2723 = vpack.c.b16 %v2671, %v2667
    %v2724 = vpack.c.b16 %v2672, %v2668
    %v2725 = vpack.c.b16 %v2673, %v2669
    %v2726 = vpack.c.b16 %v2678, %v2674
    %v2727 = vpack.c.b16 %v2679, %v2675
    %v2728 = vpack.c.b16 %v2680, %v2676
    %v2729 = vpack.c.b16 %v2681, %v2677
    %v2730 = vpack.c.b16 %v2686, %v2682
    %v2731 = vpack.c.b16 %v2687, %v2683
    %v2732 = vpack.c.b16 %v2688, %v2684
    %v2733 = vpack.c.b16 %v2689, %v2685
    %v2734 = vpack.c.b16 %v2694, %v2690
    %v2735 = vpack.c.b16 %v2695, %v2691
    %v2736 = vpack.c.b16 %v2696, %v2692
    %v2737 = vpack.c.b16 %v2697, %v2693
    %v2738 = vpack.c.b16 %v2702, %v2698
    %v2739 = vpack.c.b16 %v2703, %v2699
    %v2740 = vpack.c.b16 %v2704, %v2700
    %v2741 = vpack.c.b16 %v2705, %v2701
    %v2742 = vpack.c.b16 %v2710, %v2706
    %v2743 = vpack.c.b16 %v2711, %v2707
    %v2744 = vpack.c.b16 %v2712, %v2708
    %v2745 = vpack.c.b16 %v2713, %v2709
    %2778 = vmatpush.bf16.msra.mxu0 %v2742
    %2779 = vmatpush.bf16.msra.mxu0 %v2738
    %2780 = vmatpush.bf16.msra.mxu0 %v2734
    %2781 = vmatpush.bf16.msra.mxu0 %v2730
    %2782 = vmatpush.bf16.msra.mxu0 %v2726
    %2783 = vmatpush.bf16.msra.mxu0 %v2722
    %2784 = vmatpush.bf16.msra.mxu0 %v2718
    %2785 = vmatpush.bf16.msra.mxu0 %v2714
    %2786 = vmatmul.bf16.gmra.mxu0 %v2585
    %v2787 = vpop.f32.mrf.mxu0
    %v2788 = vadd.f32 0.0, %v2787
    %v2789 = vpop.f32.mrf.mxu0
    %2790 = vdwg.mxu0
    %2791 = vmatpush.bf16.msra.mxu0 %v2743
    %2792 = vmatpush.bf16.msra.mxu0 %v2739
    %2793 = vmatpush.bf16.msra.mxu0 %v2735
    %2794 = vmatpush.bf16.msra.mxu0 %v2731
    %2795 = vmatpush.bf16.msra.mxu0 %v2727
    %2796 = vmatpush.bf16.msra.mxu0 %v2723
    %2797 = vmatpush.bf16.msra.mxu0 %v2719
    %2798 = vmatpush.bf16.msra.mxu0 %v2715
    %2799 = vmatmul.bf16.gmra.mxu0 %v2585
    %v2800 = vpop.f32.mrf.mxu0
    %v2801 = vadd.f32 0.0, %v2800
    %v2802 = vpop.f32.mrf.mxu0
    %2803 = vdwg.mxu0
    %2804 = vmatpush.bf16.msra.mxu0 %v2744
    %2805 = vmatpush.bf16.msra.mxu0 %v2740
    %2806 = vmatpush.bf16.msra.mxu0 %v2736
    %2807 = vmatpush.bf16.msra.mxu0 %v2732
    %2808 = vmatpush.bf16.msra.mxu0 %v2728
    %2809 = vmatpush.bf16.msra.mxu0 %v2724
    %2810 = vmatpush.bf16.msra.mxu0 %v2720
    %2811 = vmatpush.bf16.msra.mxu0 %v2716
    %2812 = vmatmul.bf16.gmra.mxu0 %v2585
    %v2813 = vpop.f32.mrf.mxu0
    %v2814 = vadd.f32 0.0, %v2813
    %v2815 = vpop.f32.mrf.mxu0
    %2816 = vdwg.mxu0
    %2817 = vmatpush.bf16.msra.mxu0 %v2745
    %2818 = vmatpush.bf16.msra.mxu0 %v2741
    %2819 = vmatpush.bf16.msra.mxu0 %v2737
    %2820 = vmatpush.bf16.msra.mxu0 %v2733
    %2821 = vmatpush.bf16.msra.mxu0 %v2729
    %2822 = vmatpush.bf16.msra.mxu0 %v2725
    %2823 = vmatpush.bf16.msra.mxu0 %v2721
    %2824 = vmatpush.bf16.msra.mxu0 %v2717
    %2825 = vmatmul.bf16.gmra.mxu0 %v2585
    %v2826 = vpop.f32.mrf.mxu0
    %v2827 = vadd.f32 0.0, %v2826
    %v2828 = vpop.f32.mrf.mxu0
    %2829 = vdwg.mxu0
    %v2830 = vadd.f32 %v2580, %v2788
    %v2831 = vadd.f32 %v2581, %v2801
    %v2832 = vadd.f32 %v2582, %v2814
    %v2833 = vadd.f32 %v2583, %v2827
    %v2834 = vxor.u32 %v2830, 2147483648
    %v2835 = vxor.u32 %v2831, 2147483648
    %v2836 = vxor.u32 %v2832, 2147483648
    %v2837 = vmul.f32 %v2834, 1.442695
    %v2838 = vpow.pop %v2837
    %v2839 = vmul.f32 %v2835, 1.442695
    %v2840 = vpow.pop %v2839
    %v2841 = vmul.f32 %v2836, 1.442695
    %v2842 = vpow.pop %v2841
    %v2843 = vadd.f32 %v2838, 1.0
    %v2844 = vadd.f32 %v2840, 1.0
    %v2845 = vadd.f32 %v2842, 1.0
    %v2846 = vrcp.pop %v2843
    %v2847 = vmul.f32 %v2843, %v2846
    %v2848 = vsub.f32 1.0, %v2847
    %v2849 = vmul.f32 %v2846, %v2848
    %v2850 = vadd.f32 %v2846, %v2849
    %vm2851 = vweird.f32 %v2843
    %vm2852 = vweird.f32 %v2846
    %vm2853 = vmor %vm2851, %vm2852
    %v2854 = vsel %vm2853, %v2846, %v2850
    %v2855 = vand.u32 2147483647, %v2843
    %vm2856 = vcmp.eq.f32.partialorder %v2855, 8.507059e+37
    %v2857 = vand.u32 %v2843, 2147483648
    %v2858 = vor.u32 1.1754944e-38, %v2857
    %v2859 = vsel %vm2856, %v2858, %v2854
    %v2860 = vmul.f32 1.0, %v2859
    %v2861 = vrcp.pop %v2844
    %v2862 = vmul.f32 %v2844, %v2861
    %v2863 = vsub.f32 1.0, %v2862
    %v2864 = vmul.f32 %v2861, %v2863
    %v2865 = vadd.f32 %v2861, %v2864
    %vm2866 = vweird.f32 %v2844
    %vm2867 = vweird.f32 %v2861
    %vm2868 = vmor %vm2866, %vm2867
    %v2869 = vsel %vm2868, %v2861, %v2865
    %v2870 = vand.u32 2147483647, %v2844
    %vm2871 = vcmp.eq.f32.partialorder %v2870, 8.507059e+37
    %v2872 = vand.u32 %v2844, 2147483648
    %v2873 = vor.u32 1.1754944e-38, %v2872
    %v2874 = vsel %vm2871, %v2873, %v2869
    %v2875 = vmul.f32 1.0, %v2874
    %v2876 = vrcp.pop %v2845
    %v2877 = vmul.f32 %v2845, %v2876
    %v2878 = vsub.f32 1.0, %v2877
    %v2879 = vmul.f32 %v2876, %v2878
    %v2880 = vadd.f32 %v2876, %v2879
    %vm2881 = vweird.f32 %v2845
    %vm2882 = vweird.f32 %v2876
    %vm2883 = vmor %vm2881, %vm2882
    %v2884 = vsel %vm2883, %v2876, %v2880
    %v2885 = vand.u32 2147483647, %v2845
    %vm2886 = vcmp.eq.f32.partialorder %v2885, 8.507059e+37
    %v2887 = vand.u32 %v2845, 2147483648
    %v2888 = vor.u32 1.1754944e-38, %v2887
    %v2889 = vsel %vm2886, %v2888, %v2884
    %v2890 = vmul.f32 1.0, %v2889
    %v2891 = vtanh.pop %v2833
    %v2892 = vld [vmem:[#allocation2] sm:$0xff]
    %v2893 = vmul.f32 %v2875, %v2892
    %v2894 = vmul.f32 %v2860, %v2891
    %v2895 = vadd.f32 %v2893, %v2894
    %v2896 = vtanh.pop %v2895
    %v2897 = vmul.f32 %v2890, %v2896
    %2898 = vst [vmem:[#allocation2] sm:$0xff] %v2895
    %2899 = vst [vmem:[#allocation12] sm:$0xff] %v2897
    // Predicated region
    $region38: #{tpu_custom_call.1} parent=1 // pred_check
      _
    $region39: #{tpu_custom_call.1} parent=1 // pred_check_branch
      %2901 = sbr.rel (0) target = $region41
    $region40: #{tpu_custom_call.1} parent=1 // pred_region
      %2903 = vsyncadd [#allocation6], 0
      %s2905 = sshll.u32 [#allocation12], 4
      %s2906 = int_to_ptr.vmem [resolvable:$true] %s2905
      %s2907 = sshll.u32 %s4, 4
      %s2908 = int_to_ptr.hbm [resolvable:$true] %s2907
      %2910 = dma.vmem_to_hbm [thread:$0]  %s2906, 128, %s2908, [#allocation6]
    $region41: #{tpu_custom_call.1} parent=1 // pred_fallthru
      _
    // Predicated region
    $region42: #{tpu_custom_call.1} parent=1 // pred_check
      _
    $region43: #{tpu_custom_call.1} parent=1 // pred_check_branch
      %2912 = sbr.rel (0) target = $region45
    $region44: #{tpu_custom_call.1} parent=1 // pred_region
      %2914 = dma.done [#allocation6], 128
    $region45: #{tpu_custom_call.1} parent=1 // pred_fallthru
      _
    %2915 = vsyncpa [#allocation5], 1
    %2916 = vsyncpa [#allocation8], 1
    %2917 = vsyncpa [#allocation11], 1
    %2918 = vsyncpa [#allocation6], 1

</llo_original>
